<compile_context>
chip_gen: v7x
topology: tpu7x:2x2x1
jax: 0.10.0
libtpu: 0.0.40
codegen_flags: <defaults>
</compile_context>

<pallas_src>
import jax
import jax.numpy as jnp
import numpy as np
from jax import lax
from jax.experimental import pallas as pl
from jax.experimental.pallas import tpu as pltpu

# Small, forward-consistent shapes.
BATCH = 2
SEQ = 8
INPUT_SIZE = 16       # X.shape[2] in the original script
HIDDEN = 32
NUM_CLASSES = 7       # len(classes)
OUT_PAD = 128         # lane-dense FC output width (sliced back to NUM_CLASSES)


def lstm3_fc_kernel(x_ref,
                    wih1_ref, whh1_ref, b1_ref,
                    w2_ref, b2_ref,
                    w3_ref, b3_ref,
                    wfc_ref, bfc_ref,
                    out_ref):
    """3-layer LSTM over time + final FC. Everything resident in VMEM."""
    T, Bp, D = x_ref.shape
    H = whh1_ref.shape[0]
    FourH = 4 * H

    # ---- Off-critical-path precompute: layer-1 input projection for all t ----
    # (T*Bp, D) @ (D, 4H) in a single MXU pass; bias b1 folded in here.
    x_all = x_ref[...].reshape(T * Bp, D)
    xp1 = (jnp.dot(x_all, wih1_ref[...], preferred_element_type=jnp.float32)
           + b1_ref[...]).reshape(T, Bp, FourH)

    # Weights / biases loaded (and broadcast) once, outside the unrolled loop.
    whh1 = whh1_ref[...]                                   # (H, 4H)
    w2 = w2_ref[...]                                       # (2H, 4H)
    w3 = w3_ref[...]                                       # (2H, 4H)
    b2 = jnp.broadcast_to(b2_ref[...], (Bp, FourH))
    b3 = jnp.broadcast_to(b3_ref[...], (Bp, FourH))

    def apply_cell(gates, c):
        # Full 128-lane activations (2 EUP chains instead of 4 quarter-width).
        # Exact f32 sigmoid kept (approx reciprocal would risk the 1e-4 check).
        sg = 1.0 / (1.0 + jnp.exp(-gates))
        tg = jnp.tanh(gates)
        i = sg[:, 0 * H:1 * H]
        f = sg[:, 1 * H:2 * H]
        g = tg[:, 2 * H:3 * H]
        o = sg[:, 3 * H:4 * H]
        c_new = f * c + i * g
        h_new = o * jnp.tanh(c_new)
        return h_new, c_new

    zeros = jnp.zeros((Bp, H), jnp.float32)
    h1 = c1 = h2 = c2 = h3 = c3 = zeros

    # ---- Statically unrolled time loop (T is small & fixed) ----
    for t in range(T):
        # Layer 1: only the recurrent dot remains on the chain.
        g1 = xp1[t] + jnp.dot(h1, whh1, preferred_element_type=jnp.float32)
        h1, c1 = apply_cell(g1, c1)
        # dropout(0.2): identity in eval mode.
        # Layers 2/3: single fused dot on concat([h_in, h_self]).
        g2 = jnp.dot(jnp.concatenate([h1, h2], axis=-1), w2,
                     preferred_element_type=jnp.float32) + b2
        h2, c2 = apply_cell(g2, c2)
        g3 = jnp.dot(jnp.concatenate([h2, h3], axis=-1), w3,
                     preferred_element_type=jnp.float32) + b3
        h3, c3 = apply_cell(g3, c3)

    # Final FC on the last hidden state; lane-dense (Bp, 128) store.
    out_ref[...] = (jnp.dot(h3, wfc_ref[...], preferred_element_type=jnp.float32)
                    + bfc_ref[...])


@jax.jit
def action_recognition_lstm(x, packed_params):
    """x: (B, T, D) float32, batch_first like the PyTorch module."""
    B, T, D = x.shape
    B_pad = max(8, -(-B // 8) * 8)   # round batch up to a sublane multiple

    # Time-major + zero-padded batch: x_ref[t] is then a single (Bp, D) tile.
    x_tm = jnp.transpose(x, (1, 0, 2)).astype(jnp.float32)       # (T, B, D)
    x_tm = jnp.pad(x_tm, ((0, 0), (0, B_pad - B), (0, 0)))       # (T, Bp, D)

    args = (x_tm,) + tuple(packed_params)
    out = pl.pallas_call(
        lstm3_fc_kernel,
        out_shape=jax.ShapeDtypeStruct((B_pad, OUT_PAD), jnp.float32),
        in_specs=[pl.BlockSpec(memory_space=pltpu.MemorySpace.VMEM)] * len(args),
        out_specs=pl.BlockSpec(memory_space=pltpu.MemorySpace.VMEM),
    )(*args)
    return out[:B, :NUM_CLASSES]


def init_raw_params(key, input_size, hidden, num_classes):
    """PyTorch-style params: (w_ih, w_hh, b_ih, b_hh) x3 layers + (w_fc, b_fc)."""
    raw = []
    bound = 1.0 / np.sqrt(hidden)
    in_sizes = [input_size, hidden, hidden]
    for layer in range(3):
        key, k1, k2, k3, k4 = jax.random.split(key, 5)
        d_in = in_sizes[layer]
        w_ih = jax.random.uniform(k1, (4 * hidden, d_in), jnp.float32, -bound, bound)
        w_hh = jax.random.uniform(k2, (4 * hidden, hidden), jnp.float32, -bound, bound)
        b_ih = jax.random.uniform(k3, (4 * hidden,), jnp.float32, -bound, bound)
        b_hh = jax.random.uniform(k4, (4 * hidden,), jnp.float32, -bound, bound)
        raw += [w_ih, w_hh, b_ih, b_hh]
    key, k1, k2 = jax.random.split(key, 3)
    w_fc = jax.random.uniform(k1, (num_classes, hidden), jnp.float32, -bound, bound)
    b_fc = jax.random.uniform(k2, (num_classes,), jnp.float32, -bound, bound)
    raw += [w_fc, b_fc]
    return tuple(raw)


def pack_params(raw):
    """Repack torch-style params into the kernel's fused / lane-dense layout."""
    (wih1, whh1, bih1, bhh1,
     wih2, whh2, bih2, bhh2,
     wih3, whh3, bih3, bhh3,
     wfc, bfc) = raw
    hidden = whh1.shape[1]

    p = [
        wih1.T,                                            # (D, 4H)
        whh1.T,                                            # (H, 4H)
        (bih1 + bhh1)[None, :],                            # (1, 4H)
        jnp.concatenate([wih2.T, whh2.T], axis=0),         # (2H, 4H) fused
        (bih2 + bhh2)[None, :],
        jnp.concatenate([wih3.T, whh3.T], axis=0),         # (2H, 4H) fused
        (bih3 + bhh3)[None, :],
    ]
    # Lane-dense FC: zero-pad classes to 128 columns.
    wfc_pad = jnp.zeros((hidden, OUT_PAD), jnp.float32).at[:, :wfc.shape[0]].set(wfc.T)
    bfc_pad = jnp.zeros((1, OUT_PAD), jnp.float32).at[0, :bfc.shape[0]].set(bfc)
    p += [wfc_pad, bfc_pad]
    return tuple(p)


def reference_forward(x, raw):
    """Pure-JAX reference mirroring torch.nn.LSTM / Linear (eval mode)."""
    (wih1, whh1, bih1, bhh1,
     wih2, whh2, bih2, bhh2,
     wih3, whh3, bih3, bhh3,
     wfc, bfc) = raw
    H = whh1.shape[1]

    def run_layer(inp, wih, whh, bih, bhh):
        B = inp.shape[0]

        def step(carry, x_t):
            h, c = carry
            gates = x_t @ wih.T + h @ whh.T + bih + bhh
            i = jax.nn.sigmoid(gates[:, 0 * H:1 * H])
            f = jax.nn.sigmoid(gates[:, 1 * H:2 * H])
            g = jnp.tanh(gates[:, 2 * H:3 * H])
            o = jax.nn.sigmoid(gates[:, 3 * H:4 * H])
            c = f * c + i * g
            h = o * jnp.tanh(c)
            return (h, c), h

        init = (jnp.zeros((B, H), jnp.float32), jnp.zeros((B, H), jnp.float32))
        _, hs = lax.scan(step, init, jnp.transpose(inp, (1, 0, 2)))
        return jnp.transpose(hs, (1, 0, 2))

    h = run_layer(x, wih1, whh1, bih1, bhh1)
    h = run_layer(h, wih2, whh2, bih2, bhh2)
    h = run_layer(h, wih3, whh3, bih3, bhh3)
    return h[:, -1, :] @ wfc.T + bfc


if __name__ == "__main__":
    key = jax.random.PRNGKey(0)
    key, kx, kp = jax.random.split(key, 3)

    x = jax.random.normal(kx, (BATCH, SEQ, INPUT_SIZE), jnp.float32)
    raw_params = init_raw_params(kp, INPUT_SIZE, HIDDEN, NUM_CLASSES)
    packed_params = pack_params(raw_params)

    out = action_recognition_lstm(x, packed_params)
    out = jax.block_until_ready(out)

    ref = reference_forward(x, raw_params)
    np.testing.assert_allclose(np.asarray(out), np.asarray(ref), rtol=1e-4, atol=1e-4)

    assert out.shape == (BATCH, NUM_CLASSES)
    print("KERNEL_OK")
</pallas_src>

<mosaic_0001>
module attributes {stable_mosaic.version = 11 : i64} {
  func.func @lstm3_fc_kernel(%arg0: memref<8x8x16xf32, #tpu.memory_space<vmem>>, %arg1: memref<16x128xf32, #tpu.memory_space<vmem>>, %arg2: memref<32x128xf32, #tpu.memory_space<vmem>>, %arg3: memref<1x128xf32, #tpu.memory_space<vmem>>, %arg4: memref<64x128xf32, #tpu.memory_space<vmem>>, %arg5: memref<1x128xf32, #tpu.memory_space<vmem>>, %arg6: memref<64x128xf32, #tpu.memory_space<vmem>>, %arg7: memref<1x128xf32, #tpu.memory_space<vmem>>, %arg8: memref<32x128xf32, #tpu.memory_space<vmem>>, %arg9: memref<1x128xf32, #tpu.memory_space<vmem>>, %arg10: memref<8x128xf32, #tpu.memory_space<vmem>>) attributes {dimension_semantics = [], scalar_prefetch = 0 : i64, scratch_operands = 0 : i64, tpu.core_type = #tpu.core_type<tc>} {
    %c0 = arith.constant 0 : index
    %c0_0 = arith.constant 0 : index
    %c0_1 = arith.constant 0 : index
    %0 = vector.load %arg0[%c0, %c0_0, %c0_1] : memref<8x8x16xf32, #tpu.memory_space<vmem>>, vector<8x8x16xf32>
    %1 = vector.shape_cast %0 : vector<8x8x16xf32> to vector<64x16xf32>
    %c0_2 = arith.constant 0 : index
    %c0_3 = arith.constant 0 : index
    %2 = vector.load %arg1[%c0_2, %c0_3] : memref<16x128xf32, #tpu.memory_space<vmem>>, vector<16x128xf32>
    %cst = arith.constant dense<0.000000e+00> : vector<64x128xf32>
    %3 = tpu.matmul %1, %2, %cst {dimension_numbers = #tpu.dot_dimension_numbers<[1], [0], [0], [1], [0, 0, 1, 1], [], []>} : vector<64x16xf32>, vector<16x128xf32>, vector<64x128xf32> -> vector<64x128xf32>
    %c0_4 = arith.constant 0 : index
    %c0_5 = arith.constant 0 : index
    %4 = vector.load %arg3[%c0_4, %c0_5] : memref<1x128xf32, #tpu.memory_space<vmem>>, vector<1x128xf32>
    %5 = vector.broadcast %4 : vector<1x128xf32> to vector<64x128xf32>
    %6 = arith.addf %3, %5 : vector<64x128xf32>
    %7 = vector.shape_cast %6 : vector<64x128xf32> to vector<8x8x128xf32>
    %c0_6 = arith.constant 0 : index
    %c0_7 = arith.constant 0 : index
    %8 = vector.load %arg2[%c0_6, %c0_7] : memref<32x128xf32, #tpu.memory_space<vmem>>, vector<32x128xf32>
    %c0_8 = arith.constant 0 : index
    %c0_9 = arith.constant 0 : index
    %9 = vector.load %arg4[%c0_8, %c0_9] : memref<64x128xf32, #tpu.memory_space<vmem>>, vector<64x128xf32>
    %c0_10 = arith.constant 0 : index
    %c0_11 = arith.constant 0 : index
    %10 = vector.load %arg6[%c0_10, %c0_11] : memref<64x128xf32, #tpu.memory_space<vmem>>, vector<64x128xf32>
    %c0_12 = arith.constant 0 : index
    %c0_13 = arith.constant 0 : index
    %11 = vector.load %arg5[%c0_12, %c0_13] : memref<1x128xf32, #tpu.memory_space<vmem>>, vector<1x128xf32>
    %12 = vector.shape_cast %11 : vector<1x128xf32> to vector<1x128xf32>
    %13 = vector.broadcast %12 : vector<1x128xf32> to vector<8x128xf32>
    %c0_14 = arith.constant 0 : index
    %c0_15 = arith.constant 0 : index
    %14 = vector.load %arg7[%c0_14, %c0_15] : memref<1x128xf32, #tpu.memory_space<vmem>>, vector<1x128xf32>
    %15 = vector.shape_cast %14 : vector<1x128xf32> to vector<1x128xf32>
    %16 = vector.broadcast %15 : vector<1x128xf32> to vector<8x128xf32>
    %cst_16 = arith.constant 0.000000e+00 : f32
    %17 = vector.broadcast %cst_16 : f32 to vector<8x32xf32>
    %18 = vector.extract_strided_slice %7 {offsets = [0, 0, 0], sizes = [1, 8, 128], strides = [1, 1, 1]} : vector<8x8x128xf32> to vector<1x8x128xf32>
    %19 = vector.shape_cast %18 : vector<1x8x128xf32> to vector<8x128xf32>
    %cst_17 = arith.constant dense<0.000000e+00> : vector<8x128xf32>
    %20 = tpu.matmul %17, %8, %cst_17 {dimension_numbers = #tpu.dot_dimension_numbers<[1], [0], [0], [1], [0, 0, 1, 1], [], []>} : vector<8x32xf32>, vector<32x128xf32>, vector<8x128xf32> -> vector<8x128xf32>
    %21 = arith.addf %19, %20 : vector<8x128xf32>
    %cst_18 = arith.constant 0.000000e+00 : f32
    %22 = vector.broadcast %cst_18 : f32 to vector<8x128xf32>
    %23 = arith.subf %22, %21 : vector<8x128xf32>
    %24 = math.exp %23 : vector<8x128xf32>
    %cst_19 = arith.constant 1.000000e+00 : f32
    %25 = vector.broadcast %cst_19 : f32 to vector<8x128xf32>
    %26 = arith.addf %25, %24 : vector<8x128xf32>
    %cst_20 = arith.constant 1.000000e+00 : f32
    %27 = vector.broadcast %cst_20 : f32 to vector<8x128xf32>
    %28 = arith.divf %27, %26 : vector<8x128xf32>
    %29 = math.tanh %21 : vector<8x128xf32>
    %30 = vector.extract_strided_slice %28 {offsets = [0, 0], sizes = [8, 32], strides = [1, 1]} : vector<8x128xf32> to vector<8x32xf32>
    %31 = vector.extract_strided_slice %28 {offsets = [0, 32], sizes = [8, 32], strides = [1, 1]} : vector<8x128xf32> to vector<8x32xf32>
    %32 = vector.extract_strided_slice %29 {offsets = [0, 64], sizes = [8, 32], strides = [1, 1]} : vector<8x128xf32> to vector<8x32xf32>
    %33 = vector.extract_strided_slice %28 {offsets = [0, 96], sizes = [8, 32], strides = [1, 1]} : vector<8x128xf32> to vector<8x32xf32>
    %34 = arith.mulf %31, %17 : vector<8x32xf32>
    %35 = arith.mulf %30, %32 : vector<8x32xf32>
    %36 = arith.addf %34, %35 : vector<8x32xf32>
    %37 = math.tanh %36 : vector<8x32xf32>
    %38 = arith.mulf %33, %37 : vector<8x32xf32>
    %39 = tpu.concatenate %38, %17 in 1 : vector<8x32xf32>, vector<8x32xf32> -> vector<8x64xf32>
    %cst_21 = arith.constant dense<0.000000e+00> : vector<8x128xf32>
    %40 = tpu.matmul %39, %9, %cst_21 {dimension_numbers = #tpu.dot_dimension_numbers<[1], [0], [0], [1], [0, 0, 1, 1], [], []>} : vector<8x64xf32>, vector<64x128xf32>, vector<8x128xf32> -> vector<8x128xf32>
    %41 = arith.addf %40, %13 : vector<8x128xf32>
    %cst_22 = arith.constant 0.000000e+00 : f32
    %42 = vector.broadcast %cst_22 : f32 to vector<8x128xf32>
    %43 = arith.subf %42, %41 : vector<8x128xf32>
    %44 = math.exp %43 : vector<8x128xf32>
    %cst_23 = arith.constant 1.000000e+00 : f32
    %45 = vector.broadcast %cst_23 : f32 to vector<8x128xf32>
    %46 = arith.addf %45, %44 : vector<8x128xf32>
    %cst_24 = arith.constant 1.000000e+00 : f32
    %47 = vector.broadcast %cst_24 : f32 to vector<8x128xf32>
    %48 = arith.divf %47, %46 : vector<8x128xf32>
    %49 = math.tanh %41 : vector<8x128xf32>
    %50 = vector.extract_strided_slice %48 {offsets = [0, 0], sizes = [8, 32], strides = [1, 1]} : vector<8x128xf32> to vector<8x32xf32>
    %51 = vector.extract_strided_slice %48 {offsets = [0, 32], sizes = [8, 32], strides = [1, 1]} : vector<8x128xf32> to vector<8x32xf32>
    %52 = vector.extract_strided_slice %49 {offsets = [0, 64], sizes = [8, 32], strides = [1, 1]} : vector<8x128xf32> to vector<8x32xf32>
    %53 = vector.extract_strided_slice %48 {offsets = [0, 96], sizes = [8, 32], strides = [1, 1]} : vector<8x128xf32> to vector<8x32xf32>
    %54 = arith.mulf %51, %17 : vector<8x32xf32>
    %55 = arith.mulf %50, %52 : vector<8x32xf32>
    %56 = arith.addf %54, %55 : vector<8x32xf32>
    %57 = math.tanh %56 : vector<8x32xf32>
    %58 = arith.mulf %53, %57 : vector<8x32xf32>
    %59 = tpu.concatenate %58, %17 in 1 : vector<8x32xf32>, vector<8x32xf32> -> vector<8x64xf32>
    %cst_25 = arith.constant dense<0.000000e+00> : vector<8x128xf32>
    %60 = tpu.matmul %59, %10, %cst_25 {dimension_numbers = #tpu.dot_dimension_numbers<[1], [0], [0], [1], [0, 0, 1, 1], [], []>} : vector<8x64xf32>, vector<64x128xf32>, vector<8x128xf32> -> vector<8x128xf32>
    %61 = arith.addf %60, %16 : vector<8x128xf32>
    %cst_26 = arith.constant 0.000000e+00 : f32
    %62 = vector.broadcast %cst_26 : f32 to vector<8x128xf32>
    %63 = arith.subf %62, %61 : vector<8x128xf32>
    %64 = math.exp %63 : vector<8x128xf32>
    %cst_27 = arith.constant 1.000000e+00 : f32
    %65 = vector.broadcast %cst_27 : f32 to vector<8x128xf32>
    %66 = arith.addf %65, %64 : vector<8x128xf32>
    %cst_28 = arith.constant 1.000000e+00 : f32
    %67 = vector.broadcast %cst_28 : f32 to vector<8x128xf32>
    %68 = arith.divf %67, %66 : vector<8x128xf32>
    %69 = math.tanh %61 : vector<8x128xf32>
    %70 = vector.extract_strided_slice %68 {offsets = [0, 0], sizes = [8, 32], strides = [1, 1]} : vector<8x128xf32> to vector<8x32xf32>
    %71 = vector.extract_strided_slice %68 {offsets = [0, 32], sizes = [8, 32], strides = [1, 1]} : vector<8x128xf32> to vector<8x32xf32>
    %72 = vector.extract_strided_slice %69 {offsets = [0, 64], sizes = [8, 32], strides = [1, 1]} : vector<8x128xf32> to vector<8x32xf32>
    %73 = vector.extract_strided_slice %68 {offsets = [0, 96], sizes = [8, 32], strides = [1, 1]} : vector<8x128xf32> to vector<8x32xf32>
    %74 = arith.mulf %71, %17 : vector<8x32xf32>
    %75 = arith.mulf %70, %72 : vector<8x32xf32>
    %76 = arith.addf %74, %75 : vector<8x32xf32>
    %77 = math.tanh %76 : vector<8x32xf32>
    %78 = arith.mulf %73, %77 : vector<8x32xf32>
    %79 = vector.extract_strided_slice %7 {offsets = [1, 0, 0], sizes = [1, 8, 128], strides = [1, 1, 1]} : vector<8x8x128xf32> to vector<1x8x128xf32>
    %80 = vector.shape_cast %79 : vector<1x8x128xf32> to vector<8x128xf32>
    %cst_29 = arith.constant dense<0.000000e+00> : vector<8x128xf32>
    %81 = tpu.matmul %38, %8, %cst_29 {dimension_numbers = #tpu.dot_dimension_numbers<[1], [0], [0], [1], [0, 0, 1, 1], [], []>} : vector<8x32xf32>, vector<32x128xf32>, vector<8x128xf32> -> vector<8x128xf32>
    %82 = arith.addf %80, %81 : vector<8x128xf32>
    %cst_30 = arith.constant 0.000000e+00 : f32
    %83 = vector.broadcast %cst_30 : f32 to vector<8x128xf32>
    %84 = arith.subf %83, %82 : vector<8x128xf32>
    %85 = math.exp %84 : vector<8x128xf32>
    %cst_31 = arith.constant 1.000000e+00 : f32
    %86 = vector.broadcast %cst_31 : f32 to vector<8x128xf32>
    %87 = arith.addf %86, %85 : vector<8x128xf32>
    %cst_32 = arith.constant 1.000000e+00 : f32
    %88 = vector.broadcast %cst_32 : f32 to vector<8x128xf32>
    %89 = arith.divf %88, %87 : vector<8x128xf32>
    %90 = math.tanh %82 : vector<8x128xf32>
    %91 = vector.extract_strided_slice %89 {offsets = [0, 0], sizes = [8, 32], strides = [1, 1]} : vector<8x128xf32> to vector<8x32xf32>
    %92 = vector.extract_strided_slice %89 {offsets = [0, 32], sizes = [8, 32], strides = [1, 1]} : vector<8x128xf32> to vector<8x32xf32>
    %93 = vector.extract_strided_slice %90 {offsets = [0, 64], sizes = [8, 32], strides = [1, 1]} : vector<8x128xf32> to vector<8x32xf32>
    %94 = vector.extract_strided_slice %89 {offsets = [0, 96], sizes = [8, 32], strides = [1, 1]} : vector<8x128xf32> to vector<8x32xf32>
    %95 = arith.mulf %92, %36 : vector<8x32xf32>
    %96 = arith.mulf %91, %93 : vector<8x32xf32>
    %97 = arith.addf %95, %96 : vector<8x32xf32>
    %98 = math.tanh %97 : vector<8x32xf32>
    %99 = arith.mulf %94, %98 : vector<8x32xf32>
    %100 = tpu.concatenate %99, %58 in 1 : vector<8x32xf32>, vector<8x32xf32> -> vector<8x64xf32>
    %cst_33 = arith.constant dense<0.000000e+00> : vector<8x128xf32>
    %101 = tpu.matmul %100, %9, %cst_33 {dimension_numbers = #tpu.dot_dimension_numbers<[1], [0], [0], [1], [0, 0, 1, 1], [], []>} : vector<8x64xf32>, vector<64x128xf32>, vector<8x128xf32> -> vector<8x128xf32>
    %102 = arith.addf %101, %13 : vector<8x128xf32>
    %cst_34 = arith.constant 0.000000e+00 : f32
    %103 = vector.broadcast %cst_34 : f32 to vector<8x128xf32>
    %104 = arith.subf %103, %102 : vector<8x128xf32>
    %105 = math.exp %104 : vector<8x128xf32>
    %cst_35 = arith.constant 1.000000e+00 : f32
    %106 = vector.broadcast %cst_35 : f32 to vector<8x128xf32>
    %107 = arith.addf %106, %105 : vector<8x128xf32>
    %cst_36 = arith.constant 1.000000e+00 : f32
    %108 = vector.broadcast %cst_36 : f32 to vector<8x128xf32>
    %109 = arith.divf %108, %107 : vector<8x128xf32>
    %110 = math.tanh %102 : vector<8x128xf32>
    %111 = vector.extract_strided_slice %109 {offsets = [0, 0], sizes = [8, 32], strides = [1, 1]} : vector<8x128xf32> to vector<8x32xf32>
    %112 = vector.extract_strided_slice %109 {offsets = [0, 32], sizes = [8, 32], strides = [1, 1]} : vector<8x128xf32> to vector<8x32xf32>
    %113 = vector.extract_strided_slice %110 {offsets = [0, 64], sizes = [8, 32], strides = [1, 1]} : vector<8x128xf32> to vector<8x32xf32>
    %114 = vector.extract_strided_slice %109 {offsets = [0, 96], sizes = [8, 32], strides = [1, 1]} : vector<8x128xf32> to vector<8x32xf32>
    %115 = arith.mulf %112, %56 : vector<8x32xf32>
    %116 = arith.mulf %111, %113 : vector<8x32xf32>
    %117 = arith.addf %115, %116 : vector<8x32xf32>
    %118 = math.tanh %117 : vector<8x32xf32>
    %119 = arith.mulf %114, %118 : vector<8x32xf32>
    %120 = tpu.concatenate %119, %78 in 1 : vector<8x32xf32>, vector<8x32xf32> -> vector<8x64xf32>
    %cst_37 = arith.constant dense<0.000000e+00> : vector<8x128xf32>
    %121 = tpu.matmul %120, %10, %cst_37 {dimension_numbers = #tpu.dot_dimension_numbers<[1], [0], [0], [1], [0, 0, 1, 1], [], []>} : vector<8x64xf32>, vector<64x128xf32>, vector<8x128xf32> -> vector<8x128xf32>
    %122 = arith.addf %121, %16 : vector<8x128xf32>
    %cst_38 = arith.constant 0.000000e+00 : f32
    %123 = vector.broadcast %cst_38 : f32 to vector<8x128xf32>
    %124 = arith.subf %123, %122 : vector<8x128xf32>
    %125 = math.exp %124 : vector<8x128xf32>
    %cst_39 = arith.constant 1.000000e+00 : f32
    %126 = vector.broadcast %cst_39 : f32 to vector<8x128xf32>
    %127 = arith.addf %126, %125 : vector<8x128xf32>
    %cst_40 = arith.constant 1.000000e+00 : f32
    %128 = vector.broadcast %cst_40 : f32 to vector<8x128xf32>
    %129 = arith.divf %128, %127 : vector<8x128xf32>
    %130 = math.tanh %122 : vector<8x128xf32>
    %131 = vector.extract_strided_slice %129 {offsets = [0, 0], sizes = [8, 32], strides = [1, 1]} : vector<8x128xf32> to vector<8x32xf32>
    %132 = vector.extract_strided_slice %129 {offsets = [0, 32], sizes = [8, 32], strides = [1, 1]} : vector<8x128xf32> to vector<8x32xf32>
    %133 = vector.extract_strided_slice %130 {offsets = [0, 64], sizes = [8, 32], strides = [1, 1]} : vector<8x128xf32> to vector<8x32xf32>
    %134 = vector.extract_strided_slice %129 {offsets = [0, 96], sizes = [8, 32], strides = [1, 1]} : vector<8x128xf32> to vector<8x32xf32>
    %135 = arith.mulf %132, %76 : vector<8x32xf32>
    %136 = arith.mulf %131, %133 : vector<8x32xf32>
    %137 = arith.addf %135, %136 : vector<8x32xf32>
    %138 = math.tanh %137 : vector<8x32xf32>
    %139 = arith.mulf %134, %138 : vector<8x32xf32>
    %140 = vector.extract_strided_slice %7 {offsets = [2, 0, 0], sizes = [1, 8, 128], strides = [1, 1, 1]} : vector<8x8x128xf32> to vector<1x8x128xf32>
    %141 = vector.shape_cast %140 : vector<1x8x128xf32> to vector<8x128xf32>
    %cst_41 = arith.constant dense<0.000000e+00> : vector<8x128xf32>
    %142 = tpu.matmul %99, %8, %cst_41 {dimension_numbers = #tpu.dot_dimension_numbers<[1], [0], [0], [1], [0, 0, 1, 1], [], []>} : vector<8x32xf32>, vector<32x128xf32>, vector<8x128xf32> -> vector<8x128xf32>
    %143 = arith.addf %141, %142 : vector<8x128xf32>
    %cst_42 = arith.constant 0.000000e+00 : f32
    %144 = vector.broadcast %cst_42 : f32 to vector<8x128xf32>
    %145 = arith.subf %144, %143 : vector<8x128xf32>
    %146 = math.exp %145 : vector<8x128xf32>
    %cst_43 = arith.constant 1.000000e+00 : f32
    %147 = vector.broadcast %cst_43 : f32 to vector<8x128xf32>
    %148 = arith.addf %147, %146 : vector<8x128xf32>
    %cst_44 = arith.constant 1.000000e+00 : f32
    %149 = vector.broadcast %cst_44 : f32 to vector<8x128xf32>
    %150 = arith.divf %149, %148 : vector<8x128xf32>
    %151 = math.tanh %143 : vector<8x128xf32>
    %152 = vector.extract_strided_slice %150 {offsets = [0, 0], sizes = [8, 32], strides = [1, 1]} : vector<8x128xf32> to vector<8x32xf32>
    %153 = vector.extract_strided_slice %150 {offsets = [0, 32], sizes = [8, 32], strides = [1, 1]} : vector<8x128xf32> to vector<8x32xf32>
    %154 = vector.extract_strided_slice %151 {offsets = [0, 64], sizes = [8, 32], strides = [1, 1]} : vector<8x128xf32> to vector<8x32xf32>
    %155 = vector.extract_strided_slice %150 {offsets = [0, 96], sizes = [8, 32], strides = [1, 1]} : vector<8x128xf32> to vector<8x32xf32>
    %156 = arith.mulf %153, %97 : vector<8x32xf32>
    %157 = arith.mulf %152, %154 : vector<8x32xf32>
    %158 = arith.addf %156, %157 : vector<8x32xf32>
    %159 = math.tanh %158 : vector<8x32xf32>
    %160 = arith.mulf %155, %159 : vector<8x32xf32>
    %161 = tpu.concatenate %160, %119 in 1 : vector<8x32xf32>, vector<8x32xf32> -> vector<8x64xf32>
    %cst_45 = arith.constant dense<0.000000e+00> : vector<8x128xf32>
    %162 = tpu.matmul %161, %9, %cst_45 {dimension_numbers = #tpu.dot_dimension_numbers<[1], [0], [0], [1], [0, 0, 1, 1], [], []>} : vector<8x64xf32>, vector<64x128xf32>, vector<8x128xf32> -> vector<8x128xf32>
    %163 = arith.addf %162, %13 : vector<8x128xf32>
    %cst_46 = arith.constant 0.000000e+00 : f32
    %164 = vector.broadcast %cst_46 : f32 to vector<8x128xf32>
    %165 = arith.subf %164, %163 : vector<8x128xf32>
    %166 = math.exp %165 : vector<8x128xf32>
    %cst_47 = arith.constant 1.000000e+00 : f32
    %167 = vector.broadcast %cst_47 : f32 to vector<8x128xf32>
    %168 = arith.addf %167, %166 : vector<8x128xf32>
    %cst_48 = arith.constant 1.000000e+00 : f32
    %169 = vector.broadcast %cst_48 : f32 to vector<8x128xf32>
    %170 = arith.divf %169, %168 : vector<8x128xf32>
    %171 = math.tanh %163 : vector<8x128xf32>
    %172 = vector.extract_strided_slice %170 {offsets = [0, 0], sizes = [8, 32], strides = [1, 1]} : vector<8x128xf32> to vector<8x32xf32>
    %173 = vector.extract_strided_slice %170 {offsets = [0, 32], sizes = [8, 32], strides = [1, 1]} : vector<8x128xf32> to vector<8x32xf32>
    %174 = vector.extract_strided_slice %171 {offsets = [0, 64], sizes = [8, 32], strides = [1, 1]} : vector<8x128xf32> to vector<8x32xf32>
    %175 = vector.extract_strided_slice %170 {offsets = [0, 96], sizes = [8, 32], strides = [1, 1]} : vector<8x128xf32> to vector<8x32xf32>
    %176 = arith.mulf %173, %117 : vector<8x32xf32>
    %177 = arith.mulf %172, %174 : vector<8x32xf32>
    %178 = arith.addf %176, %177 : vector<8x32xf32>
    %179 = math.tanh %178 : vector<8x32xf32>
    %180 = arith.mulf %175, %179 : vector<8x32xf32>
    %181 = tpu.concatenate %180, %139 in 1 : vector<8x32xf32>, vector<8x32xf32> -> vector<8x64xf32>
    %cst_49 = arith.constant dense<0.000000e+00> : vector<8x128xf32>
    %182 = tpu.matmul %181, %10, %cst_49 {dimension_numbers = #tpu.dot_dimension_numbers<[1], [0], [0], [1], [0, 0, 1, 1], [], []>} : vector<8x64xf32>, vector<64x128xf32>, vector<8x128xf32> -> vector<8x128xf32>
    %183 = arith.addf %182, %16 : vector<8x128xf32>
    %cst_50 = arith.constant 0.000000e+00 : f32
    %184 = vector.broadcast %cst_50 : f32 to vector<8x128xf32>
    %185 = arith.subf %184, %183 : vector<8x128xf32>
    %186 = math.exp %185 : vector<8x128xf32>
    %cst_51 = arith.constant 1.000000e+00 : f32
    %187 = vector.broadcast %cst_51 : f32 to vector<8x128xf32>
    %188 = arith.addf %187, %186 : vector<8x128xf32>
    %cst_52 = arith.constant 1.000000e+00 : f32
    %189 = vector.broadcast %cst_52 : f32 to vector<8x128xf32>
    %190 = arith.divf %189, %188 : vector<8x128xf32>
    %191 = math.tanh %183 : vector<8x128xf32>
    %192 = vector.extract_strided_slice %190 {offsets = [0, 0], sizes = [8, 32], strides = [1, 1]} : vector<8x128xf32> to vector<8x32xf32>
    %193 = vector.extract_strided_slice %190 {offsets = [0, 32], sizes = [8, 32], strides = [1, 1]} : vector<8x128xf32> to vector<8x32xf32>
    %194 = vector.extract_strided_slice %191 {offsets = [0, 64], sizes = [8, 32], strides = [1, 1]} : vector<8x128xf32> to vector<8x32xf32>
    %195 = vector.extract_strided_slice %190 {offsets = [0, 96], sizes = [8, 32], strides = [1, 1]} : vector<8x128xf32> to vector<8x32xf32>
    %196 = arith.mulf %193, %137 : vector<8x32xf32>
    %197 = arith.mulf %192, %194 : vector<8x32xf32>
    %198 = arith.addf %196, %197 : vector<8x32xf32>
    %199 = math.tanh %198 : vector<8x32xf32>
    %200 = arith.mulf %195, %199 : vector<8x32xf32>
    %201 = vector.extract_strided_slice %7 {offsets = [3, 0, 0], sizes = [1, 8, 128], strides = [1, 1, 1]} : vector<8x8x128xf32> to vector<1x8x128xf32>
    %202 = vector.shape_cast %201 : vector<1x8x128xf32> to vector<8x128xf32>
    %cst_53 = arith.constant dense<0.000000e+00> : vector<8x128xf32>
    %203 = tpu.matmul %160, %8, %cst_53 {dimension_numbers = #tpu.dot_dimension_numbers<[1], [0], [0], [1], [0, 0, 1, 1], [], []>} : vector<8x32xf32>, vector<32x128xf32>, vector<8x128xf32> -> vector<8x128xf32>
    %204 = arith.addf %202, %203 : vector<8x128xf32>
    %cst_54 = arith.constant 0.000000e+00 : f32
    %205 = vector.broadcast %cst_54 : f32 to vector<8x128xf32>
    %206 = arith.subf %205, %204 : vector<8x128xf32>
    %207 = math.exp %206 : vector<8x128xf32>
    %cst_55 = arith.constant 1.000000e+00 : f32
    %208 = vector.broadcast %cst_55 : f32 to vector<8x128xf32>
    %209 = arith.addf %208, %207 : vector<8x128xf32>
    %cst_56 = arith.constant 1.000000e+00 : f32
    %210 = vector.broadcast %cst_56 : f32 to vector<8x128xf32>
    %211 = arith.divf %210, %209 : vector<8x128xf32>
    %212 = math.tanh %204 : vector<8x128xf32>
    %213 = vector.extract_strided_slice %211 {offsets = [0, 0], sizes = [8, 32], strides = [1, 1]} : vector<8x128xf32> to vector<8x32xf32>
    %214 = vector.extract_strided_slice %211 {offsets = [0, 32], sizes = [8, 32], strides = [1, 1]} : vector<8x128xf32> to vector<8x32xf32>
    %215 = vector.extract_strided_slice %212 {offsets = [0, 64], sizes = [8, 32], strides = [1, 1]} : vector<8x128xf32> to vector<8x32xf32>
    %216 = vector.extract_strided_slice %211 {offsets = [0, 96], sizes = [8, 32], strides = [1, 1]} : vector<8x128xf32> to vector<8x32xf32>
    %217 = arith.mulf %214, %158 : vector<8x32xf32>
    %218 = arith.mulf %213, %215 : vector<8x32xf32>
    %219 = arith.addf %217, %218 : vector<8x32xf32>
    %220 = math.tanh %219 : vector<8x32xf32>
    %221 = arith.mulf %216, %220 : vector<8x32xf32>
    %222 = tpu.concatenate %221, %180 in 1 : vector<8x32xf32>, vector<8x32xf32> -> vector<8x64xf32>
    %cst_57 = arith.constant dense<0.000000e+00> : vector<8x128xf32>
    %223 = tpu.matmul %222, %9, %cst_57 {dimension_numbers = #tpu.dot_dimension_numbers<[1], [0], [0], [1], [0, 0, 1, 1], [], []>} : vector<8x64xf32>, vector<64x128xf32>, vector<8x128xf32> -> vector<8x128xf32>
    %224 = arith.addf %223, %13 : vector<8x128xf32>
    %cst_58 = arith.constant 0.000000e+00 : f32
    %225 = vector.broadcast %cst_58 : f32 to vector<8x128xf32>
    %226 = arith.subf %225, %224 : vector<8x128xf32>
    %227 = math.exp %226 : vector<8x128xf32>
    %cst_59 = arith.constant 1.000000e+00 : f32
    %228 = vector.broadcast %cst_59 : f32 to vector<8x128xf32>
    %229 = arith.addf %228, %227 : vector<8x128xf32>
    %cst_60 = arith.constant 1.000000e+00 : f32
    %230 = vector.broadcast %cst_60 : f32 to vector<8x128xf32>
    %231 = arith.divf %230, %229 : vector<8x128xf32>
    %232 = math.tanh %224 : vector<8x128xf32>
    %233 = vector.extract_strided_slice %231 {offsets = [0, 0], sizes = [8, 32], strides = [1, 1]} : vector<8x128xf32> to vector<8x32xf32>
    %234 = vector.extract_strided_slice %231 {offsets = [0, 32], sizes = [8, 32], strides = [1, 1]} : vector<8x128xf32> to vector<8x32xf32>
    %235 = vector.extract_strided_slice %232 {offsets = [0, 64], sizes = [8, 32], strides = [1, 1]} : vector<8x128xf32> to vector<8x32xf32>
    %236 = vector.extract_strided_slice %231 {offsets = [0, 96], sizes = [8, 32], strides = [1, 1]} : vector<8x128xf32> to vector<8x32xf32>
    %237 = arith.mulf %234, %178 : vector<8x32xf32>
    %238 = arith.mulf %233, %235 : vector<8x32xf32>
    %239 = arith.addf %237, %238 : vector<8x32xf32>
    %240 = math.tanh %239 : vector<8x32xf32>
    %241 = arith.mulf %236, %240 : vector<8x32xf32>
    %242 = tpu.concatenate %241, %200 in 1 : vector<8x32xf32>, vector<8x32xf32> -> vector<8x64xf32>
    %cst_61 = arith.constant dense<0.000000e+00> : vector<8x128xf32>
    %243 = tpu.matmul %242, %10, %cst_61 {dimension_numbers = #tpu.dot_dimension_numbers<[1], [0], [0], [1], [0, 0, 1, 1], [], []>} : vector<8x64xf32>, vector<64x128xf32>, vector<8x128xf32> -> vector<8x128xf32>
    %244 = arith.addf %243, %16 : vector<8x128xf32>
    %cst_62 = arith.constant 0.000000e+00 : f32
    %245 = vector.broadcast %cst_62 : f32 to vector<8x128xf32>
    %246 = arith.subf %245, %244 : vector<8x128xf32>
    %247 = math.exp %246 : vector<8x128xf32>
    %cst_63 = arith.constant 1.000000e+00 : f32
    %248 = vector.broadcast %cst_63 : f32 to vector<8x128xf32>
    %249 = arith.addf %248, %247 : vector<8x128xf32>
    %cst_64 = arith.constant 1.000000e+00 : f32
    %250 = vector.broadcast %cst_64 : f32 to vector<8x128xf32>
    %251 = arith.divf %250, %249 : vector<8x128xf32>
    %252 = math.tanh %244 : vector<8x128xf32>
    %253 = vector.extract_strided_slice %251 {offsets = [0, 0], sizes = [8, 32], strides = [1, 1]} : vector<8x128xf32> to vector<8x32xf32>
    %254 = vector.extract_strided_slice %251 {offsets = [0, 32], sizes = [8, 32], strides = [1, 1]} : vector<8x128xf32> to vector<8x32xf32>
    %255 = vector.extract_strided_slice %252 {offsets = [0, 64], sizes = [8, 32], strides = [1, 1]} : vector<8x128xf32> to vector<8x32xf32>
    %256 = vector.extract_strided_slice %251 {offsets = [0, 96], sizes = [8, 32], strides = [1, 1]} : vector<8x128xf32> to vector<8x32xf32>
    %257 = arith.mulf %254, %198 : vector<8x32xf32>
    %258 = arith.mulf %253, %255 : vector<8x32xf32>
    %259 = arith.addf %257, %258 : vector<8x32xf32>
    %260 = math.tanh %259 : vector<8x32xf32>
    %261 = arith.mulf %256, %260 : vector<8x32xf32>
    %262 = vector.extract_strided_slice %7 {offsets = [4, 0, 0], sizes = [1, 8, 128], strides = [1, 1, 1]} : vector<8x8x128xf32> to vector<1x8x128xf32>
    %263 = vector.shape_cast %262 : vector<1x8x128xf32> to vector<8x128xf32>
    %cst_65 = arith.constant dense<0.000000e+00> : vector<8x128xf32>
    %264 = tpu.matmul %221, %8, %cst_65 {dimension_numbers = #tpu.dot_dimension_numbers<[1], [0], [0], [1], [0, 0, 1, 1], [], []>} : vector<8x32xf32>, vector<32x128xf32>, vector<8x128xf32> -> vector<8x128xf32>
    %265 = arith.addf %263, %264 : vector<8x128xf32>
    %cst_66 = arith.constant 0.000000e+00 : f32
    %266 = vector.broadcast %cst_66 : f32 to vector<8x128xf32>
    %267 = arith.subf %266, %265 : vector<8x128xf32>
    %268 = math.exp %267 : vector<8x128xf32>
    %cst_67 = arith.constant 1.000000e+00 : f32
    %269 = vector.broadcast %cst_67 : f32 to vector<8x128xf32>
    %270 = arith.addf %269, %268 : vector<8x128xf32>
    %cst_68 = arith.constant 1.000000e+00 : f32
    %271 = vector.broadcast %cst_68 : f32 to vector<8x128xf32>
    %272 = arith.divf %271, %270 : vector<8x128xf32>
    %273 = math.tanh %265 : vector<8x128xf32>
    %274 = vector.extract_strided_slice %272 {offsets = [0, 0], sizes = [8, 32], strides = [1, 1]} : vector<8x128xf32> to vector<8x32xf32>
    %275 = vector.extract_strided_slice %272 {offsets = [0, 32], sizes = [8, 32], strides = [1, 1]} : vector<8x128xf32> to vector<8x32xf32>
    %276 = vector.extract_strided_slice %273 {offsets = [0, 64], sizes = [8, 32], strides = [1, 1]} : vector<8x128xf32> to vector<8x32xf32>
    %277 = vector.extract_strided_slice %272 {offsets = [0, 96], sizes = [8, 32], strides = [1, 1]} : vector<8x128xf32> to vector<8x32xf32>
    %278 = arith.mulf %275, %219 : vector<8x32xf32>
    %279 = arith.mulf %274, %276 : vector<8x32xf32>
    %280 = arith.addf %278, %279 : vector<8x32xf32>
    %281 = math.tanh %280 : vector<8x32xf32>
    %282 = arith.mulf %277, %281 : vector<8x32xf32>
    %283 = tpu.concatenate %282, %241 in 1 : vector<8x32xf32>, vector<8x32xf32> -> vector<8x64xf32>
    %cst_69 = arith.constant dense<0.000000e+00> : vector<8x128xf32>
    %284 = tpu.matmul %283, %9, %cst_69 {dimension_numbers = #tpu.dot_dimension_numbers<[1], [0], [0], [1], [0, 0, 1, 1], [], []>} : vector<8x64xf32>, vector<64x128xf32>, vector<8x128xf32> -> vector<8x128xf32>
    %285 = arith.addf %284, %13 : vector<8x128xf32>
    %cst_70 = arith.constant 0.000000e+00 : f32
    %286 = vector.broadcast %cst_70 : f32 to vector<8x128xf32>
    %287 = arith.subf %286, %285 : vector<8x128xf32>
    %288 = math.exp %287 : vector<8x128xf32>
    %cst_71 = arith.constant 1.000000e+00 : f32
    %289 = vector.broadcast %cst_71 : f32 to vector<8x128xf32>
    %290 = arith.addf %289, %288 : vector<8x128xf32>
    %cst_72 = arith.constant 1.000000e+00 : f32
    %291 = vector.broadcast %cst_72 : f32 to vector<8x128xf32>
    %292 = arith.divf %291, %290 : vector<8x128xf32>
    %293 = math.tanh %285 : vector<8x128xf32>
    %294 = vector.extract_strided_slice %292 {offsets = [0, 0], sizes = [8, 32], strides = [1, 1]} : vector<8x128xf32> to vector<8x32xf32>
    %295 = vector.extract_strided_slice %292 {offsets = [0, 32], sizes = [8, 32], strides = [1, 1]} : vector<8x128xf32> to vector<8x32xf32>
    %296 = vector.extract_strided_slice %293 {offsets = [0, 64], sizes = [8, 32], strides = [1, 1]} : vector<8x128xf32> to vector<8x32xf32>
    %297 = vector.extract_strided_slice %292 {offsets = [0, 96], sizes = [8, 32], strides = [1, 1]} : vector<8x128xf32> to vector<8x32xf32>
    %298 = arith.mulf %295, %239 : vector<8x32xf32>
    %299 = arith.mulf %294, %296 : vector<8x32xf32>
    %300 = arith.addf %298, %299 : vector<8x32xf32>
    %301 = math.tanh %300 : vector<8x32xf32>
    %302 = arith.mulf %297, %301 : vector<8x32xf32>
    %303 = tpu.concatenate %302, %261 in 1 : vector<8x32xf32>, vector<8x32xf32> -> vector<8x64xf32>
    %cst_73 = arith.constant dense<0.000000e+00> : vector<8x128xf32>
    %304 = tpu.matmul %303, %10, %cst_73 {dimension_numbers = #tpu.dot_dimension_numbers<[1], [0], [0], [1], [0, 0, 1, 1], [], []>} : vector<8x64xf32>, vector<64x128xf32>, vector<8x128xf32> -> vector<8x128xf32>
    %305 = arith.addf %304, %16 : vector<8x128xf32>
    %cst_74 = arith.constant 0.000000e+00 : f32
    %306 = vector.broadcast %cst_74 : f32 to vector<8x128xf32>
    %307 = arith.subf %306, %305 : vector<8x128xf32>
    %308 = math.exp %307 : vector<8x128xf32>
    %cst_75 = arith.constant 1.000000e+00 : f32
    %309 = vector.broadcast %cst_75 : f32 to vector<8x128xf32>
    %310 = arith.addf %309, %308 : vector<8x128xf32>
    %cst_76 = arith.constant 1.000000e+00 : f32
    %311 = vector.broadcast %cst_76 : f32 to vector<8x128xf32>
    %312 = arith.divf %311, %310 : vector<8x128xf32>
    %313 = math.tanh %305 : vector<8x128xf32>
    %314 = vector.extract_strided_slice %312 {offsets = [0, 0], sizes = [8, 32], strides = [1, 1]} : vector<8x128xf32> to vector<8x32xf32>
    %315 = vector.extract_strided_slice %312 {offsets = [0, 32], sizes = [8, 32], strides = [1, 1]} : vector<8x128xf32> to vector<8x32xf32>
    %316 = vector.extract_strided_slice %313 {offsets = [0, 64], sizes = [8, 32], strides = [1, 1]} : vector<8x128xf32> to vector<8x32xf32>
    %317 = vector.extract_strided_slice %312 {offsets = [0, 96], sizes = [8, 32], strides = [1, 1]} : vector<8x128xf32> to vector<8x32xf32>
    %318 = arith.mulf %315, %259 : vector<8x32xf32>
    %319 = arith.mulf %314, %316 : vector<8x32xf32>
    %320 = arith.addf %318, %319 : vector<8x32xf32>
    %321 = math.tanh %320 : vector<8x32xf32>
    %322 = arith.mulf %317, %321 : vector<8x32xf32>
    %323 = vector.extract_strided_slice %7 {offsets = [5, 0, 0], sizes = [1, 8, 128], strides = [1, 1, 1]} : vector<8x8x128xf32> to vector<1x8x128xf32>
    %324 = vector.shape_cast %323 : vector<1x8x128xf32> to vector<8x128xf32>
    %cst_77 = arith.constant dense<0.000000e+00> : vector<8x128xf32>
    %325 = tpu.matmul %282, %8, %cst_77 {dimension_numbers = #tpu.dot_dimension_numbers<[1], [0], [0], [1], [0, 0, 1, 1], [], []>} : vector<8x32xf32>, vector<32x128xf32>, vector<8x128xf32> -> vector<8x128xf32>
    %326 = arith.addf %324, %325 : vector<8x128xf32>
    %cst_78 = arith.constant 0.000000e+00 : f32
    %327 = vector.broadcast %cst_78 : f32 to vector<8x128xf32>
    %328 = arith.subf %327, %326 : vector<8x128xf32>
    %329 = math.exp %328 : vector<8x128xf32>
    %cst_79 = arith.constant 1.000000e+00 : f32
    %330 = vector.broadcast %cst_79 : f32 to vector<8x128xf32>
    %331 = arith.addf %330, %329 : vector<8x128xf32>
    %cst_80 = arith.constant 1.000000e+00 : f32
    %332 = vector.broadcast %cst_80 : f32 to vector<8x128xf32>
    %333 = arith.divf %332, %331 : vector<8x128xf32>
    %334 = math.tanh %326 : vector<8x128xf32>
    %335 = vector.extract_strided_slice %333 {offsets = [0, 0], sizes = [8, 32], strides = [1, 1]} : vector<8x128xf32> to vector<8x32xf32>
    %336 = vector.extract_strided_slice %333 {offsets = [0, 32], sizes = [8, 32], strides = [1, 1]} : vector<8x128xf32> to vector<8x32xf32>
    %337 = vector.extract_strided_slice %334 {offsets = [0, 64], sizes = [8, 32], strides = [1, 1]} : vector<8x128xf32> to vector<8x32xf32>
    %338 = vector.extract_strided_slice %333 {offsets = [0, 96], sizes = [8, 32], strides = [1, 1]} : vector<8x128xf32> to vector<8x32xf32>
    %339 = arith.mulf %336, %280 : vector<8x32xf32>
    %340 = arith.mulf %335, %337 : vector<8x32xf32>
    %341 = arith.addf %339, %340 : vector<8x32xf32>
    %342 = math.tanh %341 : vector<8x32xf32>
    %343 = arith.mulf %338, %342 : vector<8x32xf32>
    %344 = tpu.concatenate %343, %302 in 1 : vector<8x32xf32>, vector<8x32xf32> -> vector<8x64xf32>
    %cst_81 = arith.constant dense<0.000000e+00> : vector<8x128xf32>
    %345 = tpu.matmul %344, %9, %cst_81 {dimension_numbers = #tpu.dot_dimension_numbers<[1], [0], [0], [1], [0, 0, 1, 1], [], []>} : vector<8x64xf32>, vector<64x128xf32>, vector<8x128xf32> -> vector<8x128xf32>
    %346 = arith.addf %345, %13 : vector<8x128xf32>
    %cst_82 = arith.constant 0.000000e+00 : f32
    %347 = vector.broadcast %cst_82 : f32 to vector<8x128xf32>
    %348 = arith.subf %347, %346 : vector<8x128xf32>
    %349 = math.exp %348 : vector<8x128xf32>
    %cst_83 = arith.constant 1.000000e+00 : f32
    %350 = vector.broadcast %cst_83 : f32 to vector<8x128xf32>
    %351 = arith.addf %350, %349 : vector<8x128xf32>
    %cst_84 = arith.constant 1.000000e+00 : f32
    %352 = vector.broadcast %cst_84 : f32 to vector<8x128xf32>
    %353 = arith.divf %352, %351 : vector<8x128xf32>
    %354 = math.tanh %346 : vector<8x128xf32>
    %355 = vector.extract_strided_slice %353 {offsets = [0, 0], sizes = [8, 32], strides = [1, 1]} : vector<8x128xf32> to vector<8x32xf32>
    %356 = vector.extract_strided_slice %353 {offsets = [0, 32], sizes = [8, 32], strides = [1, 1]} : vector<8x128xf32> to vector<8x32xf32>
    %357 = vector.extract_strided_slice %354 {offsets = [0, 64], sizes = [8, 32], strides = [1, 1]} : vector<8x128xf32> to vector<8x32xf32>
    %358 = vector.extract_strided_slice %353 {offsets = [0, 96], sizes = [8, 32], strides = [1, 1]} : vector<8x128xf32> to vector<8x32xf32>
    %359 = arith.mulf %356, %300 : vector<8x32xf32>
    %360 = arith.mulf %355, %357 : vector<8x32xf32>
    %361 = arith.addf %359, %360 : vector<8x32xf32>
    %362 = math.tanh %361 : vector<8x32xf32>
    %363 = arith.mulf %358, %362 : vector<8x32xf32>
    %364 = tpu.concatenate %363, %322 in 1 : vector<8x32xf32>, vector<8x32xf32> -> vector<8x64xf32>
    %cst_85 = arith.constant dense<0.000000e+00> : vector<8x128xf32>
    %365 = tpu.matmul %364, %10, %cst_85 {dimension_numbers = #tpu.dot_dimension_numbers<[1], [0], [0], [1], [0, 0, 1, 1], [], []>} : vector<8x64xf32>, vector<64x128xf32>, vector<8x128xf32> -> vector<8x128xf32>
    %366 = arith.addf %365, %16 : vector<8x128xf32>
    %cst_86 = arith.constant 0.000000e+00 : f32
    %367 = vector.broadcast %cst_86 : f32 to vector<8x128xf32>
    %368 = arith.subf %367, %366 : vector<8x128xf32>
    %369 = math.exp %368 : vector<8x128xf32>
    %cst_87 = arith.constant 1.000000e+00 : f32
    %370 = vector.broadcast %cst_87 : f32 to vector<8x128xf32>
    %371 = arith.addf %370, %369 : vector<8x128xf32>
    %cst_88 = arith.constant 1.000000e+00 : f32
    %372 = vector.broadcast %cst_88 : f32 to vector<8x128xf32>
    %373 = arith.divf %372, %371 : vector<8x128xf32>
    %374 = math.tanh %366 : vector<8x128xf32>
    %375 = vector.extract_strided_slice %373 {offsets = [0, 0], sizes = [8, 32], strides = [1, 1]} : vector<8x128xf32> to vector<8x32xf32>
    %376 = vector.extract_strided_slice %373 {offsets = [0, 32], sizes = [8, 32], strides = [1, 1]} : vector<8x128xf32> to vector<8x32xf32>
    %377 = vector.extract_strided_slice %374 {offsets = [0, 64], sizes = [8, 32], strides = [1, 1]} : vector<8x128xf32> to vector<8x32xf32>
    %378 = vector.extract_strided_slice %373 {offsets = [0, 96], sizes = [8, 32], strides = [1, 1]} : vector<8x128xf32> to vector<8x32xf32>
    %379 = arith.mulf %376, %320 : vector<8x32xf32>
    %380 = arith.mulf %375, %377 : vector<8x32xf32>
    %381 = arith.addf %379, %380 : vector<8x32xf32>
    %382 = math.tanh %381 : vector<8x32xf32>
    %383 = arith.mulf %378, %382 : vector<8x32xf32>
    %384 = vector.extract_strided_slice %7 {offsets = [6, 0, 0], sizes = [1, 8, 128], strides = [1, 1, 1]} : vector<8x8x128xf32> to vector<1x8x128xf32>
    %385 = vector.shape_cast %384 : vector<1x8x128xf32> to vector<8x128xf32>
    %cst_89 = arith.constant dense<0.000000e+00> : vector<8x128xf32>
    %386 = tpu.matmul %343, %8, %cst_89 {dimension_numbers = #tpu.dot_dimension_numbers<[1], [0], [0], [1], [0, 0, 1, 1], [], []>} : vector<8x32xf32>, vector<32x128xf32>, vector<8x128xf32> -> vector<8x128xf32>
    %387 = arith.addf %385, %386 : vector<8x128xf32>
    %cst_90 = arith.constant 0.000000e+00 : f32
    %388 = vector.broadcast %cst_90 : f32 to vector<8x128xf32>
    %389 = arith.subf %388, %387 : vector<8x128xf32>
    %390 = math.exp %389 : vector<8x128xf32>
    %cst_91 = arith.constant 1.000000e+00 : f32
    %391 = vector.broadcast %cst_91 : f32 to vector<8x128xf32>
    %392 = arith.addf %391, %390 : vector<8x128xf32>
    %cst_92 = arith.constant 1.000000e+00 : f32
    %393 = vector.broadcast %cst_92 : f32 to vector<8x128xf32>
    %394 = arith.divf %393, %392 : vector<8x128xf32>
    %395 = math.tanh %387 : vector<8x128xf32>
    %396 = vector.extract_strided_slice %394 {offsets = [0, 0], sizes = [8, 32], strides = [1, 1]} : vector<8x128xf32> to vector<8x32xf32>
    %397 = vector.extract_strided_slice %394 {offsets = [0, 32], sizes = [8, 32], strides = [1, 1]} : vector<8x128xf32> to vector<8x32xf32>
    %398 = vector.extract_strided_slice %395 {offsets = [0, 64], sizes = [8, 32], strides = [1, 1]} : vector<8x128xf32> to vector<8x32xf32>
    %399 = vector.extract_strided_slice %394 {offsets = [0, 96], sizes = [8, 32], strides = [1, 1]} : vector<8x128xf32> to vector<8x32xf32>
    %400 = arith.mulf %397, %341 : vector<8x32xf32>
    %401 = arith.mulf %396, %398 : vector<8x32xf32>
    %402 = arith.addf %400, %401 : vector<8x32xf32>
    %403 = math.tanh %402 : vector<8x32xf32>
    %404 = arith.mulf %399, %403 : vector<8x32xf32>
    %405 = tpu.concatenate %404, %363 in 1 : vector<8x32xf32>, vector<8x32xf32> -> vector<8x64xf32>
    %cst_93 = arith.constant dense<0.000000e+00> : vector<8x128xf32>
    %406 = tpu.matmul %405, %9, %cst_93 {dimension_numbers = #tpu.dot_dimension_numbers<[1], [0], [0], [1], [0, 0, 1, 1], [], []>} : vector<8x64xf32>, vector<64x128xf32>, vector<8x128xf32> -> vector<8x128xf32>
    %407 = arith.addf %406, %13 : vector<8x128xf32>
    %cst_94 = arith.constant 0.000000e+00 : f32
    %408 = vector.broadcast %cst_94 : f32 to vector<8x128xf32>
    %409 = arith.subf %408, %407 : vector<8x128xf32>
    %410 = math.exp %409 : vector<8x128xf32>
    %cst_95 = arith.constant 1.000000e+00 : f32
    %411 = vector.broadcast %cst_95 : f32 to vector<8x128xf32>
    %412 = arith.addf %411, %410 : vector<8x128xf32>
    %cst_96 = arith.constant 1.000000e+00 : f32
    %413 = vector.broadcast %cst_96 : f32 to vector<8x128xf32>
    %414 = arith.divf %413, %412 : vector<8x128xf32>
    %415 = math.tanh %407 : vector<8x128xf32>
    %416 = vector.extract_strided_slice %414 {offsets = [0, 0], sizes = [8, 32], strides = [1, 1]} : vector<8x128xf32> to vector<8x32xf32>
    %417 = vector.extract_strided_slice %414 {offsets = [0, 32], sizes = [8, 32], strides = [1, 1]} : vector<8x128xf32> to vector<8x32xf32>
    %418 = vector.extract_strided_slice %415 {offsets = [0, 64], sizes = [8, 32], strides = [1, 1]} : vector<8x128xf32> to vector<8x32xf32>
    %419 = vector.extract_strided_slice %414 {offsets = [0, 96], sizes = [8, 32], strides = [1, 1]} : vector<8x128xf32> to vector<8x32xf32>
    %420 = arith.mulf %417, %361 : vector<8x32xf32>
    %421 = arith.mulf %416, %418 : vector<8x32xf32>
    %422 = arith.addf %420, %421 : vector<8x32xf32>
    %423 = math.tanh %422 : vector<8x32xf32>
    %424 = arith.mulf %419, %423 : vector<8x32xf32>
    %425 = tpu.concatenate %424, %383 in 1 : vector<8x32xf32>, vector<8x32xf32> -> vector<8x64xf32>
    %cst_97 = arith.constant dense<0.000000e+00> : vector<8x128xf32>
    %426 = tpu.matmul %425, %10, %cst_97 {dimension_numbers = #tpu.dot_dimension_numbers<[1], [0], [0], [1], [0, 0, 1, 1], [], []>} : vector<8x64xf32>, vector<64x128xf32>, vector<8x128xf32> -> vector<8x128xf32>
    %427 = arith.addf %426, %16 : vector<8x128xf32>
    %cst_98 = arith.constant 0.000000e+00 : f32
    %428 = vector.broadcast %cst_98 : f32 to vector<8x128xf32>
    %429 = arith.subf %428, %427 : vector<8x128xf32>
    %430 = math.exp %429 : vector<8x128xf32>
    %cst_99 = arith.constant 1.000000e+00 : f32
    %431 = vector.broadcast %cst_99 : f32 to vector<8x128xf32>
    %432 = arith.addf %431, %430 : vector<8x128xf32>
    %cst_100 = arith.constant 1.000000e+00 : f32
    %433 = vector.broadcast %cst_100 : f32 to vector<8x128xf32>
    %434 = arith.divf %433, %432 : vector<8x128xf32>
    %435 = math.tanh %427 : vector<8x128xf32>
    %436 = vector.extract_strided_slice %434 {offsets = [0, 0], sizes = [8, 32], strides = [1, 1]} : vector<8x128xf32> to vector<8x32xf32>
    %437 = vector.extract_strided_slice %434 {offsets = [0, 32], sizes = [8, 32], strides = [1, 1]} : vector<8x128xf32> to vector<8x32xf32>
    %438 = vector.extract_strided_slice %435 {offsets = [0, 64], sizes = [8, 32], strides = [1, 1]} : vector<8x128xf32> to vector<8x32xf32>
    %439 = vector.extract_strided_slice %434 {offsets = [0, 96], sizes = [8, 32], strides = [1, 1]} : vector<8x128xf32> to vector<8x32xf32>
    %440 = arith.mulf %437, %381 : vector<8x32xf32>
    %441 = arith.mulf %436, %438 : vector<8x32xf32>
    %442 = arith.addf %440, %441 : vector<8x32xf32>
    %443 = math.tanh %442 : vector<8x32xf32>
    %444 = arith.mulf %439, %443 : vector<8x32xf32>
    %445 = vector.extract_strided_slice %7 {offsets = [7, 0, 0], sizes = [1, 8, 128], strides = [1, 1, 1]} : vector<8x8x128xf32> to vector<1x8x128xf32>
    %446 = vector.shape_cast %445 : vector<1x8x128xf32> to vector<8x128xf32>
    %cst_101 = arith.constant dense<0.000000e+00> : vector<8x128xf32>
    %447 = tpu.matmul %404, %8, %cst_101 {dimension_numbers = #tpu.dot_dimension_numbers<[1], [0], [0], [1], [0, 0, 1, 1], [], []>} : vector<8x32xf32>, vector<32x128xf32>, vector<8x128xf32> -> vector<8x128xf32>
    %448 = arith.addf %446, %447 : vector<8x128xf32>
    %cst_102 = arith.constant 0.000000e+00 : f32
    %449 = vector.broadcast %cst_102 : f32 to vector<8x128xf32>
    %450 = arith.subf %449, %448 : vector<8x128xf32>
    %451 = math.exp %450 : vector<8x128xf32>
    %cst_103 = arith.constant 1.000000e+00 : f32
    %452 = vector.broadcast %cst_103 : f32 to vector<8x128xf32>
    %453 = arith.addf %452, %451 : vector<8x128xf32>
    %cst_104 = arith.constant 1.000000e+00 : f32
    %454 = vector.broadcast %cst_104 : f32 to vector<8x128xf32>
    %455 = arith.divf %454, %453 : vector<8x128xf32>
    %456 = math.tanh %448 : vector<8x128xf32>
    %457 = vector.extract_strided_slice %455 {offsets = [0, 0], sizes = [8, 32], strides = [1, 1]} : vector<8x128xf32> to vector<8x32xf32>
    %458 = vector.extract_strided_slice %455 {offsets = [0, 32], sizes = [8, 32], strides = [1, 1]} : vector<8x128xf32> to vector<8x32xf32>
    %459 = vector.extract_strided_slice %456 {offsets = [0, 64], sizes = [8, 32], strides = [1, 1]} : vector<8x128xf32> to vector<8x32xf32>
    %460 = vector.extract_strided_slice %455 {offsets = [0, 96], sizes = [8, 32], strides = [1, 1]} : vector<8x128xf32> to vector<8x32xf32>
    %461 = arith.mulf %458, %402 : vector<8x32xf32>
    %462 = arith.mulf %457, %459 : vector<8x32xf32>
    %463 = arith.addf %461, %462 : vector<8x32xf32>
    %464 = math.tanh %463 : vector<8x32xf32>
    %465 = arith.mulf %460, %464 : vector<8x32xf32>
    %466 = tpu.concatenate %465, %424 in 1 : vector<8x32xf32>, vector<8x32xf32> -> vector<8x64xf32>
    %cst_105 = arith.constant dense<0.000000e+00> : vector<8x128xf32>
    %467 = tpu.matmul %466, %9, %cst_105 {dimension_numbers = #tpu.dot_dimension_numbers<[1], [0], [0], [1], [0, 0, 1, 1], [], []>} : vector<8x64xf32>, vector<64x128xf32>, vector<8x128xf32> -> vector<8x128xf32>
    %468 = arith.addf %467, %13 : vector<8x128xf32>
    %cst_106 = arith.constant 0.000000e+00 : f32
    %469 = vector.broadcast %cst_106 : f32 to vector<8x128xf32>
    %470 = arith.subf %469, %468 : vector<8x128xf32>
    %471 = math.exp %470 : vector<8x128xf32>
    %cst_107 = arith.constant 1.000000e+00 : f32
    %472 = vector.broadcast %cst_107 : f32 to vector<8x128xf32>
    %473 = arith.addf %472, %471 : vector<8x128xf32>
    %cst_108 = arith.constant 1.000000e+00 : f32
    %474 = vector.broadcast %cst_108 : f32 to vector<8x128xf32>
    %475 = arith.divf %474, %473 : vector<8x128xf32>
    %476 = math.tanh %468 : vector<8x128xf32>
    %477 = vector.extract_strided_slice %475 {offsets = [0, 0], sizes = [8, 32], strides = [1, 1]} : vector<8x128xf32> to vector<8x32xf32>
    %478 = vector.extract_strided_slice %475 {offsets = [0, 32], sizes = [8, 32], strides = [1, 1]} : vector<8x128xf32> to vector<8x32xf32>
    %479 = vector.extract_strided_slice %476 {offsets = [0, 64], sizes = [8, 32], strides = [1, 1]} : vector<8x128xf32> to vector<8x32xf32>
    %480 = vector.extract_strided_slice %475 {offsets = [0, 96], sizes = [8, 32], strides = [1, 1]} : vector<8x128xf32> to vector<8x32xf32>
    %481 = arith.mulf %478, %422 : vector<8x32xf32>
    %482 = arith.mulf %477, %479 : vector<8x32xf32>
    %483 = arith.addf %481, %482 : vector<8x32xf32>
    %484 = math.tanh %483 : vector<8x32xf32>
    %485 = arith.mulf %480, %484 : vector<8x32xf32>
    %486 = tpu.concatenate %485, %444 in 1 : vector<8x32xf32>, vector<8x32xf32> -> vector<8x64xf32>
    %cst_109 = arith.constant dense<0.000000e+00> : vector<8x128xf32>
    %487 = tpu.matmul %486, %10, %cst_109 {dimension_numbers = #tpu.dot_dimension_numbers<[1], [0], [0], [1], [0, 0, 1, 1], [], []>} : vector<8x64xf32>, vector<64x128xf32>, vector<8x128xf32> -> vector<8x128xf32>
    %488 = arith.addf %487, %16 : vector<8x128xf32>
    %cst_110 = arith.constant 0.000000e+00 : f32
    %489 = vector.broadcast %cst_110 : f32 to vector<8x128xf32>
    %490 = arith.subf %489, %488 : vector<8x128xf32>
    %491 = math.exp %490 : vector<8x128xf32>
    %cst_111 = arith.constant 1.000000e+00 : f32
    %492 = vector.broadcast %cst_111 : f32 to vector<8x128xf32>
    %493 = arith.addf %492, %491 : vector<8x128xf32>
    %cst_112 = arith.constant 1.000000e+00 : f32
    %494 = vector.broadcast %cst_112 : f32 to vector<8x128xf32>
    %495 = arith.divf %494, %493 : vector<8x128xf32>
    %496 = math.tanh %488 : vector<8x128xf32>
    %497 = vector.extract_strided_slice %495 {offsets = [0, 0], sizes = [8, 32], strides = [1, 1]} : vector<8x128xf32> to vector<8x32xf32>
    %498 = vector.extract_strided_slice %495 {offsets = [0, 32], sizes = [8, 32], strides = [1, 1]} : vector<8x128xf32> to vector<8x32xf32>
    %499 = vector.extract_strided_slice %496 {offsets = [0, 64], sizes = [8, 32], strides = [1, 1]} : vector<8x128xf32> to vector<8x32xf32>
    %500 = vector.extract_strided_slice %495 {offsets = [0, 96], sizes = [8, 32], strides = [1, 1]} : vector<8x128xf32> to vector<8x32xf32>
    %501 = arith.mulf %498, %442 : vector<8x32xf32>
    %502 = arith.mulf %497, %499 : vector<8x32xf32>
    %503 = arith.addf %501, %502 : vector<8x32xf32>
    %504 = math.tanh %503 : vector<8x32xf32>
    %505 = arith.mulf %500, %504 : vector<8x32xf32>
    %c0_113 = arith.constant 0 : index
    %c0_114 = arith.constant 0 : index
    %506 = vector.load %arg8[%c0_113, %c0_114] : memref<32x128xf32, #tpu.memory_space<vmem>>, vector<32x128xf32>
    %cst_115 = arith.constant dense<0.000000e+00> : vector<8x128xf32>
    %507 = tpu.matmul %505, %506, %cst_115 {dimension_numbers = #tpu.dot_dimension_numbers<[1], [0], [0], [1], [0, 0, 1, 1], [], []>} : vector<8x32xf32>, vector<32x128xf32>, vector<8x128xf32> -> vector<8x128xf32>
    %c0_116 = arith.constant 0 : index
    %c0_117 = arith.constant 0 : index
    %508 = vector.load %arg9[%c0_116, %c0_117] : memref<1x128xf32, #tpu.memory_space<vmem>>, vector<1x128xf32>
    %509 = vector.broadcast %508 : vector<1x128xf32> to vector<8x128xf32>
    %510 = arith.addf %507, %509 : vector<8x128xf32>
    %c0_118 = arith.constant 0 : index
    %c0_119 = arith.constant 0 : index
    %511 = vector.load %arg10[%c0_118, %c0_119] : memref<8x128xf32, #tpu.memory_space<vmem>>, vector<8x128xf32>
    tpu.vector_store %arg10[%c0_118, %c0_119], %510 {strides = array<i32>} : memref<8x128xf32, #tpu.memory_space<vmem>>, vector<8x128xf32>,
    return
  }
}

</mosaic_0001>

<llo_original>
// kernel: action_recognition_lstm.1
$region0: #{action_recognition_lstm.1}
  #allocation0 [shape = 'u32[]', space=smem, size = 0x4, offset = 0x4, fixed_abs, tag = 'smem constant byte address 0x4 - core index']
  #allocation1 [shape = 'u32[144,128]{1,0:T(1,128)}', space=vmem, size = 0x12000, scoped, tag = 'internal scratch']
  %s0 = inlined_call_operand.vmem [shape: f32[8,8,16], index: 0, kind: input, shape index: {}]
  %s1 = inlined_call_operand.hbm [shape: f32[16,128], index: 1, kind: input, shape index: {}]
  %s2 = inlined_call_operand.hbm [shape: f32[32,128], index: 2, kind: input, shape index: {}]
  %s3 = inlined_call_operand.hbm [shape: f32[1,128], index: 3, kind: input, shape index: {}]
  %s4 = inlined_call_operand.vmem [shape: f32[64,128], index: 4, kind: input, shape index: {}]
  %s5 = inlined_call_operand.vmem [shape: f32[1,128], index: 5, kind: input, shape index: {}]
  %s6 = inlined_call_operand.vmem [shape: f32[64,128], index: 6, kind: input, shape index: {}]
  %s7 = inlined_call_operand.vmem [shape: f32[1,128], index: 7, kind: input, shape index: {}]
  %s8 = inlined_call_operand.hbm [shape: f32[32,128], index: 8, kind: input, shape index: {}]
  %s9 = inlined_call_operand.vmem [shape: f32[1,128], index: 9, kind: input, shape index: {}]
  %s10 = inlined_call_operand.vmem [shape: f32[8,128], index: 10, kind: output, shape index: {}]
  %s11 = sld [smem:[#allocation0]]
  $region66: #{action_recognition_lstm.1} parent=0
    _
  %s13 = ssub.s32 1, %s11
  %s14 = scalar_select 0, %s13, %s11
  $region1: #{action_recognition_lstm.1} parent=0
    #allocation2 [shape = 'u8[8192]{0}', space=vmem, size = 0x2000, scoped, tag = 'input window, operand 1, single buffered']
    #allocation3 [shape = 's32[1]{0}', space=sflag, size = 0x4, scoped, tag = 'scoped memory for action_recognition_lstm.1']
    #allocation4 [shape = 'u8[16384]{0}', space=vmem, size = 0x4000, scoped, tag = 'input window, operand 2, single buffered']
    #allocation5 [shape = 's32[1]{0}', space=sflag, size = 0x4, scoped, tag = 'scoped memory for action_recognition_lstm.1']
    #allocation6 [shape = 'u8[512]{0}', space=vmem, size = 0x400, scoped, tag = 'input window, operand 3, single buffered']
    #allocation7 [shape = 'u8[16384]{0}', space=vmem, size = 0x4000, scoped, tag = 'input window, operand 8, single buffered']
    #allocation8 [shape = 's32[1]{0}', space=sflag, size = 0x4, scoped, tag = 'scoped memory for action_recognition_lstm.1']
    %15 = vsyncpa [#allocation3], 0
    %16 = vsyncpa [#allocation5], 0
    %17 = vsyncpa [#allocation8], 0
    // Predicated region
    $region2: #{action_recognition_lstm.1} parent=1 // pred_check
      _
    $region3: #{action_recognition_lstm.1} parent=1 // pred_check_branch
      %19 = sbr.rel (0) target = $region5
    $region4: #{action_recognition_lstm.1} parent=1 // pred_region
      _
    $region5: #{action_recognition_lstm.1} parent=1 // pred_fallthru
      _
    // Predicated region
    $region6: #{action_recognition_lstm.1} parent=1 // pred_check
      _
    $region7: #{action_recognition_lstm.1} parent=1 // pred_check_branch
      %21 = sbr.rel (0) target = $region9
    $region8: #{action_recognition_lstm.1} parent=1 // pred_region
      %s23 = ssub.s32 256, 256
      %24 = vsyncadd [#allocation3], %s23
      %s25 = sshll.u32 [#allocation2], 4
      %s26 = int_to_ptr.vmem [resolvable:$true] %s25
      %31 = dma.hbm_to_vmem [thread:$0]  %s1, 256, %s26, [#allocation3], 128, 128, 8
    $region9: #{action_recognition_lstm.1} parent=1 // pred_fallthru
      _
    // Predicated region
    $region10: #{action_recognition_lstm.1} parent=1 // pred_check
      _
    $region11: #{action_recognition_lstm.1} parent=1 // pred_check_branch
      %33 = sbr.rel (0) target = $region13
    $region12: #{action_recognition_lstm.1} parent=1 // pred_region
      %s35 = ssub.s32 512, 512
      %36 = vsyncadd [#allocation5], %s35
      %s37 = sshll.u32 [#allocation4], 4
      %s38 = int_to_ptr.vmem [resolvable:$true] %s37
      %43 = dma.hbm_to_vmem [thread:$0]  %s2, 512, %s38, [#allocation5], 128, 128, 8
    $region13: #{action_recognition_lstm.1} parent=1 // pred_fallthru
      _
    // Predicated region
    $region14: #{action_recognition_lstm.1} parent=1 // pred_check
      _
    $region15: #{action_recognition_lstm.1} parent=1 // pred_check_branch
      %45 = sbr.rel (0) target = $region17
    $region16: #{action_recognition_lstm.1} parent=1 // pred_region
      %s47 = ssub.s32 16, 16
      %48 = vsyncadd [#allocation5], %s47
      %s50 = sshll.u32 [#allocation6], 4
      %s51 = int_to_ptr.vmem [resolvable:$true] %s50
      %53 = dma.hbm_to_vmem [thread:$0]  %s3, 16, %s51, [#allocation5]
    $region17: #{action_recognition_lstm.1} parent=1 // pred_fallthru
      _
    // Predicated region
    $region18: #{action_recognition_lstm.1} parent=1 // pred_check
      _
    $region19: #{action_recognition_lstm.1} parent=1 // pred_check_branch
      %55 = sbr.rel (0) target = $region21
    $region20: #{action_recognition_lstm.1} parent=1 // pred_region
      _
    $region21: #{action_recognition_lstm.1} parent=1 // pred_fallthru
      _
    // Predicated region
    $region22: #{action_recognition_lstm.1} parent=1 // pred_check
      _
    $region23: #{action_recognition_lstm.1} parent=1 // pred_check_branch
      %57 = sbr.rel (0) target = $region25
    $region24: #{action_recognition_lstm.1} parent=1 // pred_region
      _
    $region25: #{action_recognition_lstm.1} parent=1 // pred_fallthru
      _
    // Predicated region
    $region26: #{action_recognition_lstm.1} parent=1 // pred_check
      _
    $region27: #{action_recognition_lstm.1} parent=1 // pred_check_branch
      %59 = sbr.rel (0) target = $region29
    $region28: #{action_recognition_lstm.1} parent=1 // pred_region
      _
    $region29: #{action_recognition_lstm.1} parent=1 // pred_fallthru
      _
    // Predicated region
    $region30: #{action_recognition_lstm.1} parent=1 // pred_check
      _
    $region31: #{action_recognition_lstm.1} parent=1 // pred_check_branch
      %61 = sbr.rel (0) target = $region33
    $region32: #{action_recognition_lstm.1} parent=1 // pred_region
      _
    $region33: #{action_recognition_lstm.1} parent=1 // pred_fallthru
      _
    // Predicated region
    $region34: #{action_recognition_lstm.1} parent=1 // pred_check
      _
    $region35: #{action_recognition_lstm.1} parent=1 // pred_check_branch
      %63 = sbr.rel (0) target = $region37
    $region36: #{action_recognition_lstm.1} parent=1 // pred_region
      %s65 = ssub.s32 512, 512
      %66 = vsyncadd [#allocation8], %s65
      %s67 = sshll.u32 [#allocation7], 4
      %s68 = int_to_ptr.vmem [resolvable:$true] %s67
      %73 = dma.hbm_to_vmem [thread:$0]  %s8, 512, %s68, [#allocation8], 128, 128, 8
    $region37: #{action_recognition_lstm.1} parent=1 // pred_fallthru
      _
    // Predicated region
    $region38: #{action_recognition_lstm.1} parent=1 // pred_check
      _
    $region39: #{action_recognition_lstm.1} parent=1 // pred_check_branch
      %75 = sbr.rel (0) target = $region41
    $region40: #{action_recognition_lstm.1} parent=1 // pred_region
      _
    $region41: #{action_recognition_lstm.1} parent=1 // pred_fallthru
      _
    // Predicated region
    $region42: #{action_recognition_lstm.1} parent=1 // pred_check
      _
    $region43: #{action_recognition_lstm.1} parent=1 // pred_check_branch
      %77 = sbr.rel (0) target = $region45
    $region44: #{action_recognition_lstm.1} parent=1 // pred_region
      %78 = dma.done [#allocation3], 256
    $region45: #{action_recognition_lstm.1} parent=1 // pred_fallthru
      _
    // Predicated region
    $region46: #{action_recognition_lstm.1} parent=1 // pred_check
      _
    $region47: #{action_recognition_lstm.1} parent=1 // pred_check_branch
      %80 = sbr.rel (0) target = $region49
    $region48: #{action_recognition_lstm.1} parent=1 // pred_region
      %81 = dma.done [#allocation5], 512
    $region49: #{action_recognition_lstm.1} parent=1 // pred_fallthru
      _
    // Predicated region
    $region50: #{action_recognition_lstm.1} parent=1 // pred_check
      _
    $region51: #{action_recognition_lstm.1} parent=1 // pred_check_branch
      %83 = sbr.rel (0) target = $region53
    $region52: #{action_recognition_lstm.1} parent=1 // pred_region
      %84 = dma.done [#allocation5], 16
    $region53: #{action_recognition_lstm.1} parent=1 // pred_fallthru
      _
    // Predicated region
    $region54: #{action_recognition_lstm.1} parent=1 // pred_check
      _
    $region55: #{action_recognition_lstm.1} parent=1 // pred_check_branch
      %86 = sbr.rel (0) target = $region57
    $region56: #{action_recognition_lstm.1} parent=1 // pred_region
      %87 = dma.done [#allocation8], 512
    $region57: #{action_recognition_lstm.1} parent=1 // pred_fallthru
      _
    %v88 = vld [vmem:[%s0] sm:$0xff]
    %v89 = vld [vmem:[%s0 + $0x8] sm:$0xff]
    %v90 = vld [vmem:[%s0 + $0x10] sm:$0xff]
    %v91 = vld [vmem:[%s0 + $0x18] sm:$0xff]
    %v92 = vld [vmem:[%s0 + $0x20] sm:$0xff]
    %v93 = vld [vmem:[%s0 + $0x28] sm:$0xff]
    %v94 = vld [vmem:[%s0 + $0x30] sm:$0xff]
    %v95 = vld [vmem:[%s0 + $0x38] sm:$0xff]
    %v96 = vld [vmem:[#allocation2] sm:$0xff]
    %v97 = vld [vmem:[#allocation2 + $0x8] sm:$0xff]
    %v98 = vld [vmem:[#allocation6] sm:$0x1]
    %v100 = vlaneseq
    %v101 = vshrl.u32 %v100, 7
    %v102 = vsub.s32 0, %v101
    %v103 = vrot.slane %v98, %v102
    %vm105 = vcmask 130048
    %v107 = vsel %vm105, %v88, 0
    %v110 = vsel %vm105, %v89, 0
    %v113 = vsel %vm105, %v90, 0
    %v116 = vsel %vm105, %v91, 0
    %v119 = vsel %vm105, %v92, 0
    %v122 = vsel %vm105, %v93, 0
    %v125 = vsel %vm105, %v94, 0
    %v128 = vsel %vm105, %v95, 0
    %130 = vmatprep.subr.mxu0 0.0
    %131 = vmatpush1.msra.mxu0 %v96
    %132 = vmatprep.subr.mxu0 0.0
    %133 = vmatpush1.msra.mxu0 %v97
    %134 = vmatprep.subr.mxu0 0.0
    %135 = vmatpush1.msra.mxu0 0.0
    %136 = vmatprep.subr.mxu0 0.0
    %137 = vmatpush1.msra.mxu0 0.0
    %138 = vmatprep.subr.mxu0 0.0
    %139 = vmatpush1.msra.mxu0 0.0
    %140 = vmatprep.subr.mxu0 0.0
    %141 = vmatpush1.msra.mxu0 0.0
    %142 = vmatprep.subr.mxu0 0.0
    %143 = vmatpush1.msra.mxu0 0.0
    %144 = vmatprep.subr.mxu0 0.0
    %145 = vmatpush1.msra.mxu0 0.0
    %146 = vmatprep.subr.mxu0 0.0
    %147 = vmatpush1.msra.mxu0 0.0
    %148 = vmatprep.subr.mxu0 0.0
    %149 = vmatpush1.msra.mxu0 0.0
    %150 = vmatprep.subr.mxu0 0.0
    %151 = vmatpush1.msra.mxu0 0.0
    %152 = vmatprep.subr.mxu0 0.0
    %153 = vmatpush1.msra.mxu0 0.0
    %154 = vmatprep.subr.mxu0 0.0
    %155 = vmatpush1.msra.mxu0 0.0
    %156 = vmatprep.subr.mxu0 0.0
    %157 = vmatpush1.msra.mxu0 0.0
    %158 = vmatprep.subr.mxu0 0.0
    %159 = vmatpush1.msra.mxu0 0.0
    %160 = vmatprep.subr.mxu0 0.0
    %161 = vmatpush1.msra.mxu0 0.0
    %162 = vmatprep.subr.mxu0 0.0
    %163 = vmatpush1.msra.mxu0 0.0
    %164 = vmatprep.subr.mxu0 0.0
    %165 = vmatpush1.msra.mxu0 0.0
    %166 = vmatprep.subr.mxu0 0.0
    %167 = vmatpush1.msra.mxu0 0.0
    %168 = vmatprep.subr.mxu0 0.0
    %169 = vmatpush1.msra.mxu0 0.0
    %170 = vmatprep.subr.mxu0 0.0
    %171 = vmatpush1.msra.mxu0 0.0
    %172 = vmatprep.subr.mxu0 0.0
    %173 = vmatpush1.msra.mxu0 0.0
    %174 = vmatprep.subr.mxu0 0.0
    %175 = vmatpush1.msra.mxu0 0.0
    %176 = vmatprep.subr.mxu0 0.0
    %177 = vmatpush1.msra.mxu0 0.0
    %178 = vmatprep.subr.mxu0 0.0
    %179 = vmatpush1.msra.mxu0 0.0
    %180 = vmatprep.subr.mxu0 0.0
    %181 = vmatpush1.msra.mxu0 0.0
    %182 = vmatprep.subr.mxu0 0.0
    %183 = vmatpush1.msra.mxu0 0.0
    %184 = vmatprep.subr.mxu0 0.0
    %185 = vmatpush1.msra.mxu0 0.0
    %186 = vmatprep.subr.mxu0 0.0
    %187 = vmatpush1.msra.mxu0 0.0
    %188 = vmatprep.subr.mxu0 0.0
    %189 = vmatpush1.msra.mxu0 0.0
    %190 = vmatprep.subr.mxu0 0.0
    %191 = vmatpush1.msra.mxu0 0.0
    %192 = vmatprep.subr.mxu0 0.0
    %193 = vmatpush1.msra.mxu0 0.0
    %194 = vmatprep.mubr.f32.mxu0 0.0
    %195 = vmatmul.mubr.f32.gmra.mrb[0].mxu0 %v107
    %v196 = vpop.f32.mrb[0].mxu0
    %v197 = vadd.f32 %v103, %v196
    %v198 = vpop.f32.mrb[0].mxu0
    %199 = vmatprep.mubr.f32.mxu0 0.0
    %200 = vmatmul.mubr.f32.gmra.mrb[0].mxu0 %v110
    %v201 = vpop.f32.mrb[0].mxu0
    %v202 = vadd.f32 %v103, %v201
    %v203 = vpop.f32.mrb[0].mxu0
    %204 = vmatprep.mubr.f32.mxu0 0.0
    %205 = vmatmul.mubr.f32.gmra.mrb[0].mxu0 %v113
    %v206 = vpop.f32.mrb[0].mxu0
    %v207 = vadd.f32 %v103, %v206
    %v208 = vpop.f32.mrb[0].mxu0
    %209 = vmatprep.mubr.f32.mxu0 0.0
    %210 = vmatmul.mubr.f32.gmra.mrb[0].mxu0 %v116
    %v211 = vpop.f32.mrb[0].mxu0
    %v212 = vadd.f32 %v103, %v211
    %v213 = vpop.f32.mrb[0].mxu0
    %214 = vmatprep.mubr.f32.mxu0 0.0
    %215 = vmatmul.mubr.f32.gmra.mrb[0].mxu0 %v119
    %v216 = vpop.f32.mrb[0].mxu0
    %v217 = vadd.f32 %v103, %v216
    %v218 = vpop.f32.mrb[0].mxu0
    %219 = vmatprep.mubr.f32.mxu0 0.0
    %220 = vmatmul.mubr.f32.gmra.mrb[0].mxu0 %v122
    %v221 = vpop.f32.mrb[0].mxu0
    %v222 = vadd.f32 %v103, %v221
    %v223 = vpop.f32.mrb[0].mxu0
    %224 = vmatprep.mubr.f32.mxu0 0.0
    %225 = vmatmul.mubr.f32.gmra.mrb[0].mxu0 %v125
    %v226 = vpop.f32.mrb[0].mxu0
    %v227 = vadd.f32 %v103, %v226
    %v228 = vpop.f32.mrb[0].mxu0
    %229 = vmatprep.mubr.f32.mxu0 0.0
    %230 = vmatmul.mubr.f32.gmra.mrb[0].mxu0 %v128
    %v231 = vpop.f32.mrb[0].mxu0
    %v232 = vadd.f32 %v103, %v231
    %v233 = vpop.f32.mrb[0].mxu0
    %234 = vdwg.mxu0
    %v235 = vld [vmem:[#allocation4] sm:$0xff]
    %v236 = vld [vmem:[#allocation4 + $0x8] sm:$0xff]
    %v237 = vld [vmem:[#allocation4 + $0x10] sm:$0xff]
    %v238 = vld [vmem:[#allocation4 + $0x18] sm:$0xff]
    %v239 = vld [vmem:[%s4] sm:$0xff]
    %v240 = vld [vmem:[%s4 + $0x8] sm:$0xff]
    %v241 = vld [vmem:[%s4 + $0x10] sm:$0xff]
    %v242 = vld [vmem:[%s4 + $0x18] sm:$0xff]
    %v243 = vld [vmem:[%s4 + $0x20] sm:$0xff]
    %v244 = vld [vmem:[%s4 + $0x28] sm:$0xff]
    %v245 = vld [vmem:[%s4 + $0x30] sm:$0xff]
    %v246 = vld [vmem:[%s4 + $0x38] sm:$0xff]
    %v247 = vld [vmem:[%s6] sm:$0xff]
    %v248 = vld [vmem:[%s6 + $0x8] sm:$0xff]
    %v249 = vld [vmem:[%s6 + $0x10] sm:$0xff]
    %v250 = vld [vmem:[%s6 + $0x18] sm:$0xff]
    %v251 = vld [vmem:[%s6 + $0x20] sm:$0xff]
    %v252 = vld [vmem:[%s6 + $0x28] sm:$0xff]
    %v253 = vld [vmem:[%s6 + $0x30] sm:$0xff]
    %v254 = vld [vmem:[%s6 + $0x38] sm:$0xff]
    %v255 = vld [vmem:[%s5] sm:$0x1]
    %v257 = vlaneseq
    %v258 = vshrl.u32 %v257, 7
    %v259 = vsub.s32 0, %v258
    %v260 = vrot.slane %v255, %v259
    %v262 = vld [vmem:[%s7] sm:$0x1]
    %v264 = vlaneseq
    %v265 = vshrl.u32 %v264, 7
    %v266 = vsub.s32 0, %v265
    %v267 = vrot.slane %v262, %v266
    %vm269 = vcmask 261120
    %v271 = vsel %vm269, 0.0, 0
    %273 = vmatprep.subr.mxu0 0.0
    %274 = vmatpush1.msra.mxu0 %v235
    %275 = vmatprep.subr.mxu0 0.0
    %276 = vmatpush1.msra.mxu0 %v236
    %277 = vmatprep.subr.mxu0 0.0
    %278 = vmatpush1.msra.mxu0 %v237
    %279 = vmatprep.subr.mxu0 0.0
    %280 = vmatpush1.msra.mxu0 %v238
    %281 = vmatprep.subr.mxu0 0.0
    %282 = vmatpush1.msra.mxu0 0.0
    %283 = vmatprep.subr.mxu0 0.0
    %284 = vmatpush1.msra.mxu0 0.0
    %285 = vmatprep.subr.mxu0 0.0
    %286 = vmatpush1.msra.mxu0 0.0
    %287 = vmatprep.subr.mxu0 0.0
    %288 = vmatpush1.msra.mxu0 0.0
    %289 = vmatprep.subr.mxu0 0.0
    %290 = vmatpush1.msra.mxu0 0.0
    %291 = vmatprep.subr.mxu0 0.0
    %292 = vmatpush1.msra.mxu0 0.0
    %293 = vmatprep.subr.mxu0 0.0
    %294 = vmatpush1.msra.mxu0 0.0
    %295 = vmatprep.subr.mxu0 0.0
    %296 = vmatpush1.msra.mxu0 0.0
    %297 = vmatprep.subr.mxu0 0.0
    %298 = vmatpush1.msra.mxu0 0.0
    %299 = vmatprep.subr.mxu0 0.0
    %300 = vmatpush1.msra.mxu0 0.0
    %301 = vmatprep.subr.mxu0 0.0
    %302 = vmatpush1.msra.mxu0 0.0
    %303 = vmatprep.subr.mxu0 0.0
    %304 = vmatpush1.msra.mxu0 0.0
    %305 = vmatprep.subr.mxu0 0.0
    %306 = vmatpush1.msra.mxu0 0.0
    %307 = vmatprep.subr.mxu0 0.0
    %308 = vmatpush1.msra.mxu0 0.0
    %309 = vmatprep.subr.mxu0 0.0
    %310 = vmatpush1.msra.mxu0 0.0
    %311 = vmatprep.subr.mxu0 0.0
    %312 = vmatpush1.msra.mxu0 0.0
    %313 = vmatprep.subr.mxu0 0.0
    %314 = vmatpush1.msra.mxu0 0.0
    %315 = vmatprep.subr.mxu0 0.0
    %316 = vmatpush1.msra.mxu0 0.0
    %317 = vmatprep.subr.mxu0 0.0
    %318 = vmatpush1.msra.mxu0 0.0
    %319 = vmatprep.subr.mxu0 0.0
    %320 = vmatpush1.msra.mxu0 0.0
    %321 = vmatprep.subr.mxu0 0.0
    %322 = vmatpush1.msra.mxu0 0.0
    %323 = vmatprep.subr.mxu0 0.0
    %324 = vmatpush1.msra.mxu0 0.0
    %325 = vmatprep.subr.mxu0 0.0
    %326 = vmatpush1.msra.mxu0 0.0
    %327 = vmatprep.subr.mxu0 0.0
    %328 = vmatpush1.msra.mxu0 0.0
    %329 = vmatprep.subr.mxu0 0.0
    %330 = vmatpush1.msra.mxu0 0.0
    %331 = vmatprep.subr.mxu0 0.0
    %332 = vmatpush1.msra.mxu0 0.0
    %333 = vmatprep.subr.mxu0 0.0
    %334 = vmatpush1.msra.mxu0 0.0
    %335 = vmatprep.subr.mxu0 0.0
    %336 = vmatpush1.msra.mxu0 0.0
    %337 = vmatprep.mubr.f32.mxu0 0.0
    %338 = vmatmul.mubr.f32.gmra.mrb[0].mxu0 %v271
    %v339 = vpop.f32.mrb[0].mxu0
    %v340 = vadd.f32 0.0, %v339
    %v341 = vpop.f32.mrb[0].mxu0
    %342 = vdwg.mxu0
    %v343 = vadd.f32 %v197, %v340
    %v344 = vsub.f32 0.0, %v343
    %v345 = vmul.f32 %v344, 1.442695
    %v346 = vpow.pop %v345
    %v347 = vadd.f32 %v346, 1.0
    %v348 = vrcp.pop %v347
    %v349 = vmul.f32 1.0, %v348
    %v350 = vtanh.pop %v343
    %v351 = vmul.f32 %v349, 0.0
    %353 = vrot.lane.b32.xlu0 %v350, 64
    %v354 = vpop.permute.xlu0 %353
    %v356 = vmul.f32 %v349, %v354
    %358 = vrot.lane.b32.xlu0 %v356, 32
    %v359 = vpop.permute.xlu0 %358
    %v361 = vadd.f32 %v351, %v359
    %v362 = vtanh.pop %v361
    %364 = vrot.lane.b32.xlu0 %v362, 64
    %v365 = vpop.permute.xlu0 %364
    %v367 = vmul.f32 %v349, %v365
    %369 = vrot.lane.b32.xlu0 %v367, 32
    %v370 = vpop.permute.xlu0 %369
    %v372 = vsel %vm269, %v370, 0.0
    %vm373 = vcmask 523264
    %v375 = vsel %vm373, %v372, 0
    %377 = vmatprep.subr.mxu0 0.0
    %378 = vmatpush1.msra.mxu0 %v239
    %379 = vmatprep.subr.mxu0 0.0
    %380 = vmatpush1.msra.mxu0 %v240
    %381 = vmatprep.subr.mxu0 0.0
    %382 = vmatpush1.msra.mxu0 %v241
    %383 = vmatprep.subr.mxu0 0.0
    %384 = vmatpush1.msra.mxu0 %v242
    %385 = vmatprep.subr.mxu0 0.0
    %386 = vmatpush1.msra.mxu0 %v243
    %387 = vmatprep.subr.mxu0 0.0
    %388 = vmatpush1.msra.mxu0 %v244
    %389 = vmatprep.subr.mxu0 0.0
    %390 = vmatpush1.msra.mxu0 %v245
    %391 = vmatprep.subr.mxu0 0.0
    %392 = vmatpush1.msra.mxu0 %v246
    %393 = vmatprep.subr.mxu0 0.0
    %394 = vmatpush1.msra.mxu0 0.0
    %395 = vmatprep.subr.mxu0 0.0
    %396 = vmatpush1.msra.mxu0 0.0
    %397 = vmatprep.subr.mxu0 0.0
    %398 = vmatpush1.msra.mxu0 0.0
    %399 = vmatprep.subr.mxu0 0.0
    %400 = vmatpush1.msra.mxu0 0.0
    %401 = vmatprep.subr.mxu0 0.0
    %402 = vmatpush1.msra.mxu0 0.0
    %403 = vmatprep.subr.mxu0 0.0
    %404 = vmatpush1.msra.mxu0 0.0
    %405 = vmatprep.subr.mxu0 0.0
    %406 = vmatpush1.msra.mxu0 0.0
    %407 = vmatprep.subr.mxu0 0.0
    %408 = vmatpush1.msra.mxu0 0.0
    %409 = vmatprep.subr.mxu0 0.0
    %410 = vmatpush1.msra.mxu0 0.0
    %411 = vmatprep.subr.mxu0 0.0
    %412 = vmatpush1.msra.mxu0 0.0
    %413 = vmatprep.subr.mxu0 0.0
    %414 = vmatpush1.msra.mxu0 0.0
    %415 = vmatprep.subr.mxu0 0.0
    %416 = vmatpush1.msra.mxu0 0.0
    %417 = vmatprep.subr.mxu0 0.0
    %418 = vmatpush1.msra.mxu0 0.0
    %419 = vmatprep.subr.mxu0 0.0
    %420 = vmatpush1.msra.mxu0 0.0
    %421 = vmatprep.subr.mxu0 0.0
    %422 = vmatpush1.msra.mxu0 0.0
    %423 = vmatprep.subr.mxu0 0.0
    %424 = vmatpush1.msra.mxu0 0.0
    %425 = vmatprep.subr.mxu0 0.0
    %426 = vmatpush1.msra.mxu0 0.0
    %427 = vmatprep.subr.mxu0 0.0
    %428 = vmatpush1.msra.mxu0 0.0
    %429 = vmatprep.subr.mxu0 0.0
    %430 = vmatpush1.msra.mxu0 0.0
    %431 = vmatprep.subr.mxu0 0.0
    %432 = vmatpush1.msra.mxu0 0.0
    %433 = vmatprep.subr.mxu0 0.0
    %434 = vmatpush1.msra.mxu0 0.0
    %435 = vmatprep.subr.mxu0 0.0
    %436 = vmatpush1.msra.mxu0 0.0
    %437 = vmatprep.subr.mxu0 0.0
    %438 = vmatpush1.msra.mxu0 0.0
    %439 = vmatprep.subr.mxu0 0.0
    %440 = vmatpush1.msra.mxu0 0.0
    %441 = vmatprep.mubr.f32.mxu0 0.0
    %442 = vmatmul.mubr.f32.gmra.mrb[0].mxu0 %v375
    %v443 = vpop.f32.mrb[0].mxu0
    %v444 = vadd.f32 %v260, %v443
    %v445 = vpop.f32.mrb[0].mxu0
    %446 = vdwg.mxu0
    %v447 = vsub.f32 0.0, %v444
    %v448 = vmul.f32 %v447, 1.442695
    %v449 = vpow.pop %v448
    %v450 = vadd.f32 %v449, 1.0
    %v451 = vrcp.pop %v450
    %v452 = vmul.f32 1.0, %v451
    %v453 = vtanh.pop %v444
    %v454 = vmul.f32 %v452, 0.0
    %456 = vrot.lane.b32.xlu0 %v453, 64
    %v457 = vpop.permute.xlu0 %456
    %v459 = vmul.f32 %v452, %v457
    %461 = vrot.lane.b32.xlu0 %v459, 32
    %v462 = vpop.permute.xlu0 %461
    %v464 = vadd.f32 %v454, %v462
    %v465 = vtanh.pop %v464
    %467 = vrot.lane.b32.xlu0 %v465, 64
    %v468 = vpop.permute.xlu0 %467
    %v470 = vmul.f32 %v452, %v468
    %472 = vrot.lane.b32.xlu0 %v470, 32
    %v473 = vpop.permute.xlu0 %472
    %v475 = vsel %vm269, %v473, 0.0
    %v477 = vsel %vm373, %v475, 0
    %479 = vmatprep.subr.mxu0 0.0
    %480 = vmatpush1.msra.mxu0 %v247
    %481 = vmatprep.subr.mxu0 0.0
    %482 = vmatpush1.msra.mxu0 %v248
    %483 = vmatprep.subr.mxu0 0.0
    %484 = vmatpush1.msra.mxu0 %v249
    %485 = vmatprep.subr.mxu0 0.0
    %486 = vmatpush1.msra.mxu0 %v250
    %487 = vmatprep.subr.mxu0 0.0
    %488 = vmatpush1.msra.mxu0 %v251
    %489 = vmatprep.subr.mxu0 0.0
    %490 = vmatpush1.msra.mxu0 %v252
    %491 = vmatprep.subr.mxu0 0.0
    %492 = vmatpush1.msra.mxu0 %v253
    %493 = vmatprep.subr.mxu0 0.0
    %494 = vmatpush1.msra.mxu0 %v254
    %495 = vmatprep.subr.mxu0 0.0
    %496 = vmatpush1.msra.mxu0 0.0
    %497 = vmatprep.subr.mxu0 0.0
    %498 = vmatpush1.msra.mxu0 0.0
    %499 = vmatprep.subr.mxu0 0.0
    %500 = vmatpush1.msra.mxu0 0.0
    %501 = vmatprep.subr.mxu0 0.0
    %502 = vmatpush1.msra.mxu0 0.0
    %503 = vmatprep.subr.mxu0 0.0
    %504 = vmatpush1.msra.mxu0 0.0
    %505 = vmatprep.subr.mxu0 0.0
    %506 = vmatpush1.msra.mxu0 0.0
    %507 = vmatprep.subr.mxu0 0.0
    %508 = vmatpush1.msra.mxu0 0.0
    %509 = vmatprep.subr.mxu0 0.0
    %510 = vmatpush1.msra.mxu0 0.0
    %511 = vmatprep.subr.mxu0 0.0
    %512 = vmatpush1.msra.mxu0 0.0
    %513 = vmatprep.subr.mxu0 0.0
    %514 = vmatpush1.msra.mxu0 0.0
    %515 = vmatprep.subr.mxu0 0.0
    %516 = vmatpush1.msra.mxu0 0.0
    %517 = vmatprep.subr.mxu0 0.0
    %518 = vmatpush1.msra.mxu0 0.0
    %519 = vmatprep.subr.mxu0 0.0
    %520 = vmatpush1.msra.mxu0 0.0
    %521 = vmatprep.subr.mxu0 0.0
    %522 = vmatpush1.msra.mxu0 0.0
    %523 = vmatprep.subr.mxu0 0.0
    %524 = vmatpush1.msra.mxu0 0.0
    %525 = vmatprep.subr.mxu0 0.0
    %526 = vmatpush1.msra.mxu0 0.0
    %527 = vmatprep.subr.mxu0 0.0
    %528 = vmatpush1.msra.mxu0 0.0
    %529 = vmatprep.subr.mxu0 0.0
    %530 = vmatpush1.msra.mxu0 0.0
    %531 = vmatprep.subr.mxu0 0.0
    %532 = vmatpush1.msra.mxu0 0.0
    %533 = vmatprep.subr.mxu0 0.0
    %534 = vmatpush1.msra.mxu0 0.0
    %535 = vmatprep.subr.mxu0 0.0
    %536 = vmatpush1.msra.mxu0 0.0
    %537 = vmatprep.subr.mxu0 0.0
    %538 = vmatpush1.msra.mxu0 0.0
    %539 = vmatprep.subr.mxu0 0.0
    %540 = vmatpush1.msra.mxu0 0.0
    %541 = vmatprep.subr.mxu0 0.0
    %542 = vmatpush1.msra.mxu0 0.0
    %543 = vmatprep.mubr.f32.mxu0 0.0
    %544 = vmatmul.mubr.f32.gmra.mrb[0].mxu0 %v477
    %v545 = vpop.f32.mrb[0].mxu0
    %v546 = vadd.f32 %v267, %v545
    %v547 = vpop.f32.mrb[0].mxu0
    %548 = vdwg.mxu0
    %v549 = vsub.f32 0.0, %v546
    %v550 = vmul.f32 %v549, 1.442695
    %v551 = vpow.pop %v550
    %v552 = vadd.f32 %v551, 1.0
    %v553 = vrcp.pop %v552
    %v554 = vmul.f32 1.0, %v553
    %v555 = vtanh.pop %v546
    %v556 = vmul.f32 %v554, 0.0
    %558 = vrot.lane.b32.xlu0 %v555, 64
    %v559 = vpop.permute.xlu0 %558
    %v561 = vmul.f32 %v554, %v559
    %563 = vrot.lane.b32.xlu0 %v561, 32
    %v564 = vpop.permute.xlu0 %563
    %v566 = vadd.f32 %v556, %v564
    %v567 = vtanh.pop %v566
    %569 = vrot.lane.b32.xlu0 %v567, 64
    %v570 = vpop.permute.xlu0 %569
    %v572 = vmul.f32 %v554, %v570
    %v573 = vsel %vm269, %v370, 0
    %575 = vmatprep.subr.mxu0 0.0
    %576 = vmatpush1.msra.mxu0 %v235
    %577 = vmatprep.subr.mxu0 0.0
    %578 = vmatpush1.msra.mxu0 %v236
    %579 = vmatprep.subr.mxu0 0.0
    %580 = vmatpush1.msra.mxu0 %v237
    %581 = vmatprep.subr.mxu0 0.0
    %582 = vmatpush1.msra.mxu0 %v238
    %583 = vmatprep.subr.mxu0 0.0
    %584 = vmatpush1.msra.mxu0 0.0
    %585 = vmatprep.subr.mxu0 0.0
    %586 = vmatpush1.msra.mxu0 0.0
    %587 = vmatprep.subr.mxu0 0.0
    %588 = vmatpush1.msra.mxu0 0.0
    %589 = vmatprep.subr.mxu0 0.0
    %590 = vmatpush1.msra.mxu0 0.0
    %591 = vmatprep.subr.mxu0 0.0
    %592 = vmatpush1.msra.mxu0 0.0
    %593 = vmatprep.subr.mxu0 0.0
    %594 = vmatpush1.msra.mxu0 0.0
    %595 = vmatprep.subr.mxu0 0.0
    %596 = vmatpush1.msra.mxu0 0.0
    %597 = vmatprep.subr.mxu0 0.0
    %598 = vmatpush1.msra.mxu0 0.0
    %599 = vmatprep.subr.mxu0 0.0
    %600 = vmatpush1.msra.mxu0 0.0
    %601 = vmatprep.subr.mxu0 0.0
    %602 = vmatpush1.msra.mxu0 0.0
    %603 = vmatprep.subr.mxu0 0.0
    %604 = vmatpush1.msra.mxu0 0.0
    %605 = vmatprep.subr.mxu0 0.0
    %606 = vmatpush1.msra.mxu0 0.0
    %607 = vmatprep.subr.mxu0 0.0
    %608 = vmatpush1.msra.mxu0 0.0
    %609 = vmatprep.subr.mxu0 0.0
    %610 = vmatpush1.msra.mxu0 0.0
    %611 = vmatprep.subr.mxu0 0.0
    %612 = vmatpush1.msra.mxu0 0.0
    %613 = vmatprep.subr.mxu0 0.0
    %614 = vmatpush1.msra.mxu0 0.0
    %615 = vmatprep.subr.mxu0 0.0
    %616 = vmatpush1.msra.mxu0 0.0
    %617 = vmatprep.subr.mxu0 0.0
    %618 = vmatpush1.msra.mxu0 0.0
    %619 = vmatprep.subr.mxu0 0.0
    %620 = vmatpush1.msra.mxu0 0.0
    %621 = vmatprep.subr.mxu0 0.0
    %622 = vmatpush1.msra.mxu0 0.0
    %623 = vmatprep.subr.mxu0 0.0
    %624 = vmatpush1.msra.mxu0 0.0
    %625 = vmatprep.subr.mxu0 0.0
    %626 = vmatpush1.msra.mxu0 0.0
    %627 = vmatprep.subr.mxu0 0.0
    %628 = vmatpush1.msra.mxu0 0.0
    %629 = vmatprep.subr.mxu0 0.0
    %630 = vmatpush1.msra.mxu0 0.0
    %631 = vmatprep.subr.mxu0 0.0
    %632 = vmatpush1.msra.mxu0 0.0
    %633 = vmatprep.subr.mxu0 0.0
    %634 = vmatpush1.msra.mxu0 0.0
    %635 = vmatprep.subr.mxu0 0.0
    %636 = vmatpush1.msra.mxu0 0.0
    %637 = vmatprep.subr.mxu0 0.0
    %638 = vmatpush1.msra.mxu0 0.0
    %639 = vmatprep.mubr.f32.mxu0 0.0
    %640 = vmatmul.mubr.f32.gmra.mrb[0].mxu0 %v573
    %v641 = vpop.f32.mrb[0].mxu0
    %v642 = vadd.f32 0.0, %v641
    %v643 = vpop.f32.mrb[0].mxu0
    %644 = vdwg.mxu0
    %v645 = vadd.f32 %v202, %v642
    %v646 = vsub.f32 0.0, %v645
    %v647 = vmul.f32 %v646, 1.442695
    %v648 = vpow.pop %v647
    %v649 = vadd.f32 %v648, 1.0
    %v650 = vrcp.pop %v649
    %v651 = vmul.f32 1.0, %v650
    %v652 = vtanh.pop %v645
    %v653 = vmul.f32 %v651, %v361
    %655 = vrot.lane.b32.xlu0 %v652, 64
    %v656 = vpop.permute.xlu0 %655
    %v658 = vmul.f32 %v651, %v656
    %660 = vrot.lane.b32.xlu0 %v658, 32
    %v661 = vpop.permute.xlu0 %660
    %v663 = vadd.f32 %v653, %v661
    %v664 = vtanh.pop %v663
    %666 = vrot.lane.b32.xlu0 %v664, 64
    %v667 = vpop.permute.xlu0 %666
    %v669 = vmul.f32 %v651, %v667
    %671 = vrot.lane.b32.xlu0 %v669, 32
    %v672 = vpop.permute.xlu0 %671
    %674 = vrot.lane.b32.xlu0 %v470, 64
    %v675 = vpop.permute.xlu0 %674
    %v677 = vsel %vm269, %v672, %v675
    %v679 = vsel %vm373, %v677, 0
    %681 = vmatprep.subr.mxu0 0.0
    %682 = vmatpush1.msra.mxu0 %v239
    %683 = vmatprep.subr.mxu0 0.0
    %684 = vmatpush1.msra.mxu0 %v240
    %685 = vmatprep.subr.mxu0 0.0
    %686 = vmatpush1.msra.mxu0 %v241
    %687 = vmatprep.subr.mxu0 0.0
    %688 = vmatpush1.msra.mxu0 %v242
    %689 = vmatprep.subr.mxu0 0.0
    %690 = vmatpush1.msra.mxu0 %v243
    %691 = vmatprep.subr.mxu0 0.0
    %692 = vmatpush1.msra.mxu0 %v244
    %693 = vmatprep.subr.mxu0 0.0
    %694 = vmatpush1.msra.mxu0 %v245
    %695 = vmatprep.subr.mxu0 0.0
    %696 = vmatpush1.msra.mxu0 %v246
    %697 = vmatprep.subr.mxu0 0.0
    %698 = vmatpush1.msra.mxu0 0.0
    %699 = vmatprep.subr.mxu0 0.0
    %700 = vmatpush1.msra.mxu0 0.0
    %701 = vmatprep.subr.mxu0 0.0
    %702 = vmatpush1.msra.mxu0 0.0
    %703 = vmatprep.subr.mxu0 0.0
    %704 = vmatpush1.msra.mxu0 0.0
    %705 = vmatprep.subr.mxu0 0.0
    %706 = vmatpush1.msra.mxu0 0.0
    %707 = vmatprep.subr.mxu0 0.0
    %708 = vmatpush1.msra.mxu0 0.0
    %709 = vmatprep.subr.mxu0 0.0
    %710 = vmatpush1.msra.mxu0 0.0
    %711 = vmatprep.subr.mxu0 0.0
    %712 = vmatpush1.msra.mxu0 0.0
    %713 = vmatprep.subr.mxu0 0.0
    %714 = vmatpush1.msra.mxu0 0.0
    %715 = vmatprep.subr.mxu0 0.0
    %716 = vmatpush1.msra.mxu0 0.0
    %717 = vmatprep.subr.mxu0 0.0
    %718 = vmatpush1.msra.mxu0 0.0
    %719 = vmatprep.subr.mxu0 0.0
    %720 = vmatpush1.msra.mxu0 0.0
    %721 = vmatprep.subr.mxu0 0.0
    %722 = vmatpush1.msra.mxu0 0.0
    %723 = vmatprep.subr.mxu0 0.0
    %724 = vmatpush1.msra.mxu0 0.0
    %725 = vmatprep.subr.mxu0 0.0
    %726 = vmatpush1.msra.mxu0 0.0
    %727 = vmatprep.subr.mxu0 0.0
    %728 = vmatpush1.msra.mxu0 0.0
    %729 = vmatprep.subr.mxu0 0.0
    %730 = vmatpush1.msra.mxu0 0.0
    %731 = vmatprep.subr.mxu0 0.0
    %732 = vmatpush1.msra.mxu0 0.0
    %733 = vmatprep.subr.mxu0 0.0
    %734 = vmatpush1.msra.mxu0 0.0
    %735 = vmatprep.subr.mxu0 0.0
    %736 = vmatpush1.msra.mxu0 0.0
    %737 = vmatprep.subr.mxu0 0.0
    %738 = vmatpush1.msra.mxu0 0.0
    %739 = vmatprep.subr.mxu0 0.0
    %740 = vmatpush1.msra.mxu0 0.0
    %741 = vmatprep.subr.mxu0 0.0
    %742 = vmatpush1.msra.mxu0 0.0
    %743 = vmatprep.subr.mxu0 0.0
    %744 = vmatpush1.msra.mxu0 0.0
    %745 = vmatprep.mubr.f32.mxu0 0.0
    %746 = vmatmul.mubr.f32.gmra.mrb[0].mxu0 %v679
    %v747 = vpop.f32.mrb[0].mxu0
    %v748 = vadd.f32 %v260, %v747
    %v749 = vpop.f32.mrb[0].mxu0
    %750 = vdwg.mxu0
    %v751 = vsub.f32 0.0, %v748
    %v752 = vmul.f32 %v751, 1.442695
    %v753 = vpow.pop %v752
    %v754 = vadd.f32 %v753, 1.0
    %v755 = vrcp.pop %v754
    %v756 = vmul.f32 1.0, %v755
    %v757 = vtanh.pop %v748
    %v758 = vmul.f32 %v756, %v464
    %760 = vrot.lane.b32.xlu0 %v757, 64
    %v761 = vpop.permute.xlu0 %760
    %v763 = vmul.f32 %v756, %v761
    %765 = vrot.lane.b32.xlu0 %v763, 32
    %v766 = vpop.permute.xlu0 %765
    %v768 = vadd.f32 %v758, %v766
    %v769 = vtanh.pop %v768
    %771 = vrot.lane.b32.xlu0 %v769, 64
    %v772 = vpop.permute.xlu0 %771
    %v774 = vmul.f32 %v756, %v772
    %776 = vrot.lane.b32.xlu0 %v774, 32
    %v777 = vpop.permute.xlu0 %776
    %780 = vrot.lane.b32.xlu0 %v572, 64
    %v781 = vpop.permute.xlu0 %780
    %v783 = vsel %vm269, %v777, %v781
    %v785 = vsel %vm373, %v783, 0
    %787 = vmatprep.subr.mxu0 0.0
    %788 = vmatpush1.msra.mxu0 %v247
    %789 = vmatprep.subr.mxu0 0.0
    %790 = vmatpush1.msra.mxu0 %v248
    %791 = vmatprep.subr.mxu0 0.0
    %792 = vmatpush1.msra.mxu0 %v249
    %793 = vmatprep.subr.mxu0 0.0
    %794 = vmatpush1.msra.mxu0 %v250
    %795 = vmatprep.subr.mxu0 0.0
    %796 = vmatpush1.msra.mxu0 %v251
    %797 = vmatprep.subr.mxu0 0.0
    %798 = vmatpush1.msra.mxu0 %v252
    %799 = vmatprep.subr.mxu0 0.0
    %800 = vmatpush1.msra.mxu0 %v253
    %801 = vmatprep.subr.mxu0 0.0
    %802 = vmatpush1.msra.mxu0 %v254
    %803 = vmatprep.subr.mxu0 0.0
    %804 = vmatpush1.msra.mxu0 0.0
    %805 = vmatprep.subr.mxu0 0.0
    %806 = vmatpush1.msra.mxu0 0.0
    %807 = vmatprep.subr.mxu0 0.0
    %808 = vmatpush1.msra.mxu0 0.0
    %809 = vmatprep.subr.mxu0 0.0
    %810 = vmatpush1.msra.mxu0 0.0
    %811 = vmatprep.subr.mxu0 0.0
    %812 = vmatpush1.msra.mxu0 0.0
    %813 = vmatprep.subr.mxu0 0.0
    %814 = vmatpush1.msra.mxu0 0.0
    %815 = vmatprep.subr.mxu0 0.0
    %816 = vmatpush1.msra.mxu0 0.0
    %817 = vmatprep.subr.mxu0 0.0
    %818 = vmatpush1.msra.mxu0 0.0
    %819 = vmatprep.subr.mxu0 0.0
    %820 = vmatpush1.msra.mxu0 0.0
    %821 = vmatprep.subr.mxu0 0.0
    %822 = vmatpush1.msra.mxu0 0.0
    %823 = vmatprep.subr.mxu0 0.0
    %824 = vmatpush1.msra.mxu0 0.0
    %825 = vmatprep.subr.mxu0 0.0
    %826 = vmatpush1.msra.mxu0 0.0
    %827 = vmatprep.subr.mxu0 0.0
    %828 = vmatpush1.msra.mxu0 0.0
    %829 = vmatprep.subr.mxu0 0.0
    %830 = vmatpush1.msra.mxu0 0.0
    %831 = vmatprep.subr.mxu0 0.0
    %832 = vmatpush1.msra.mxu0 0.0
    %833 = vmatprep.subr.mxu0 0.0
    %834 = vmatpush1.msra.mxu0 0.0
    %835 = vmatprep.subr.mxu0 0.0
    %836 = vmatpush1.msra.mxu0 0.0
    %837 = vmatprep.subr.mxu0 0.0
    %838 = vmatpush1.msra.mxu0 0.0
    %839 = vmatprep.subr.mxu0 0.0
    %840 = vmatpush1.msra.mxu0 0.0
    %841 = vmatprep.subr.mxu0 0.0
    %842 = vmatpush1.msra.mxu0 0.0
    %843 = vmatprep.subr.mxu0 0.0
    %844 = vmatpush1.msra.mxu0 0.0
    %845 = vmatprep.subr.mxu0 0.0
    %846 = vmatpush1.msra.mxu0 0.0
    %847 = vmatprep.subr.mxu0 0.0
    %848 = vmatpush1.msra.mxu0 0.0
    %849 = vmatprep.subr.mxu0 0.0
    %850 = vmatpush1.msra.mxu0 0.0
    %851 = vmatprep.mubr.f32.mxu0 0.0
    %852 = vmatmul.mubr.f32.gmra.mrb[0].mxu0 %v785
    %v853 = vpop.f32.mrb[0].mxu0
    %v854 = vadd.f32 %v267, %v853
    %v855 = vpop.f32.mrb[0].mxu0
    %856 = vdwg.mxu0
    %v857 = vsub.f32 0.0, %v854
    %v858 = vmul.f32 %v857, 1.442695
    %v859 = vpow.pop %v858
    %v860 = vadd.f32 %v859, 1.0
    %v861 = vrcp.pop %v860
    %v862 = vmul.f32 1.0, %v861
    %v863 = vtanh.pop %v854
    %v864 = vmul.f32 %v862, %v566
    %866 = vrot.lane.b32.xlu0 %v863, 64
    %v867 = vpop.permute.xlu0 %866
    %v869 = vmul.f32 %v862, %v867
    %871 = vrot.lane.b32.xlu0 %v869, 32
    %v872 = vpop.permute.xlu0 %871
    %v874 = vadd.f32 %v864, %v872
    %v875 = vtanh.pop %v874
    %877 = vrot.lane.b32.xlu0 %v875, 64
    %v878 = vpop.permute.xlu0 %877
    %v880 = vmul.f32 %v862, %v878
    %v881 = vsel %vm269, %v672, 0
    %883 = vmatprep.subr.mxu0 0.0
    %884 = vmatpush1.msra.mxu0 %v235
    %885 = vmatprep.subr.mxu0 0.0
    %886 = vmatpush1.msra.mxu0 %v236
    %887 = vmatprep.subr.mxu0 0.0
    %888 = vmatpush1.msra.mxu0 %v237
    %889 = vmatprep.subr.mxu0 0.0
    %890 = vmatpush1.msra.mxu0 %v238
    %891 = vmatprep.subr.mxu0 0.0
    %892 = vmatpush1.msra.mxu0 0.0
    %893 = vmatprep.subr.mxu0 0.0
    %894 = vmatpush1.msra.mxu0 0.0
    %895 = vmatprep.subr.mxu0 0.0
    %896 = vmatpush1.msra.mxu0 0.0
    %897 = vmatprep.subr.mxu0 0.0
    %898 = vmatpush1.msra.mxu0 0.0
    %899 = vmatprep.subr.mxu0 0.0
    %900 = vmatpush1.msra.mxu0 0.0
    %901 = vmatprep.subr.mxu0 0.0
    %902 = vmatpush1.msra.mxu0 0.0
    %903 = vmatprep.subr.mxu0 0.0
    %904 = vmatpush1.msra.mxu0 0.0
    %905 = vmatprep.subr.mxu0 0.0
    %906 = vmatpush1.msra.mxu0 0.0
    %907 = vmatprep.subr.mxu0 0.0
    %908 = vmatpush1.msra.mxu0 0.0
    %909 = vmatprep.subr.mxu0 0.0
    %910 = vmatpush1.msra.mxu0 0.0
    %911 = vmatprep.subr.mxu0 0.0
    %912 = vmatpush1.msra.mxu0 0.0
    %913 = vmatprep.subr.mxu0 0.0
    %914 = vmatpush1.msra.mxu0 0.0
    %915 = vmatprep.subr.mxu0 0.0
    %916 = vmatpush1.msra.mxu0 0.0
    %917 = vmatprep.subr.mxu0 0.0
    %918 = vmatpush1.msra.mxu0 0.0
    %919 = vmatprep.subr.mxu0 0.0
    %920 = vmatpush1.msra.mxu0 0.0
    %921 = vmatprep.subr.mxu0 0.0
    %922 = vmatpush1.msra.mxu0 0.0
    %923 = vmatprep.subr.mxu0 0.0
    %924 = vmatpush1.msra.mxu0 0.0
    %925 = vmatprep.subr.mxu0 0.0
    %926 = vmatpush1.msra.mxu0 0.0
    %927 = vmatprep.subr.mxu0 0.0
    %928 = vmatpush1.msra.mxu0 0.0
    %929 = vmatprep.subr.mxu0 0.0
    %930 = vmatpush1.msra.mxu0 0.0
    %931 = vmatprep.subr.mxu0 0.0
    %932 = vmatpush1.msra.mxu0 0.0
    %933 = vmatprep.subr.mxu0 0.0
    %934 = vmatpush1.msra.mxu0 0.0
    %935 = vmatprep.subr.mxu0 0.0
    %936 = vmatpush1.msra.mxu0 0.0
    %937 = vmatprep.subr.mxu0 0.0
    %938 = vmatpush1.msra.mxu0 0.0
    %939 = vmatprep.subr.mxu0 0.0
    %940 = vmatpush1.msra.mxu0 0.0
    %941 = vmatprep.subr.mxu0 0.0
    %942 = vmatpush1.msra.mxu0 0.0
    %943 = vmatprep.subr.mxu0 0.0
    %944 = vmatpush1.msra.mxu0 0.0
    %945 = vmatprep.subr.mxu0 0.0
    %946 = vmatpush1.msra.mxu0 0.0
    %947 = vmatprep.mubr.f32.mxu0 0.0
    %948 = vmatmul.mubr.f32.gmra.mrb[0].mxu0 %v881
    %v949 = vpop.f32.mrb[0].mxu0
    %v950 = vadd.f32 0.0, %v949
    %v951 = vpop.f32.mrb[0].mxu0
    %952 = vdwg.mxu0
    %v953 = vadd.f32 %v207, %v950
    %v954 = vsub.f32 0.0, %v953
    %v955 = vmul.f32 %v954, 1.442695
    %v956 = vpow.pop %v955
    %v957 = vadd.f32 %v956, 1.0
    %v958 = vrcp.pop %v957
    %v959 = vmul.f32 1.0, %v958
    %v960 = vtanh.pop %v953
    %v961 = vmul.f32 %v959, %v663
    %963 = vrot.lane.b32.xlu0 %v960, 64
    %v964 = vpop.permute.xlu0 %963
    %v966 = vmul.f32 %v959, %v964
    %968 = vrot.lane.b32.xlu0 %v966, 32
    %v969 = vpop.permute.xlu0 %968
    %v971 = vadd.f32 %v961, %v969
    %v972 = vtanh.pop %v971
    %974 = vrot.lane.b32.xlu0 %v972, 64
    %v975 = vpop.permute.xlu0 %974
    %v977 = vmul.f32 %v959, %v975
    %979 = vrot.lane.b32.xlu0 %v977, 32
    %v980 = vpop.permute.xlu0 %979
    %982 = vrot.lane.b32.xlu0 %v774, 64
    %v983 = vpop.permute.xlu0 %982
    %v985 = vsel %vm269, %v980, %v983
    %v987 = vsel %vm373, %v985, 0
    %989 = vmatprep.subr.mxu0 0.0
    %990 = vmatpush1.msra.mxu0 %v239
    %991 = vmatprep.subr.mxu0 0.0
    %992 = vmatpush1.msra.mxu0 %v240
    %993 = vmatprep.subr.mxu0 0.0
    %994 = vmatpush1.msra.mxu0 %v241
    %995 = vmatprep.subr.mxu0 0.0
    %996 = vmatpush1.msra.mxu0 %v242
    %997 = vmatprep.subr.mxu0 0.0
    %998 = vmatpush1.msra.mxu0 %v243
    %999 = vmatprep.subr.mxu0 0.0
    %1000 = vmatpush1.msra.mxu0 %v244
    %1001 = vmatprep.subr.mxu0 0.0
    %1002 = vmatpush1.msra.mxu0 %v245
    %1003 = vmatprep.subr.mxu0 0.0
    %1004 = vmatpush1.msra.mxu0 %v246
    %1005 = vmatprep.subr.mxu0 0.0
    %1006 = vmatpush1.msra.mxu0 0.0
    %1007 = vmatprep.subr.mxu0 0.0
    %1008 = vmatpush1.msra.mxu0 0.0
    %1009 = vmatprep.subr.mxu0 0.0
    %1010 = vmatpush1.msra.mxu0 0.0
    %1011 = vmatprep.subr.mxu0 0.0
    %1012 = vmatpush1.msra.mxu0 0.0
    %1013 = vmatprep.subr.mxu0 0.0
    %1014 = vmatpush1.msra.mxu0 0.0
    %1015 = vmatprep.subr.mxu0 0.0
    %1016 = vmatpush1.msra.mxu0 0.0
    %1017 = vmatprep.subr.mxu0 0.0
    %1018 = vmatpush1.msra.mxu0 0.0
    %1019 = vmatprep.subr.mxu0 0.0
    %1020 = vmatpush1.msra.mxu0 0.0
    %1021 = vmatprep.subr.mxu0 0.0
    %1022 = vmatpush1.msra.mxu0 0.0
    %1023 = vmatprep.subr.mxu0 0.0
    %1024 = vmatpush1.msra.mxu0 0.0
    %1025 = vmatprep.subr.mxu0 0.0
    %1026 = vmatpush1.msra.mxu0 0.0
    %1027 = vmatprep.subr.mxu0 0.0
    %1028 = vmatpush1.msra.mxu0 0.0
    %1029 = vmatprep.subr.mxu0 0.0
    %1030 = vmatpush1.msra.mxu0 0.0
    %1031 = vmatprep.subr.mxu0 0.0
    %1032 = vmatpush1.msra.mxu0 0.0
    %1033 = vmatprep.subr.mxu0 0.0
    %1034 = vmatpush1.msra.mxu0 0.0
    %1035 = vmatprep.subr.mxu0 0.0
    %1036 = vmatpush1.msra.mxu0 0.0
    %1037 = vmatprep.subr.mxu0 0.0
    %1038 = vmatpush1.msra.mxu0 0.0
    %1039 = vmatprep.subr.mxu0 0.0
    %1040 = vmatpush1.msra.mxu0 0.0
    %1041 = vmatprep.subr.mxu0 0.0
    %1042 = vmatpush1.msra.mxu0 0.0
    %1043 = vmatprep.subr.mxu0 0.0
    %1044 = vmatpush1.msra.mxu0 0.0
    %1045 = vmatprep.subr.mxu0 0.0
    %1046 = vmatpush1.msra.mxu0 0.0
    %1047 = vmatprep.subr.mxu0 0.0
    %1048 = vmatpush1.msra.mxu0 0.0
    %1049 = vmatprep.subr.mxu0 0.0
    %1050 = vmatpush1.msra.mxu0 0.0
    %1051 = vmatprep.subr.mxu0 0.0
    %1052 = vmatpush1.msra.mxu0 0.0
    %1053 = vmatprep.mubr.f32.mxu0 0.0
    %1054 = vmatmul.mubr.f32.gmra.mrb[0].mxu0 %v987
    %v1055 = vpop.f32.mrb[0].mxu0
    %v1056 = vadd.f32 %v260, %v1055
    %v1057 = vpop.f32.mrb[0].mxu0
    %1058 = vdwg.mxu0
    %v1059 = vsub.f32 0.0, %v1056
    %v1060 = vmul.f32 %v1059, 1.442695
    %v1061 = vpow.pop %v1060
    %v1062 = vadd.f32 %v1061, 1.0
    %v1063 = vrcp.pop %v1062
    %v1064 = vmul.f32 1.0, %v1063
    %v1065 = vtanh.pop %v1056
    %v1066 = vmul.f32 %v1064, %v768
    %1068 = vrot.lane.b32.xlu0 %v1065, 64
    %v1069 = vpop.permute.xlu0 %1068
    %v1071 = vmul.f32 %v1064, %v1069
    %1073 = vrot.lane.b32.xlu0 %v1071, 32
    %v1074 = vpop.permute.xlu0 %1073
    %v1076 = vadd.f32 %v1066, %v1074
    %v1077 = vtanh.pop %v1076
    %1079 = vrot.lane.b32.xlu0 %v1077, 64
    %v1080 = vpop.permute.xlu0 %1079
    %v1082 = vmul.f32 %v1064, %v1080
    %1084 = vrot.lane.b32.xlu0 %v1082, 32
    %v1085 = vpop.permute.xlu0 %1084
    %1088 = vrot.lane.b32.xlu0 %v880, 64
    %v1089 = vpop.permute.xlu0 %1088
    %v1091 = vsel %vm269, %v1085, %v1089
    %v1093 = vsel %vm373, %v1091, 0
    %1095 = vmatprep.subr.mxu0 0.0
    %1096 = vmatpush1.msra.mxu0 %v247
    %1097 = vmatprep.subr.mxu0 0.0
    %1098 = vmatpush1.msra.mxu0 %v248
    %1099 = vmatprep.subr.mxu0 0.0
    %1100 = vmatpush1.msra.mxu0 %v249
    %1101 = vmatprep.subr.mxu0 0.0
    %1102 = vmatpush1.msra.mxu0 %v250
    %1103 = vmatprep.subr.mxu0 0.0
    %1104 = vmatpush1.msra.mxu0 %v251
    %1105 = vmatprep.subr.mxu0 0.0
    %1106 = vmatpush1.msra.mxu0 %v252
    %1107 = vmatprep.subr.mxu0 0.0
    %1108 = vmatpush1.msra.mxu0 %v253
    %1109 = vmatprep.subr.mxu0 0.0
    %1110 = vmatpush1.msra.mxu0 %v254
    %1111 = vmatprep.subr.mxu0 0.0
    %1112 = vmatpush1.msra.mxu0 0.0
    %1113 = vmatprep.subr.mxu0 0.0
    %1114 = vmatpush1.msra.mxu0 0.0
    %1115 = vmatprep.subr.mxu0 0.0
    %1116 = vmatpush1.msra.mxu0 0.0
    %1117 = vmatprep.subr.mxu0 0.0
    %1118 = vmatpush1.msra.mxu0 0.0
    %1119 = vmatprep.subr.mxu0 0.0
    %1120 = vmatpush1.msra.mxu0 0.0
    %1121 = vmatprep.subr.mxu0 0.0
    %1122 = vmatpush1.msra.mxu0 0.0
    %1123 = vmatprep.subr.mxu0 0.0
    %1124 = vmatpush1.msra.mxu0 0.0
    %1125 = vmatprep.subr.mxu0 0.0
    %1126 = vmatpush1.msra.mxu0 0.0
    %1127 = vmatprep.subr.mxu0 0.0
    %1128 = vmatpush1.msra.mxu0 0.0
    %1129 = vmatprep.subr.mxu0 0.0
    %1130 = vmatpush1.msra.mxu0 0.0
    %1131 = vmatprep.subr.mxu0 0.0
    %1132 = vmatpush1.msra.mxu0 0.0
    %1133 = vmatprep.subr.mxu0 0.0
    %1134 = vmatpush1.msra.mxu0 0.0
    %1135 = vmatprep.subr.mxu0 0.0
    %1136 = vmatpush1.msra.mxu0 0.0
    %1137 = vmatprep.subr.mxu0 0.0
    %1138 = vmatpush1.msra.mxu0 0.0
    %1139 = vmatprep.subr.mxu0 0.0
    %1140 = vmatpush1.msra.mxu0 0.0
    %1141 = vmatprep.subr.mxu0 0.0
    %1142 = vmatpush1.msra.mxu0 0.0
    %1143 = vmatprep.subr.mxu0 0.0
    %1144 = vmatpush1.msra.mxu0 0.0
    %1145 = vmatprep.subr.mxu0 0.0
    %1146 = vmatpush1.msra.mxu0 0.0
    %1147 = vmatprep.subr.mxu0 0.0
    %1148 = vmatpush1.msra.mxu0 0.0
    %1149 = vmatprep.subr.mxu0 0.0
    %1150 = vmatpush1.msra.mxu0 0.0
    %1151 = vmatprep.subr.mxu0 0.0
    %1152 = vmatpush1.msra.mxu0 0.0
    %1153 = vmatprep.subr.mxu0 0.0
    %1154 = vmatpush1.msra.mxu0 0.0
    %1155 = vmatprep.subr.mxu0 0.0
    %1156 = vmatpush1.msra.mxu0 0.0
    %1157 = vmatprep.subr.mxu0 0.0
    %1158 = vmatpush1.msra.mxu0 0.0
    %1159 = vmatprep.mubr.f32.mxu0 0.0
    %1160 = vmatmul.mubr.f32.gmra.mrb[0].mxu0 %v1093
    %v1161 = vpop.f32.mrb[0].mxu0
    %v1162 = vadd.f32 %v267, %v1161
    %v1163 = vpop.f32.mrb[0].mxu0
    %1164 = vdwg.mxu0
    %v1165 = vsub.f32 0.0, %v1162
    %v1166 = vmul.f32 %v1165, 1.442695
    %v1167 = vpow.pop %v1166
    %v1168 = vadd.f32 %v1167, 1.0
    %v1169 = vrcp.pop %v1168
    %v1170 = vmul.f32 1.0, %v1169
    %v1171 = vtanh.pop %v1162
    %v1172 = vmul.f32 %v1170, %v874
    %1174 = vrot.lane.b32.xlu0 %v1171, 64
    %v1175 = vpop.permute.xlu0 %1174
    %v1177 = vmul.f32 %v1170, %v1175
    %1179 = vrot.lane.b32.xlu0 %v1177, 32
    %v1180 = vpop.permute.xlu0 %1179
    %v1182 = vadd.f32 %v1172, %v1180
    %v1183 = vtanh.pop %v1182
    %1185 = vrot.lane.b32.xlu0 %v1183, 64
    %v1186 = vpop.permute.xlu0 %1185
    %v1188 = vmul.f32 %v1170, %v1186
    %v1189 = vsel %vm269, %v980, 0
    %1191 = vmatprep.subr.mxu0 0.0
    %1192 = vmatpush1.msra.mxu0 %v235
    %1193 = vmatprep.subr.mxu0 0.0
    %1194 = vmatpush1.msra.mxu0 %v236
    %1195 = vmatprep.subr.mxu0 0.0
    %1196 = vmatpush1.msra.mxu0 %v237
    %1197 = vmatprep.subr.mxu0 0.0
    %1198 = vmatpush1.msra.mxu0 %v238
    %1199 = vmatprep.subr.mxu0 0.0
    %1200 = vmatpush1.msra.mxu0 0.0
    %1201 = vmatprep.subr.mxu0 0.0
    %1202 = vmatpush1.msra.mxu0 0.0
    %1203 = vmatprep.subr.mxu0 0.0
    %1204 = vmatpush1.msra.mxu0 0.0
    %1205 = vmatprep.subr.mxu0 0.0
    %1206 = vmatpush1.msra.mxu0 0.0
    %1207 = vmatprep.subr.mxu0 0.0
    %1208 = vmatpush1.msra.mxu0 0.0
    %1209 = vmatprep.subr.mxu0 0.0
    %1210 = vmatpush1.msra.mxu0 0.0
    %1211 = vmatprep.subr.mxu0 0.0
    %1212 = vmatpush1.msra.mxu0 0.0
    %1213 = vmatprep.subr.mxu0 0.0
    %1214 = vmatpush1.msra.mxu0 0.0
    %1215 = vmatprep.subr.mxu0 0.0
    %1216 = vmatpush1.msra.mxu0 0.0
    %1217 = vmatprep.subr.mxu0 0.0
    %1218 = vmatpush1.msra.mxu0 0.0
    %1219 = vmatprep.subr.mxu0 0.0
    %1220 = vmatpush1.msra.mxu0 0.0
    %1221 = vmatprep.subr.mxu0 0.0
    %1222 = vmatpush1.msra.mxu0 0.0
    %1223 = vmatprep.subr.mxu0 0.0
    %1224 = vmatpush1.msra.mxu0 0.0
    %1225 = vmatprep.subr.mxu0 0.0
    %1226 = vmatpush1.msra.mxu0 0.0
    %1227 = vmatprep.subr.mxu0 0.0
    %1228 = vmatpush1.msra.mxu0 0.0
    %1229 = vmatprep.subr.mxu0 0.0
    %1230 = vmatpush1.msra.mxu0 0.0
    %1231 = vmatprep.subr.mxu0 0.0
    %1232 = vmatpush1.msra.mxu0 0.0
    %1233 = vmatprep.subr.mxu0 0.0
    %1234 = vmatpush1.msra.mxu0 0.0
    %1235 = vmatprep.subr.mxu0 0.0
    %1236 = vmatpush1.msra.mxu0 0.0
    %1237 = vmatprep.subr.mxu0 0.0
    %1238 = vmatpush1.msra.mxu0 0.0
    %1239 = vmatprep.subr.mxu0 0.0
    %1240 = vmatpush1.msra.mxu0 0.0
    %1241 = vmatprep.subr.mxu0 0.0
    %1242 = vmatpush1.msra.mxu0 0.0
    %1243 = vmatprep.subr.mxu0 0.0
    %1244 = vmatpush1.msra.mxu0 0.0
    %1245 = vmatprep.subr.mxu0 0.0
    %1246 = vmatpush1.msra.mxu0 0.0
    %1247 = vmatprep.subr.mxu0 0.0
    %1248 = vmatpush1.msra.mxu0 0.0
    %1249 = vmatprep.subr.mxu0 0.0
    %1250 = vmatpush1.msra.mxu0 0.0
    %1251 = vmatprep.subr.mxu0 0.0
    %1252 = vmatpush1.msra.mxu0 0.0
    %1253 = vmatprep.subr.mxu0 0.0
    %1254 = vmatpush1.msra.mxu0 0.0
    %1255 = vmatprep.mubr.f32.mxu0 0.0
    %1256 = vmatmul.mubr.f32.gmra.mrb[0].mxu0 %v1189
    %v1257 = vpop.f32.mrb[0].mxu0
    %v1258 = vadd.f32 0.0, %v1257
    %v1259 = vpop.f32.mrb[0].mxu0
    %1260 = vdwg.mxu0
    %v1261 = vadd.f32 %v212, %v1258
    %v1262 = vsub.f32 0.0, %v1261
    %v1263 = vmul.f32 %v1262, 1.442695
    %v1264 = vpow.pop %v1263
    %v1265 = vadd.f32 %v1264, 1.0
    %v1266 = vrcp.pop %v1265
    %v1267 = vmul.f32 1.0, %v1266
    %v1268 = vtanh.pop %v1261
    %v1269 = vmul.f32 %v1267, %v971
    %1271 = vrot.lane.b32.xlu0 %v1268, 64
    %v1272 = vpop.permute.xlu0 %1271
    %v1274 = vmul.f32 %v1267, %v1272
    %1276 = vrot.lane.b32.xlu0 %v1274, 32
    %v1277 = vpop.permute.xlu0 %1276
    %v1279 = vadd.f32 %v1269, %v1277
    %v1280 = vtanh.pop %v1279
    %1282 = vrot.lane.b32.xlu0 %v1280, 64
    %v1283 = vpop.permute.xlu0 %1282
    %v1285 = vmul.f32 %v1267, %v1283
    %1287 = vrot.lane.b32.xlu0 %v1285, 32
    %v1288 = vpop.permute.xlu0 %1287
    %1290 = vrot.lane.b32.xlu0 %v1082, 64
    %v1291 = vpop.permute.xlu0 %1290
    %v1293 = vsel %vm269, %v1288, %v1291
    %v1295 = vsel %vm373, %v1293, 0
    %1297 = vmatprep.subr.mxu0 0.0
    %1298 = vmatpush1.msra.mxu0 %v239
    %1299 = vmatprep.subr.mxu0 0.0
    %1300 = vmatpush1.msra.mxu0 %v240
    %1301 = vmatprep.subr.mxu0 0.0
    %1302 = vmatpush1.msra.mxu0 %v241
    %1303 = vmatprep.subr.mxu0 0.0
    %1304 = vmatpush1.msra.mxu0 %v242
    %1305 = vmatprep.subr.mxu0 0.0
    %1306 = vmatpush1.msra.mxu0 %v243
    %1307 = vmatprep.subr.mxu0 0.0
    %1308 = vmatpush1.msra.mxu0 %v244
    %1309 = vmatprep.subr.mxu0 0.0
    %1310 = vmatpush1.msra.mxu0 %v245
    %1311 = vmatprep.subr.mxu0 0.0
    %1312 = vmatpush1.msra.mxu0 %v246
    %1313 = vmatprep.subr.mxu0 0.0
    %1314 = vmatpush1.msra.mxu0 0.0
    %1315 = vmatprep.subr.mxu0 0.0
    %1316 = vmatpush1.msra.mxu0 0.0
    %1317 = vmatprep.subr.mxu0 0.0
    %1318 = vmatpush1.msra.mxu0 0.0
    %1319 = vmatprep.subr.mxu0 0.0
    %1320 = vmatpush1.msra.mxu0 0.0
    %1321 = vmatprep.subr.mxu0 0.0
    %1322 = vmatpush1.msra.mxu0 0.0
    %1323 = vmatprep.subr.mxu0 0.0
    %1324 = vmatpush1.msra.mxu0 0.0
    %1325 = vmatprep.subr.mxu0 0.0
    %1326 = vmatpush1.msra.mxu0 0.0
    %1327 = vmatprep.subr.mxu0 0.0
    %1328 = vmatpush1.msra.mxu0 0.0
    %1329 = vmatprep.subr.mxu0 0.0
    %1330 = vmatpush1.msra.mxu0 0.0
    %1331 = vmatprep.subr.mxu0 0.0
    %1332 = vmatpush1.msra.mxu0 0.0
    %1333 = vmatprep.subr.mxu0 0.0
    %1334 = vmatpush1.msra.mxu0 0.0
    %1335 = vmatprep.subr.mxu0 0.0
    %1336 = vmatpush1.msra.mxu0 0.0
    %1337 = vmatprep.subr.mxu0 0.0
    %1338 = vmatpush1.msra.mxu0 0.0
    %1339 = vmatprep.subr.mxu0 0.0
    %1340 = vmatpush1.msra.mxu0 0.0
    %1341 = vmatprep.subr.mxu0 0.0
    %1342 = vmatpush1.msra.mxu0 0.0
    %1343 = vmatprep.subr.mxu0 0.0
    %1344 = vmatpush1.msra.mxu0 0.0
    %1345 = vmatprep.subr.mxu0 0.0
    %1346 = vmatpush1.msra.mxu0 0.0
    %1347 = vmatprep.subr.mxu0 0.0
    %1348 = vmatpush1.msra.mxu0 0.0
    %1349 = vmatprep.subr.mxu0 0.0
    %1350 = vmatpush1.msra.mxu0 0.0
    %1351 = vmatprep.subr.mxu0 0.0
    %1352 = vmatpush1.msra.mxu0 0.0
    %1353 = vmatprep.subr.mxu0 0.0
    %1354 = vmatpush1.msra.mxu0 0.0
    %1355 = vmatprep.subr.mxu0 0.0
    %1356 = vmatpush1.msra.mxu0 0.0
    %1357 = vmatprep.subr.mxu0 0.0
    %1358 = vmatpush1.msra.mxu0 0.0
    %1359 = vmatprep.subr.mxu0 0.0
    %1360 = vmatpush1.msra.mxu0 0.0
    %1361 = vmatprep.mubr.f32.mxu0 0.0
    %1362 = vmatmul.mubr.f32.gmra.mrb[0].mxu0 %v1295
    %v1363 = vpop.f32.mrb[0].mxu0
    %v1364 = vadd.f32 %v260, %v1363
    %v1365 = vpop.f32.mrb[0].mxu0
    %1366 = vdwg.mxu0
    %v1367 = vsub.f32 0.0, %v1364
    %v1368 = vmul.f32 %v1367, 1.442695
    %v1369 = vpow.pop %v1368
    %v1370 = vadd.f32 %v1369, 1.0
    %v1371 = vrcp.pop %v1370
    %v1372 = vmul.f32 1.0, %v1371
    %v1373 = vtanh.pop %v1364
    %v1374 = vmul.f32 %v1372, %v1076
    %1376 = vrot.lane.b32.xlu0 %v1373, 64
    %v1377 = vpop.permute.xlu0 %1376
    %v1379 = vmul.f32 %v1372, %v1377
    %1381 = vrot.lane.b32.xlu0 %v1379, 32
    %v1382 = vpop.permute.xlu0 %1381
    %v1384 = vadd.f32 %v1374, %v1382
    %v1385 = vtanh.pop %v1384
    %1387 = vrot.lane.b32.xlu0 %v1385, 64
    %v1388 = vpop.permute.xlu0 %1387
    %v1390 = vmul.f32 %v1372, %v1388
    %1392 = vrot.lane.b32.xlu0 %v1390, 32
    %v1393 = vpop.permute.xlu0 %1392
    %1396 = vrot.lane.b32.xlu0 %v1188, 64
    %v1397 = vpop.permute.xlu0 %1396
    %v1399 = vsel %vm269, %v1393, %v1397
    %v1401 = vsel %vm373, %v1399, 0
    %1403 = vmatprep.subr.mxu0 0.0
    %1404 = vmatpush1.msra.mxu0 %v247
    %1405 = vmatprep.subr.mxu0 0.0
    %1406 = vmatpush1.msra.mxu0 %v248
    %1407 = vmatprep.subr.mxu0 0.0
    %1408 = vmatpush1.msra.mxu0 %v249
    %1409 = vmatprep.subr.mxu0 0.0
    %1410 = vmatpush1.msra.mxu0 %v250
    %1411 = vmatprep.subr.mxu0 0.0
    %1412 = vmatpush1.msra.mxu0 %v251
    %1413 = vmatprep.subr.mxu0 0.0
    %1414 = vmatpush1.msra.mxu0 %v252
    %1415 = vmatprep.subr.mxu0 0.0
    %1416 = vmatpush1.msra.mxu0 %v253
    %1417 = vmatprep.subr.mxu0 0.0
    %1418 = vmatpush1.msra.mxu0 %v254
    %1419 = vmatprep.subr.mxu0 0.0
    %1420 = vmatpush1.msra.mxu0 0.0
    %1421 = vmatprep.subr.mxu0 0.0
    %1422 = vmatpush1.msra.mxu0 0.0
    %1423 = vmatprep.subr.mxu0 0.0
    %1424 = vmatpush1.msra.mxu0 0.0
    %1425 = vmatprep.subr.mxu0 0.0
    %1426 = vmatpush1.msra.mxu0 0.0
    %1427 = vmatprep.subr.mxu0 0.0
    %1428 = vmatpush1.msra.mxu0 0.0
    %1429 = vmatprep.subr.mxu0 0.0
    %1430 = vmatpush1.msra.mxu0 0.0
    %1431 = vmatprep.subr.mxu0 0.0
    %1432 = vmatpush1.msra.mxu0 0.0
    %1433 = vmatprep.subr.mxu0 0.0
    %1434 = vmatpush1.msra.mxu0 0.0
    %1435 = vmatprep.subr.mxu0 0.0
    %1436 = vmatpush1.msra.mxu0 0.0
    %1437 = vmatprep.subr.mxu0 0.0
    %1438 = vmatpush1.msra.mxu0 0.0
    %1439 = vmatprep.subr.mxu0 0.0
    %1440 = vmatpush1.msra.mxu0 0.0
    %1441 = vmatprep.subr.mxu0 0.0
    %1442 = vmatpush1.msra.mxu0 0.0
    %1443 = vmatprep.subr.mxu0 0.0
    %1444 = vmatpush1.msra.mxu0 0.0
    %1445 = vmatprep.subr.mxu0 0.0
    %1446 = vmatpush1.msra.mxu0 0.0
    %1447 = vmatprep.subr.mxu0 0.0
    %1448 = vmatpush1.msra.mxu0 0.0
    %1449 = vmatprep.subr.mxu0 0.0
    %1450 = vmatpush1.msra.mxu0 0.0
    %1451 = vmatprep.subr.mxu0 0.0
    %1452 = vmatpush1.msra.mxu0 0.0
    %1453 = vmatprep.subr.mxu0 0.0
    %1454 = vmatpush1.msra.mxu0 0.0
    %1455 = vmatprep.subr.mxu0 0.0
    %1456 = vmatpush1.msra.mxu0 0.0
    %1457 = vmatprep.subr.mxu0 0.0
    %1458 = vmatpush1.msra.mxu0 0.0
    %1459 = vmatprep.subr.mxu0 0.0
    %1460 = vmatpush1.msra.mxu0 0.0
    %1461 = vmatprep.subr.mxu0 0.0
    %1462 = vmatpush1.msra.mxu0 0.0
    %1463 = vmatprep.subr.mxu0 0.0
    %1464 = vmatpush1.msra.mxu0 0.0
    %1465 = vmatprep.subr.mxu0 0.0
    %1466 = vmatpush1.msra.mxu0 0.0
    %1467 = vmatprep.mubr.f32.mxu0 0.0
    %1468 = vmatmul.mubr.f32.gmra.mrb[0].mxu0 %v1401
    %v1469 = vpop.f32.mrb[0].mxu0
    %v1470 = vadd.f32 %v267, %v1469
    %v1471 = vpop.f32.mrb[0].mxu0
    %1472 = vdwg.mxu0
    %v1473 = vsub.f32 0.0, %v1470
    %v1474 = vmul.f32 %v1473, 1.442695
    %v1475 = vpow.pop %v1474
    %v1476 = vadd.f32 %v1475, 1.0
    %v1477 = vrcp.pop %v1476
    %v1478 = vmul.f32 1.0, %v1477
    %v1479 = vtanh.pop %v1470
    %v1480 = vmul.f32 %v1478, %v1182
    %1482 = vrot.lane.b32.xlu0 %v1479, 64
    %v1483 = vpop.permute.xlu0 %1482
    %v1485 = vmul.f32 %v1478, %v1483
    %1487 = vrot.lane.b32.xlu0 %v1485, 32
    %v1488 = vpop.permute.xlu0 %1487
    %v1490 = vadd.f32 %v1480, %v1488
    %v1491 = vtanh.pop %v1490
    %1493 = vrot.lane.b32.xlu0 %v1491, 64
    %v1494 = vpop.permute.xlu0 %1493
    %v1496 = vmul.f32 %v1478, %v1494
    %v1497 = vsel %vm269, %v1288, 0
    %1499 = vmatprep.subr.mxu0 0.0
    %1500 = vmatpush1.msra.mxu0 %v235
    %1501 = vmatprep.subr.mxu0 0.0
    %1502 = vmatpush1.msra.mxu0 %v236
    %1503 = vmatprep.subr.mxu0 0.0
    %1504 = vmatpush1.msra.mxu0 %v237
    %1505 = vmatprep.subr.mxu0 0.0
    %1506 = vmatpush1.msra.mxu0 %v238
    %1507 = vmatprep.subr.mxu0 0.0
    %1508 = vmatpush1.msra.mxu0 0.0
    %1509 = vmatprep.subr.mxu0 0.0
    %1510 = vmatpush1.msra.mxu0 0.0
    %1511 = vmatprep.subr.mxu0 0.0
    %1512 = vmatpush1.msra.mxu0 0.0
    %1513 = vmatprep.subr.mxu0 0.0
    %1514 = vmatpush1.msra.mxu0 0.0
    %1515 = vmatprep.subr.mxu0 0.0
    %1516 = vmatpush1.msra.mxu0 0.0
    %1517 = vmatprep.subr.mxu0 0.0
    %1518 = vmatpush1.msra.mxu0 0.0
    %1519 = vmatprep.subr.mxu0 0.0
    %1520 = vmatpush1.msra.mxu0 0.0
    %1521 = vmatprep.subr.mxu0 0.0
    %1522 = vmatpush1.msra.mxu0 0.0
    %1523 = vmatprep.subr.mxu0 0.0
    %1524 = vmatpush1.msra.mxu0 0.0
    %1525 = vmatprep.subr.mxu0 0.0
    %1526 = vmatpush1.msra.mxu0 0.0
    %1527 = vmatprep.subr.mxu0 0.0
    %1528 = vmatpush1.msra.mxu0 0.0
    %1529 = vmatprep.subr.mxu0 0.0
    %1530 = vmatpush1.msra.mxu0 0.0
    %1531 = vmatprep.subr.mxu0 0.0
    %1532 = vmatpush1.msra.mxu0 0.0
    %1533 = vmatprep.subr.mxu0 0.0
    %1534 = vmatpush1.msra.mxu0 0.0
    %1535 = vmatprep.subr.mxu0 0.0
    %1536 = vmatpush1.msra.mxu0 0.0
    %1537 = vmatprep.subr.mxu0 0.0
    %1538 = vmatpush1.msra.mxu0 0.0
    %1539 = vmatprep.subr.mxu0 0.0
    %1540 = vmatpush1.msra.mxu0 0.0
    %1541 = vmatprep.subr.mxu0 0.0
    %1542 = vmatpush1.msra.mxu0 0.0
    %1543 = vmatprep.subr.mxu0 0.0
    %1544 = vmatpush1.msra.mxu0 0.0
    %1545 = vmatprep.subr.mxu0 0.0
    %1546 = vmatpush1.msra.mxu0 0.0
    %1547 = vmatprep.subr.mxu0 0.0
    %1548 = vmatpush1.msra.mxu0 0.0
    %1549 = vmatprep.subr.mxu0 0.0
    %1550 = vmatpush1.msra.mxu0 0.0
    %1551 = vmatprep.subr.mxu0 0.0
    %1552 = vmatpush1.msra.mxu0 0.0
    %1553 = vmatprep.subr.mxu0 0.0
    %1554 = vmatpush1.msra.mxu0 0.0
    %1555 = vmatprep.subr.mxu0 0.0
    %1556 = vmatpush1.msra.mxu0 0.0
    %1557 = vmatprep.subr.mxu0 0.0
    %1558 = vmatpush1.msra.mxu0 0.0
    %1559 = vmatprep.subr.mxu0 0.0
    %1560 = vmatpush1.msra.mxu0 0.0
    %1561 = vmatprep.subr.mxu0 0.0
    %1562 = vmatpush1.msra.mxu0 0.0
    %1563 = vmatprep.mubr.f32.mxu0 0.0
    %1564 = vmatmul.mubr.f32.gmra.mrb[0].mxu0 %v1497
    %v1565 = vpop.f32.mrb[0].mxu0
    %v1566 = vadd.f32 0.0, %v1565
    %v1567 = vpop.f32.mrb[0].mxu0
    %1568 = vdwg.mxu0
    %v1569 = vadd.f32 %v217, %v1566
    %v1570 = vsub.f32 0.0, %v1569
    %v1571 = vmul.f32 %v1570, 1.442695
    %v1572 = vpow.pop %v1571
    %v1573 = vadd.f32 %v1572, 1.0
    %v1574 = vrcp.pop %v1573
    %v1575 = vmul.f32 1.0, %v1574
    %v1576 = vtanh.pop %v1569
    %v1577 = vmul.f32 %v1575, %v1279
    %1579 = vrot.lane.b32.xlu0 %v1576, 64
    %v1580 = vpop.permute.xlu0 %1579
    %v1582 = vmul.f32 %v1575, %v1580
    %1584 = vrot.lane.b32.xlu0 %v1582, 32
    %v1585 = vpop.permute.xlu0 %1584
    %v1587 = vadd.f32 %v1577, %v1585
    %v1588 = vtanh.pop %v1587
    %1590 = vrot.lane.b32.xlu0 %v1588, 64
    %v1591 = vpop.permute.xlu0 %1590
    %v1593 = vmul.f32 %v1575, %v1591
    %1595 = vrot.lane.b32.xlu0 %v1593, 32
    %v1596 = vpop.permute.xlu0 %1595
    %1598 = vrot.lane.b32.xlu0 %v1390, 64
    %v1599 = vpop.permute.xlu0 %1598
    %v1601 = vsel %vm269, %v1596, %v1599
    %v1603 = vsel %vm373, %v1601, 0
    %1605 = vmatprep.subr.mxu0 0.0
    %1606 = vmatpush1.msra.mxu0 %v239
    %1607 = vmatprep.subr.mxu0 0.0
    %1608 = vmatpush1.msra.mxu0 %v240
    %1609 = vmatprep.subr.mxu0 0.0
    %1610 = vmatpush1.msra.mxu0 %v241
    %1611 = vmatprep.subr.mxu0 0.0
    %1612 = vmatpush1.msra.mxu0 %v242
    %1613 = vmatprep.subr.mxu0 0.0
    %1614 = vmatpush1.msra.mxu0 %v243
    %1615 = vmatprep.subr.mxu0 0.0
    %1616 = vmatpush1.msra.mxu0 %v244
    %1617 = vmatprep.subr.mxu0 0.0
    %1618 = vmatpush1.msra.mxu0 %v245
    %1619 = vmatprep.subr.mxu0 0.0
    %1620 = vmatpush1.msra.mxu0 %v246
    %1621 = vmatprep.subr.mxu0 0.0
    %1622 = vmatpush1.msra.mxu0 0.0
    %1623 = vmatprep.subr.mxu0 0.0
    %1624 = vmatpush1.msra.mxu0 0.0
    %1625 = vmatprep.subr.mxu0 0.0
    %1626 = vmatpush1.msra.mxu0 0.0
    %1627 = vmatprep.subr.mxu0 0.0
    %1628 = vmatpush1.msra.mxu0 0.0
    %1629 = vmatprep.subr.mxu0 0.0
    %1630 = vmatpush1.msra.mxu0 0.0
    %1631 = vmatprep.subr.mxu0 0.0
    %1632 = vmatpush1.msra.mxu0 0.0
    %1633 = vmatprep.subr.mxu0 0.0
    %1634 = vmatpush1.msra.mxu0 0.0
    %1635 = vmatprep.subr.mxu0 0.0
    %1636 = vmatpush1.msra.mxu0 0.0
    %1637 = vmatprep.subr.mxu0 0.0
    %1638 = vmatpush1.msra.mxu0 0.0
    %1639 = vmatprep.subr.mxu0 0.0
    %1640 = vmatpush1.msra.mxu0 0.0
    %1641 = vmatprep.subr.mxu0 0.0
    %1642 = vmatpush1.msra.mxu0 0.0
    %1643 = vmatprep.subr.mxu0 0.0
    %1644 = vmatpush1.msra.mxu0 0.0
    %1645 = vmatprep.subr.mxu0 0.0
    %1646 = vmatpush1.msra.mxu0 0.0
    %1647 = vmatprep.subr.mxu0 0.0
    %1648 = vmatpush1.msra.mxu0 0.0
    %1649 = vmatprep.subr.mxu0 0.0
    %1650 = vmatpush1.msra.mxu0 0.0
    %1651 = vmatprep.subr.mxu0 0.0
    %1652 = vmatpush1.msra.mxu0 0.0
    %1653 = vmatprep.subr.mxu0 0.0
    %1654 = vmatpush1.msra.mxu0 0.0
    %1655 = vmatprep.subr.mxu0 0.0
    %1656 = vmatpush1.msra.mxu0 0.0
    %1657 = vmatprep.subr.mxu0 0.0
    %1658 = vmatpush1.msra.mxu0 0.0
    %1659 = vmatprep.subr.mxu0 0.0
    %1660 = vmatpush1.msra.mxu0 0.0
    %1661 = vmatprep.subr.mxu0 0.0
    %1662 = vmatpush1.msra.mxu0 0.0
    %1663 = vmatprep.subr.mxu0 0.0
    %1664 = vmatpush1.msra.mxu0 0.0
    %1665 = vmatprep.subr.mxu0 0.0
    %1666 = vmatpush1.msra.mxu0 0.0
    %1667 = vmatprep.subr.mxu0 0.0
    %1668 = vmatpush1.msra.mxu0 0.0
    %1669 = vmatprep.mubr.f32.mxu0 0.0
    %1670 = vmatmul.mubr.f32.gmra.mrb[0].mxu0 %v1603
    %v1671 = vpop.f32.mrb[0].mxu0
    %v1672 = vadd.f32 %v260, %v1671
    %v1673 = vpop.f32.mrb[0].mxu0
    %1674 = vdwg.mxu0
    %v1675 = vsub.f32 0.0, %v1672
    %v1676 = vmul.f32 %v1675, 1.442695
    %v1677 = vpow.pop %v1676
    %v1678 = vadd.f32 %v1677, 1.0
    %v1679 = vrcp.pop %v1678
    %v1680 = vmul.f32 1.0, %v1679
    %v1681 = vtanh.pop %v1672
    %v1682 = vmul.f32 %v1680, %v1384
    %1684 = vrot.lane.b32.xlu0 %v1681, 64
    %v1685 = vpop.permute.xlu0 %1684
    %v1687 = vmul.f32 %v1680, %v1685
    %1689 = vrot.lane.b32.xlu0 %v1687, 32
    %v1690 = vpop.permute.xlu0 %1689
    %v1692 = vadd.f32 %v1682, %v1690
    %v1693 = vtanh.pop %v1692
    %1695 = vrot.lane.b32.xlu0 %v1693, 64
    %v1696 = vpop.permute.xlu0 %1695
    %v1698 = vmul.f32 %v1680, %v1696
    %1700 = vrot.lane.b32.xlu0 %v1698, 32
    %v1701 = vpop.permute.xlu0 %1700
    %1704 = vrot.lane.b32.xlu0 %v1496, 64
    %v1705 = vpop.permute.xlu0 %1704
    %v1707 = vsel %vm269, %v1701, %v1705
    %v1709 = vsel %vm373, %v1707, 0
    %1711 = vmatprep.subr.mxu0 0.0
    %1712 = vmatpush1.msra.mxu0 %v247
    %1713 = vmatprep.subr.mxu0 0.0
    %1714 = vmatpush1.msra.mxu0 %v248
    %1715 = vmatprep.subr.mxu0 0.0
    %1716 = vmatpush1.msra.mxu0 %v249
    %1717 = vmatprep.subr.mxu0 0.0
    %1718 = vmatpush1.msra.mxu0 %v250
    %1719 = vmatprep.subr.mxu0 0.0
    %1720 = vmatpush1.msra.mxu0 %v251
    %1721 = vmatprep.subr.mxu0 0.0
    %1722 = vmatpush1.msra.mxu0 %v252
    %1723 = vmatprep.subr.mxu0 0.0
    %1724 = vmatpush1.msra.mxu0 %v253
    %1725 = vmatprep.subr.mxu0 0.0
    %1726 = vmatpush1.msra.mxu0 %v254
    %1727 = vmatprep.subr.mxu0 0.0
    %1728 = vmatpush1.msra.mxu0 0.0
    %1729 = vmatprep.subr.mxu0 0.0
    %1730 = vmatpush1.msra.mxu0 0.0
    %1731 = vmatprep.subr.mxu0 0.0
    %1732 = vmatpush1.msra.mxu0 0.0
    %1733 = vmatprep.subr.mxu0 0.0
    %1734 = vmatpush1.msra.mxu0 0.0
    %1735 = vmatprep.subr.mxu0 0.0
    %1736 = vmatpush1.msra.mxu0 0.0
    %1737 = vmatprep.subr.mxu0 0.0
    %1738 = vmatpush1.msra.mxu0 0.0
    %1739 = vmatprep.subr.mxu0 0.0
    %1740 = vmatpush1.msra.mxu0 0.0
    %1741 = vmatprep.subr.mxu0 0.0
    %1742 = vmatpush1.msra.mxu0 0.0
    %1743 = vmatprep.subr.mxu0 0.0
    %1744 = vmatpush1.msra.mxu0 0.0
    %1745 = vmatprep.subr.mxu0 0.0
    %1746 = vmatpush1.msra.mxu0 0.0
    %1747 = vmatprep.subr.mxu0 0.0
    %1748 = vmatpush1.msra.mxu0 0.0
    %1749 = vmatprep.subr.mxu0 0.0
    %1750 = vmatpush1.msra.mxu0 0.0
    %1751 = vmatprep.subr.mxu0 0.0
    %1752 = vmatpush1.msra.mxu0 0.0
    %1753 = vmatprep.subr.mxu0 0.0
    %1754 = vmatpush1.msra.mxu0 0.0
    %1755 = vmatprep.subr.mxu0 0.0
    %1756 = vmatpush1.msra.mxu0 0.0
    %1757 = vmatprep.subr.mxu0 0.0
    %1758 = vmatpush1.msra.mxu0 0.0
    %1759 = vmatprep.subr.mxu0 0.0
    %1760 = vmatpush1.msra.mxu0 0.0
    %1761 = vmatprep.subr.mxu0 0.0
    %1762 = vmatpush1.msra.mxu0 0.0
    %1763 = vmatprep.subr.mxu0 0.0
    %1764 = vmatpush1.msra.mxu0 0.0
    %1765 = vmatprep.subr.mxu0 0.0
    %1766 = vmatpush1.msra.mxu0 0.0
    %1767 = vmatprep.subr.mxu0 0.0
    %1768 = vmatpush1.msra.mxu0 0.0
    %1769 = vmatprep.subr.mxu0 0.0
    %1770 = vmatpush1.msra.mxu0 0.0
    %1771 = vmatprep.subr.mxu0 0.0
    %1772 = vmatpush1.msra.mxu0 0.0
    %1773 = vmatprep.subr.mxu0 0.0
    %1774 = vmatpush1.msra.mxu0 0.0
    %1775 = vmatprep.mubr.f32.mxu0 0.0
    %1776 = vmatmul.mubr.f32.gmra.mrb[0].mxu0 %v1709
    %v1777 = vpop.f32.mrb[0].mxu0
    %v1778 = vadd.f32 %v267, %v1777
    %v1779 = vpop.f32.mrb[0].mxu0
    %1780 = vdwg.mxu0
    %v1781 = vsub.f32 0.0, %v1778
    %v1782 = vmul.f32 %v1781, 1.442695
    %v1783 = vpow.pop %v1782
    %v1784 = vadd.f32 %v1783, 1.0
    %v1785 = vrcp.pop %v1784
    %v1786 = vmul.f32 1.0, %v1785
    %v1787 = vtanh.pop %v1778
    %v1788 = vmul.f32 %v1786, %v1490
    %1790 = vrot.lane.b32.xlu0 %v1787, 64
    %v1791 = vpop.permute.xlu0 %1790
    %v1793 = vmul.f32 %v1786, %v1791
    %1795 = vrot.lane.b32.xlu0 %v1793, 32
    %v1796 = vpop.permute.xlu0 %1795
    %v1798 = vadd.f32 %v1788, %v1796
    %v1799 = vtanh.pop %v1798
    %1801 = vrot.lane.b32.xlu0 %v1799, 64
    %v1802 = vpop.permute.xlu0 %1801
    %v1804 = vmul.f32 %v1786, %v1802
    %v1805 = vsel %vm269, %v1596, 0
    %1807 = vmatprep.subr.mxu0 0.0
    %1808 = vmatpush1.msra.mxu0 %v235
    %1809 = vmatprep.subr.mxu0 0.0
    %1810 = vmatpush1.msra.mxu0 %v236
    %1811 = vmatprep.subr.mxu0 0.0
    %1812 = vmatpush1.msra.mxu0 %v237
    %1813 = vmatprep.subr.mxu0 0.0
    %1814 = vmatpush1.msra.mxu0 %v238
    %1815 = vmatprep.subr.mxu0 0.0
    %1816 = vmatpush1.msra.mxu0 0.0
    %1817 = vmatprep.subr.mxu0 0.0
    %1818 = vmatpush1.msra.mxu0 0.0
    %1819 = vmatprep.subr.mxu0 0.0
    %1820 = vmatpush1.msra.mxu0 0.0
    %1821 = vmatprep.subr.mxu0 0.0
    %1822 = vmatpush1.msra.mxu0 0.0
    %1823 = vmatprep.subr.mxu0 0.0
    %1824 = vmatpush1.msra.mxu0 0.0
    %1825 = vmatprep.subr.mxu0 0.0
    %1826 = vmatpush1.msra.mxu0 0.0
    %1827 = vmatprep.subr.mxu0 0.0
    %1828 = vmatpush1.msra.mxu0 0.0
    %1829 = vmatprep.subr.mxu0 0.0
    %1830 = vmatpush1.msra.mxu0 0.0
    %1831 = vmatprep.subr.mxu0 0.0
    %1832 = vmatpush1.msra.mxu0 0.0
    %1833 = vmatprep.subr.mxu0 0.0
    %1834 = vmatpush1.msra.mxu0 0.0
    %1835 = vmatprep.subr.mxu0 0.0
    %1836 = vmatpush1.msra.mxu0 0.0
    %1837 = vmatprep.subr.mxu0 0.0
    %1838 = vmatpush1.msra.mxu0 0.0
    %1839 = vmatprep.subr.mxu0 0.0
    %1840 = vmatpush1.msra.mxu0 0.0
    %1841 = vmatprep.subr.mxu0 0.0
    %1842 = vmatpush1.msra.mxu0 0.0
    %1843 = vmatprep.subr.mxu0 0.0
    %1844 = vmatpush1.msra.mxu0 0.0
    %1845 = vmatprep.subr.mxu0 0.0
    %1846 = vmatpush1.msra.mxu0 0.0
    %1847 = vmatprep.subr.mxu0 0.0
    %1848 = vmatpush1.msra.mxu0 0.0
    %1849 = vmatprep.subr.mxu0 0.0
    %1850 = vmatpush1.msra.mxu0 0.0
    %1851 = vmatprep.subr.mxu0 0.0
    %1852 = vmatpush1.msra.mxu0 0.0
    %1853 = vmatprep.subr.mxu0 0.0
    %1854 = vmatpush1.msra.mxu0 0.0
    %1855 = vmatprep.subr.mxu0 0.0
    %1856 = vmatpush1.msra.mxu0 0.0
    %1857 = vmatprep.subr.mxu0 0.0
    %1858 = vmatpush1.msra.mxu0 0.0
    %1859 = vmatprep.subr.mxu0 0.0
    %1860 = vmatpush1.msra.mxu0 0.0
    %1861 = vmatprep.subr.mxu0 0.0
    %1862 = vmatpush1.msra.mxu0 0.0
    %1863 = vmatprep.subr.mxu0 0.0
    %1864 = vmatpush1.msra.mxu0 0.0
    %1865 = vmatprep.subr.mxu0 0.0
    %1866 = vmatpush1.msra.mxu0 0.0
    %1867 = vmatprep.subr.mxu0 0.0
    %1868 = vmatpush1.msra.mxu0 0.0
    %1869 = vmatprep.subr.mxu0 0.0
    %1870 = vmatpush1.msra.mxu0 0.0
    %1871 = vmatprep.mubr.f32.mxu0 0.0
    %1872 = vmatmul.mubr.f32.gmra.mrb[0].mxu0 %v1805
    %v1873 = vpop.f32.mrb[0].mxu0
    %v1874 = vadd.f32 0.0, %v1873
    %v1875 = vpop.f32.mrb[0].mxu0
    %1876 = vdwg.mxu0
    %v1877 = vadd.f32 %v222, %v1874
    %v1878 = vsub.f32 0.0, %v1877
    %v1879 = vmul.f32 %v1878, 1.442695
    %v1880 = vpow.pop %v1879
    %v1881 = vadd.f32 %v1880, 1.0
    %v1882 = vrcp.pop %v1881
    %v1883 = vmul.f32 1.0, %v1882
    %v1884 = vtanh.pop %v1877
    %v1885 = vmul.f32 %v1883, %v1587
    %1887 = vrot.lane.b32.xlu0 %v1884, 64
    %v1888 = vpop.permute.xlu0 %1887
    %v1890 = vmul.f32 %v1883, %v1888
    %1892 = vrot.lane.b32.xlu0 %v1890, 32
    %v1893 = vpop.permute.xlu0 %1892
    %v1895 = vadd.f32 %v1885, %v1893
    %v1896 = vtanh.pop %v1895
    %1898 = vrot.lane.b32.xlu0 %v1896, 64
    %v1899 = vpop.permute.xlu0 %1898
    %v1901 = vmul.f32 %v1883, %v1899
    %1903 = vrot.lane.b32.xlu0 %v1901, 32
    %v1904 = vpop.permute.xlu0 %1903
    %1906 = vrot.lane.b32.xlu0 %v1698, 64
    %v1907 = vpop.permute.xlu0 %1906
    %v1909 = vsel %vm269, %v1904, %v1907
    %v1911 = vsel %vm373, %v1909, 0
    %1913 = vmatprep.subr.mxu0 0.0
    %1914 = vmatpush1.msra.mxu0 %v239
    %1915 = vmatprep.subr.mxu0 0.0
    %1916 = vmatpush1.msra.mxu0 %v240
    %1917 = vmatprep.subr.mxu0 0.0
    %1918 = vmatpush1.msra.mxu0 %v241
    %1919 = vmatprep.subr.mxu0 0.0
    %1920 = vmatpush1.msra.mxu0 %v242
    %1921 = vmatprep.subr.mxu0 0.0
    %1922 = vmatpush1.msra.mxu0 %v243
    %1923 = vmatprep.subr.mxu0 0.0
    %1924 = vmatpush1.msra.mxu0 %v244
    %1925 = vmatprep.subr.mxu0 0.0
    %1926 = vmatpush1.msra.mxu0 %v245
    %1927 = vmatprep.subr.mxu0 0.0
    %1928 = vmatpush1.msra.mxu0 %v246
    %1929 = vmatprep.subr.mxu0 0.0
    %1930 = vmatpush1.msra.mxu0 0.0
    %1931 = vmatprep.subr.mxu0 0.0
    %1932 = vmatpush1.msra.mxu0 0.0
    %1933 = vmatprep.subr.mxu0 0.0
    %1934 = vmatpush1.msra.mxu0 0.0
    %1935 = vmatprep.subr.mxu0 0.0
    %1936 = vmatpush1.msra.mxu0 0.0
    %1937 = vmatprep.subr.mxu0 0.0
    %1938 = vmatpush1.msra.mxu0 0.0
    %1939 = vmatprep.subr.mxu0 0.0
    %1940 = vmatpush1.msra.mxu0 0.0
    %1941 = vmatprep.subr.mxu0 0.0
    %1942 = vmatpush1.msra.mxu0 0.0
    %1943 = vmatprep.subr.mxu0 0.0
    %1944 = vmatpush1.msra.mxu0 0.0
    %1945 = vmatprep.subr.mxu0 0.0
    %1946 = vmatpush1.msra.mxu0 0.0
    %1947 = vmatprep.subr.mxu0 0.0
    %1948 = vmatpush1.msra.mxu0 0.0
    %1949 = vmatprep.subr.mxu0 0.0
    %1950 = vmatpush1.msra.mxu0 0.0
    %1951 = vmatprep.subr.mxu0 0.0
    %1952 = vmatpush1.msra.mxu0 0.0
    %1953 = vmatprep.subr.mxu0 0.0
    %1954 = vmatpush1.msra.mxu0 0.0
    %1955 = vmatprep.subr.mxu0 0.0
    %1956 = vmatpush1.msra.mxu0 0.0
    %1957 = vmatprep.subr.mxu0 0.0
    %1958 = vmatpush1.msra.mxu0 0.0
    %1959 = vmatprep.subr.mxu0 0.0
    %1960 = vmatpush1.msra.mxu0 0.0
    %1961 = vmatprep.subr.mxu0 0.0
    %1962 = vmatpush1.msra.mxu0 0.0
    %1963 = vmatprep.subr.mxu0 0.0
    %1964 = vmatpush1.msra.mxu0 0.0
    %1965 = vmatprep.subr.mxu0 0.0
    %1966 = vmatpush1.msra.mxu0 0.0
    %1967 = vmatprep.subr.mxu0 0.0
    %1968 = vmatpush1.msra.mxu0 0.0
    %1969 = vmatprep.subr.mxu0 0.0
    %1970 = vmatpush1.msra.mxu0 0.0
    %1971 = vmatprep.subr.mxu0 0.0
    %1972 = vmatpush1.msra.mxu0 0.0
    %1973 = vmatprep.subr.mxu0 0.0
    %1974 = vmatpush1.msra.mxu0 0.0
    %1975 = vmatprep.subr.mxu0 0.0
    %1976 = vmatpush1.msra.mxu0 0.0
    %1977 = vmatprep.mubr.f32.mxu0 0.0
    %1978 = vmatmul.mubr.f32.gmra.mrb[0].mxu0 %v1911
    %v1979 = vpop.f32.mrb[0].mxu0
    %v1980 = vadd.f32 %v260, %v1979
    %v1981 = vpop.f32.mrb[0].mxu0
    %1982 = vdwg.mxu0
    %v1983 = vsub.f32 0.0, %v1980
    %v1984 = vmul.f32 %v1983, 1.442695
    %v1985 = vpow.pop %v1984
    %v1986 = vadd.f32 %v1985, 1.0
    %v1987 = vrcp.pop %v1986
    %v1988 = vmul.f32 1.0, %v1987
    %v1989 = vtanh.pop %v1980
    %v1990 = vmul.f32 %v1988, %v1692
    %1992 = vrot.lane.b32.xlu0 %v1989, 64
    %v1993 = vpop.permute.xlu0 %1992
    %v1995 = vmul.f32 %v1988, %v1993
    %1997 = vrot.lane.b32.xlu0 %v1995, 32
    %v1998 = vpop.permute.xlu0 %1997
    %v2000 = vadd.f32 %v1990, %v1998
    %v2001 = vtanh.pop %v2000
    %2003 = vrot.lane.b32.xlu0 %v2001, 64
    %v2004 = vpop.permute.xlu0 %2003
    %v2006 = vmul.f32 %v1988, %v2004
    %2008 = vrot.lane.b32.xlu0 %v2006, 32
    %v2009 = vpop.permute.xlu0 %2008
    %2012 = vrot.lane.b32.xlu0 %v1804, 64
    %v2013 = vpop.permute.xlu0 %2012
    %v2015 = vsel %vm269, %v2009, %v2013
    %v2017 = vsel %vm373, %v2015, 0
    %2019 = vmatprep.subr.mxu0 0.0
    %2020 = vmatpush1.msra.mxu0 %v247
    %2021 = vmatprep.subr.mxu0 0.0
    %2022 = vmatpush1.msra.mxu0 %v248
    %2023 = vmatprep.subr.mxu0 0.0
    %2024 = vmatpush1.msra.mxu0 %v249
    %2025 = vmatprep.subr.mxu0 0.0
    %2026 = vmatpush1.msra.mxu0 %v250
    %2027 = vmatprep.subr.mxu0 0.0
    %2028 = vmatpush1.msra.mxu0 %v251
    %2029 = vmatprep.subr.mxu0 0.0
    %2030 = vmatpush1.msra.mxu0 %v252
    %2031 = vmatprep.subr.mxu0 0.0
    %2032 = vmatpush1.msra.mxu0 %v253
    %2033 = vmatprep.subr.mxu0 0.0
    %2034 = vmatpush1.msra.mxu0 %v254
    %2035 = vmatprep.subr.mxu0 0.0
    %2036 = vmatpush1.msra.mxu0 0.0
    %2037 = vmatprep.subr.mxu0 0.0
    %2038 = vmatpush1.msra.mxu0 0.0
    %2039 = vmatprep.subr.mxu0 0.0
    %2040 = vmatpush1.msra.mxu0 0.0
    %2041 = vmatprep.subr.mxu0 0.0
    %2042 = vmatpush1.msra.mxu0 0.0
    %2043 = vmatprep.subr.mxu0 0.0
    %2044 = vmatpush1.msra.mxu0 0.0
    %2045 = vmatprep.subr.mxu0 0.0
    %2046 = vmatpush1.msra.mxu0 0.0
    %2047 = vmatprep.subr.mxu0 0.0
    %2048 = vmatpush1.msra.mxu0 0.0
    %2049 = vmatprep.subr.mxu0 0.0
    %2050 = vmatpush1.msra.mxu0 0.0
    %2051 = vmatprep.subr.mxu0 0.0
    %2052 = vmatpush1.msra.mxu0 0.0
    %2053 = vmatprep.subr.mxu0 0.0
    %2054 = vmatpush1.msra.mxu0 0.0
    %2055 = vmatprep.subr.mxu0 0.0
    %2056 = vmatpush1.msra.mxu0 0.0
    %2057 = vmatprep.subr.mxu0 0.0
    %2058 = vmatpush1.msra.mxu0 0.0
    %2059 = vmatprep.subr.mxu0 0.0
    %2060 = vmatpush1.msra.mxu0 0.0
    %2061 = vmatprep.subr.mxu0 0.0
    %2062 = vmatpush1.msra.mxu0 0.0
    %2063 = vmatprep.subr.mxu0 0.0
    %2064 = vmatpush1.msra.mxu0 0.0
    %2065 = vmatprep.subr.mxu0 0.0
    %2066 = vmatpush1.msra.mxu0 0.0
    %2067 = vmatprep.subr.mxu0 0.0
    %2068 = vmatpush1.msra.mxu0 0.0
    %2069 = vmatprep.subr.mxu0 0.0
    %2070 = vmatpush1.msra.mxu0 0.0
    %2071 = vmatprep.subr.mxu0 0.0
    %2072 = vmatpush1.msra.mxu0 0.0
    %2073 = vmatprep.subr.mxu0 0.0
    %2074 = vmatpush1.msra.mxu0 0.0
    %2075 = vmatprep.subr.mxu0 0.0
    %2076 = vmatpush1.msra.mxu0 0.0
    %2077 = vmatprep.subr.mxu0 0.0
    %2078 = vmatpush1.msra.mxu0 0.0
    %2079 = vmatprep.subr.mxu0 0.0
    %2080 = vmatpush1.msra.mxu0 0.0
    %2081 = vmatprep.subr.mxu0 0.0
    %2082 = vmatpush1.msra.mxu0 0.0
    %2083 = vmatprep.mubr.f32.mxu0 0.0
    %2084 = vmatmul.mubr.f32.gmra.mrb[0].mxu0 %v2017
    %v2085 = vpop.f32.mrb[0].mxu0
    %v2086 = vadd.f32 %v267, %v2085
    %v2087 = vpop.f32.mrb[0].mxu0
    %2088 = vdwg.mxu0
    %v2089 = vsub.f32 0.0, %v2086
    %v2090 = vmul.f32 %v2089, 1.442695
    %v2091 = vpow.pop %v2090
    %v2092 = vadd.f32 %v2091, 1.0
    %v2093 = vrcp.pop %v2092
    %v2094 = vmul.f32 1.0, %v2093
    %v2095 = vtanh.pop %v2086
    %v2096 = vmul.f32 %v2094, %v1798
    %2098 = vrot.lane.b32.xlu0 %v2095, 64
    %v2099 = vpop.permute.xlu0 %2098
    %v2101 = vmul.f32 %v2094, %v2099
    %2103 = vrot.lane.b32.xlu0 %v2101, 32
    %v2104 = vpop.permute.xlu0 %2103
    %v2106 = vadd.f32 %v2096, %v2104
    %v2107 = vtanh.pop %v2106
    %2109 = vrot.lane.b32.xlu0 %v2107, 64
    %v2110 = vpop.permute.xlu0 %2109
    %v2112 = vmul.f32 %v2094, %v2110
    %v2113 = vsel %vm269, %v1904, 0
    %2115 = vmatprep.subr.mxu0 0.0
    %2116 = vmatpush1.msra.mxu0 %v235
    %2117 = vmatprep.subr.mxu0 0.0
    %2118 = vmatpush1.msra.mxu0 %v236
    %2119 = vmatprep.subr.mxu0 0.0
    %2120 = vmatpush1.msra.mxu0 %v237
    %2121 = vmatprep.subr.mxu0 0.0
    %2122 = vmatpush1.msra.mxu0 %v238
    %2123 = vmatprep.subr.mxu0 0.0
    %2124 = vmatpush1.msra.mxu0 0.0
    %2125 = vmatprep.subr.mxu0 0.0
    %2126 = vmatpush1.msra.mxu0 0.0
    %2127 = vmatprep.subr.mxu0 0.0
    %2128 = vmatpush1.msra.mxu0 0.0
    %2129 = vmatprep.subr.mxu0 0.0
    %2130 = vmatpush1.msra.mxu0 0.0
    %2131 = vmatprep.subr.mxu0 0.0
    %2132 = vmatpush1.msra.mxu0 0.0
    %2133 = vmatprep.subr.mxu0 0.0
    %2134 = vmatpush1.msra.mxu0 0.0
    %2135 = vmatprep.subr.mxu0 0.0
    %2136 = vmatpush1.msra.mxu0 0.0
    %2137 = vmatprep.subr.mxu0 0.0
    %2138 = vmatpush1.msra.mxu0 0.0
    %2139 = vmatprep.subr.mxu0 0.0
    %2140 = vmatpush1.msra.mxu0 0.0
    %2141 = vmatprep.subr.mxu0 0.0
    %2142 = vmatpush1.msra.mxu0 0.0
    %2143 = vmatprep.subr.mxu0 0.0
    %2144 = vmatpush1.msra.mxu0 0.0
    %2145 = vmatprep.subr.mxu0 0.0
    %2146 = vmatpush1.msra.mxu0 0.0
    %2147 = vmatprep.subr.mxu0 0.0
    %2148 = vmatpush1.msra.mxu0 0.0
    %2149 = vmatprep.subr.mxu0 0.0
    %2150 = vmatpush1.msra.mxu0 0.0
    %2151 = vmatprep.subr.mxu0 0.0
    %2152 = vmatpush1.msra.mxu0 0.0
    %2153 = vmatprep.subr.mxu0 0.0
    %2154 = vmatpush1.msra.mxu0 0.0
    %2155 = vmatprep.subr.mxu0 0.0
    %2156 = vmatpush1.msra.mxu0 0.0
    %2157 = vmatprep.subr.mxu0 0.0
    %2158 = vmatpush1.msra.mxu0 0.0
    %2159 = vmatprep.subr.mxu0 0.0
    %2160 = vmatpush1.msra.mxu0 0.0
    %2161 = vmatprep.subr.mxu0 0.0
    %2162 = vmatpush1.msra.mxu0 0.0
    %2163 = vmatprep.subr.mxu0 0.0
    %2164 = vmatpush1.msra.mxu0 0.0
    %2165 = vmatprep.subr.mxu0 0.0
    %2166 = vmatpush1.msra.mxu0 0.0
    %2167 = vmatprep.subr.mxu0 0.0
    %2168 = vmatpush1.msra.mxu0 0.0
    %2169 = vmatprep.subr.mxu0 0.0
    %2170 = vmatpush1.msra.mxu0 0.0
    %2171 = vmatprep.subr.mxu0 0.0
    %2172 = vmatpush1.msra.mxu0 0.0
    %2173 = vmatprep.subr.mxu0 0.0
    %2174 = vmatpush1.msra.mxu0 0.0
    %2175 = vmatprep.subr.mxu0 0.0
    %2176 = vmatpush1.msra.mxu0 0.0
    %2177 = vmatprep.subr.mxu0 0.0
    %2178 = vmatpush1.msra.mxu0 0.0
    %2179 = vmatprep.mubr.f32.mxu0 0.0
    %2180 = vmatmul.mubr.f32.gmra.mrb[0].mxu0 %v2113
    %v2181 = vpop.f32.mrb[0].mxu0
    %v2182 = vadd.f32 0.0, %v2181
    %v2183 = vpop.f32.mrb[0].mxu0
    %2184 = vdwg.mxu0
    %v2185 = vadd.f32 %v227, %v2182
    %v2186 = vsub.f32 0.0, %v2185
    %v2187 = vmul.f32 %v2186, 1.442695
    %v2188 = vpow.pop %v2187
    %v2189 = vadd.f32 %v2188, 1.0
    %v2190 = vrcp.pop %v2189
    %v2191 = vmul.f32 1.0, %v2190
    %v2192 = vtanh.pop %v2185
    %v2193 = vmul.f32 %v2191, %v1895
    %2195 = vrot.lane.b32.xlu0 %v2192, 64
    %v2196 = vpop.permute.xlu0 %2195
    %v2198 = vmul.f32 %v2191, %v2196
    %2200 = vrot.lane.b32.xlu0 %v2198, 32
    %v2201 = vpop.permute.xlu0 %2200
    %v2203 = vadd.f32 %v2193, %v2201
    %v2204 = vtanh.pop %v2203
    %2206 = vrot.lane.b32.xlu0 %v2204, 64
    %v2207 = vpop.permute.xlu0 %2206
    %v2209 = vmul.f32 %v2191, %v2207
    %2211 = vrot.lane.b32.xlu0 %v2209, 32
    %v2212 = vpop.permute.xlu0 %2211
    %2214 = vrot.lane.b32.xlu0 %v2006, 64
    %v2215 = vpop.permute.xlu0 %2214
    %v2217 = vsel %vm269, %v2212, %v2215
    %v2219 = vsel %vm373, %v2217, 0
    %2221 = vmatprep.subr.mxu0 0.0
    %2222 = vmatpush1.msra.mxu0 %v239
    %2223 = vmatprep.subr.mxu0 0.0
    %2224 = vmatpush1.msra.mxu0 %v240
    %2225 = vmatprep.subr.mxu0 0.0
    %2226 = vmatpush1.msra.mxu0 %v241
    %2227 = vmatprep.subr.mxu0 0.0
    %2228 = vmatpush1.msra.mxu0 %v242
    %2229 = vmatprep.subr.mxu0 0.0
    %2230 = vmatpush1.msra.mxu0 %v243
    %2231 = vmatprep.subr.mxu0 0.0
    %2232 = vmatpush1.msra.mxu0 %v244
    %2233 = vmatprep.subr.mxu0 0.0
    %2234 = vmatpush1.msra.mxu0 %v245
    %2235 = vmatprep.subr.mxu0 0.0
    %2236 = vmatpush1.msra.mxu0 %v246
    %2237 = vmatprep.subr.mxu0 0.0
    %2238 = vmatpush1.msra.mxu0 0.0
    %2239 = vmatprep.subr.mxu0 0.0
    %2240 = vmatpush1.msra.mxu0 0.0
    %2241 = vmatprep.subr.mxu0 0.0
    %2242 = vmatpush1.msra.mxu0 0.0
    %2243 = vmatprep.subr.mxu0 0.0
    %2244 = vmatpush1.msra.mxu0 0.0
    %2245 = vmatprep.subr.mxu0 0.0
    %2246 = vmatpush1.msra.mxu0 0.0
    %2247 = vmatprep.subr.mxu0 0.0
    %2248 = vmatpush1.msra.mxu0 0.0
    %2249 = vmatprep.subr.mxu0 0.0
    %2250 = vmatpush1.msra.mxu0 0.0
    %2251 = vmatprep.subr.mxu0 0.0
    %2252 = vmatpush1.msra.mxu0 0.0
    %2253 = vmatprep.subr.mxu0 0.0
    %2254 = vmatpush1.msra.mxu0 0.0
    %2255 = vmatprep.subr.mxu0 0.0
    %2256 = vmatpush1.msra.mxu0 0.0
    %2257 = vmatprep.subr.mxu0 0.0
    %2258 = vmatpush1.msra.mxu0 0.0
    %2259 = vmatprep.subr.mxu0 0.0
    %2260 = vmatpush1.msra.mxu0 0.0
    %2261 = vmatprep.subr.mxu0 0.0
    %2262 = vmatpush1.msra.mxu0 0.0
    %2263 = vmatprep.subr.mxu0 0.0
    %2264 = vmatpush1.msra.mxu0 0.0
    %2265 = vmatprep.subr.mxu0 0.0
    %2266 = vmatpush1.msra.mxu0 0.0
    %2267 = vmatprep.subr.mxu0 0.0
    %2268 = vmatpush1.msra.mxu0 0.0
    %2269 = vmatprep.subr.mxu0 0.0
    %2270 = vmatpush1.msra.mxu0 0.0
    %2271 = vmatprep.subr.mxu0 0.0
    %2272 = vmatpush1.msra.mxu0 0.0
    %2273 = vmatprep.subr.mxu0 0.0
    %2274 = vmatpush1.msra.mxu0 0.0
    %2275 = vmatprep.subr.mxu0 0.0
    %2276 = vmatpush1.msra.mxu0 0.0
    %2277 = vmatprep.subr.mxu0 0.0
    %2278 = vmatpush1.msra.mxu0 0.0
    %2279 = vmatprep.subr.mxu0 0.0
    %2280 = vmatpush1.msra.mxu0 0.0
    %2281 = vmatprep.subr.mxu0 0.0
    %2282 = vmatpush1.msra.mxu0 0.0
    %2283 = vmatprep.subr.mxu0 0.0
    %2284 = vmatpush1.msra.mxu0 0.0
    %2285 = vmatprep.mubr.f32.mxu0 0.0
    %2286 = vmatmul.mubr.f32.gmra.mrb[0].mxu0 %v2219
    %v2287 = vpop.f32.mrb[0].mxu0
    %v2288 = vadd.f32 %v260, %v2287
    %v2289 = vpop.f32.mrb[0].mxu0
    %2290 = vdwg.mxu0
    %v2291 = vsub.f32 0.0, %v2288
    %v2292 = vmul.f32 %v2291, 1.442695
    %v2293 = vpow.pop %v2292
    %v2294 = vadd.f32 %v2293, 1.0
    %v2295 = vrcp.pop %v2294
    %v2296 = vmul.f32 1.0, %v2295
    %v2297 = vtanh.pop %v2288
    %v2298 = vmul.f32 %v2296, %v2000
    %2300 = vrot.lane.b32.xlu0 %v2297, 64
    %v2301 = vpop.permute.xlu0 %2300
    %v2303 = vmul.f32 %v2296, %v2301
    %2305 = vrot.lane.b32.xlu0 %v2303, 32
    %v2306 = vpop.permute.xlu0 %2305
    %v2308 = vadd.f32 %v2298, %v2306
    %v2309 = vtanh.pop %v2308
    %2311 = vrot.lane.b32.xlu0 %v2309, 64
    %v2312 = vpop.permute.xlu0 %2311
    %v2314 = vmul.f32 %v2296, %v2312
    %2316 = vrot.lane.b32.xlu0 %v2314, 32
    %v2317 = vpop.permute.xlu0 %2316
    %2320 = vrot.lane.b32.xlu0 %v2112, 64
    %v2321 = vpop.permute.xlu0 %2320
    %v2323 = vsel %vm269, %v2317, %v2321
    %v2325 = vsel %vm373, %v2323, 0
    %2327 = vmatprep.subr.mxu0 0.0
    %2328 = vmatpush1.msra.mxu0 %v247
    %2329 = vmatprep.subr.mxu0 0.0
    %2330 = vmatpush1.msra.mxu0 %v248
    %2331 = vmatprep.subr.mxu0 0.0
    %2332 = vmatpush1.msra.mxu0 %v249
    %2333 = vmatprep.subr.mxu0 0.0
    %2334 = vmatpush1.msra.mxu0 %v250
    %2335 = vmatprep.subr.mxu0 0.0
    %2336 = vmatpush1.msra.mxu0 %v251
    %2337 = vmatprep.subr.mxu0 0.0
    %2338 = vmatpush1.msra.mxu0 %v252
    %2339 = vmatprep.subr.mxu0 0.0
    %2340 = vmatpush1.msra.mxu0 %v253
    %2341 = vmatprep.subr.mxu0 0.0
    %2342 = vmatpush1.msra.mxu0 %v254
    %2343 = vmatprep.subr.mxu0 0.0
    %2344 = vmatpush1.msra.mxu0 0.0
    %2345 = vmatprep.subr.mxu0 0.0
    %2346 = vmatpush1.msra.mxu0 0.0
    %2347 = vmatprep.subr.mxu0 0.0
    %2348 = vmatpush1.msra.mxu0 0.0
    %2349 = vmatprep.subr.mxu0 0.0
    %2350 = vmatpush1.msra.mxu0 0.0
    %2351 = vmatprep.subr.mxu0 0.0
    %2352 = vmatpush1.msra.mxu0 0.0
    %2353 = vmatprep.subr.mxu0 0.0
    %2354 = vmatpush1.msra.mxu0 0.0
    %2355 = vmatprep.subr.mxu0 0.0
    %2356 = vmatpush1.msra.mxu0 0.0
    %2357 = vmatprep.subr.mxu0 0.0
    %2358 = vmatpush1.msra.mxu0 0.0
    %2359 = vmatprep.subr.mxu0 0.0
    %2360 = vmatpush1.msra.mxu0 0.0
    %2361 = vmatprep.subr.mxu0 0.0
    %2362 = vmatpush1.msra.mxu0 0.0
    %2363 = vmatprep.subr.mxu0 0.0
    %2364 = vmatpush1.msra.mxu0 0.0
    %2365 = vmatprep.subr.mxu0 0.0
    %2366 = vmatpush1.msra.mxu0 0.0
    %2367 = vmatprep.subr.mxu0 0.0
    %2368 = vmatpush1.msra.mxu0 0.0
    %2369 = vmatprep.subr.mxu0 0.0
    %2370 = vmatpush1.msra.mxu0 0.0
    %2371 = vmatprep.subr.mxu0 0.0
    %2372 = vmatpush1.msra.mxu0 0.0
    %2373 = vmatprep.subr.mxu0 0.0
    %2374 = vmatpush1.msra.mxu0 0.0
    %2375 = vmatprep.subr.mxu0 0.0
    %2376 = vmatpush1.msra.mxu0 0.0
    %2377 = vmatprep.subr.mxu0 0.0
    %2378 = vmatpush1.msra.mxu0 0.0
    %2379 = vmatprep.subr.mxu0 0.0
    %2380 = vmatpush1.msra.mxu0 0.0
    %2381 = vmatprep.subr.mxu0 0.0
    %2382 = vmatpush1.msra.mxu0 0.0
    %2383 = vmatprep.subr.mxu0 0.0
    %2384 = vmatpush1.msra.mxu0 0.0
    %2385 = vmatprep.subr.mxu0 0.0
    %2386 = vmatpush1.msra.mxu0 0.0
    %2387 = vmatprep.subr.mxu0 0.0
    %2388 = vmatpush1.msra.mxu0 0.0
    %2389 = vmatprep.subr.mxu0 0.0
    %2390 = vmatpush1.msra.mxu0 0.0
    %2391 = vmatprep.mubr.f32.mxu0 0.0
    %2392 = vmatmul.mubr.f32.gmra.mrb[0].mxu0 %v2325
    %v2393 = vpop.f32.mrb[0].mxu0
    %v2394 = vadd.f32 %v267, %v2393
    %v2395 = vpop.f32.mrb[0].mxu0
    %2396 = vdwg.mxu0
    %v2397 = vsub.f32 0.0, %v2394
    %v2398 = vmul.f32 %v2397, 1.442695
    %v2399 = vpow.pop %v2398
    %v2400 = vadd.f32 %v2399, 1.0
    %v2401 = vrcp.pop %v2400
    %v2402 = vmul.f32 1.0, %v2401
    %v2403 = vtanh.pop %v2394
    %v2404 = vmul.f32 %v2402, %v2106
    %2406 = vrot.lane.b32.xlu0 %v2403, 64
    %v2407 = vpop.permute.xlu0 %2406
    %v2409 = vmul.f32 %v2402, %v2407
    %2411 = vrot.lane.b32.xlu0 %v2409, 32
    %v2412 = vpop.permute.xlu0 %2411
    %v2414 = vadd.f32 %v2404, %v2412
    %v2415 = vtanh.pop %v2414
    %2417 = vrot.lane.b32.xlu0 %v2415, 64
    %v2418 = vpop.permute.xlu0 %2417
    %v2420 = vmul.f32 %v2402, %v2418
    %v2421 = vsel %vm269, %v2212, 0
    %2423 = vmatprep.subr.mxu0 0.0
    %2424 = vmatpush1.msra.mxu0 %v235
    %2425 = vmatprep.subr.mxu0 0.0
    %2426 = vmatpush1.msra.mxu0 %v236
    %2427 = vmatprep.subr.mxu0 0.0
    %2428 = vmatpush1.msra.mxu0 %v237
    %2429 = vmatprep.subr.mxu0 0.0
    %2430 = vmatpush1.msra.mxu0 %v238
    %2431 = vmatprep.subr.mxu0 0.0
    %2432 = vmatpush1.msra.mxu0 0.0
    %2433 = vmatprep.subr.mxu0 0.0
    %2434 = vmatpush1.msra.mxu0 0.0
    %2435 = vmatprep.subr.mxu0 0.0
    %2436 = vmatpush1.msra.mxu0 0.0
    %2437 = vmatprep.subr.mxu0 0.0
    %2438 = vmatpush1.msra.mxu0 0.0
    %2439 = vmatprep.subr.mxu0 0.0
    %2440 = vmatpush1.msra.mxu0 0.0
    %2441 = vmatprep.subr.mxu0 0.0
    %2442 = vmatpush1.msra.mxu0 0.0
    %2443 = vmatprep.subr.mxu0 0.0
    %2444 = vmatpush1.msra.mxu0 0.0
    %2445 = vmatprep.subr.mxu0 0.0
    %2446 = vmatpush1.msra.mxu0 0.0
    %2447 = vmatprep.subr.mxu0 0.0
    %2448 = vmatpush1.msra.mxu0 0.0
    %2449 = vmatprep.subr.mxu0 0.0
    %2450 = vmatpush1.msra.mxu0 0.0
    %2451 = vmatprep.subr.mxu0 0.0
    %2452 = vmatpush1.msra.mxu0 0.0
    %2453 = vmatprep.subr.mxu0 0.0
    %2454 = vmatpush1.msra.mxu0 0.0
    %2455 = vmatprep.subr.mxu0 0.0
    %2456 = vmatpush1.msra.mxu0 0.0
    %2457 = vmatprep.subr.mxu0 0.0
    %2458 = vmatpush1.msra.mxu0 0.0
    %2459 = vmatprep.subr.mxu0 0.0
    %2460 = vmatpush1.msra.mxu0 0.0
    %2461 = vmatprep.subr.mxu0 0.0
    %2462 = vmatpush1.msra.mxu0 0.0
    %2463 = vmatprep.subr.mxu0 0.0
    %2464 = vmatpush1.msra.mxu0 0.0
    %2465 = vmatprep.subr.mxu0 0.0
    %2466 = vmatpush1.msra.mxu0 0.0
    %2467 = vmatprep.subr.mxu0 0.0
    %2468 = vmatpush1.msra.mxu0 0.0
    %2469 = vmatprep.subr.mxu0 0.0
    %2470 = vmatpush1.msra.mxu0 0.0
    %2471 = vmatprep.subr.mxu0 0.0
    %2472 = vmatpush1.msra.mxu0 0.0
    %2473 = vmatprep.subr.mxu0 0.0
    %2474 = vmatpush1.msra.mxu0 0.0
    %2475 = vmatprep.subr.mxu0 0.0
    %2476 = vmatpush1.msra.mxu0 0.0
    %2477 = vmatprep.subr.mxu0 0.0
    %2478 = vmatpush1.msra.mxu0 0.0
    %2479 = vmatprep.subr.mxu0 0.0
    %2480 = vmatpush1.msra.mxu0 0.0
    %2481 = vmatprep.subr.mxu0 0.0
    %2482 = vmatpush1.msra.mxu0 0.0
    %2483 = vmatprep.subr.mxu0 0.0
    %2484 = vmatpush1.msra.mxu0 0.0
    %2485 = vmatprep.subr.mxu0 0.0
    %2486 = vmatpush1.msra.mxu0 0.0
    %2487 = vmatprep.mubr.f32.mxu0 0.0
    %2488 = vmatmul.mubr.f32.gmra.mrb[0].mxu0 %v2421
    %v2489 = vpop.f32.mrb[0].mxu0
    %v2490 = vadd.f32 0.0, %v2489
    %v2491 = vpop.f32.mrb[0].mxu0
    %2492 = vdwg.mxu0
    %v2493 = vadd.f32 %v232, %v2490
    %v2494 = vsub.f32 0.0, %v2493
    %v2495 = vmul.f32 %v2494, 1.442695
    %v2496 = vpow.pop %v2495
    %v2497 = vadd.f32 %v2496, 1.0
    %v2498 = vrcp.pop %v2497
    %v2499 = vmul.f32 1.0, %v2498
    %v2500 = vtanh.pop %v2493
    %v2501 = vmul.f32 %v2499, %v2203
    %2503 = vrot.lane.b32.xlu0 %v2500, 64
    %v2504 = vpop.permute.xlu0 %2503
    %v2506 = vmul.f32 %v2499, %v2504
    %2508 = vrot.lane.b32.xlu0 %v2506, 32
    %v2509 = vpop.permute.xlu0 %2508
    %v2511 = vadd.f32 %v2501, %v2509
    %v2512 = vtanh.pop %v2511
    %2514 = vrot.lane.b32.xlu0 %v2512, 64
    %v2515 = vpop.permute.xlu0 %2514
    %v2517 = vmul.f32 %v2499, %v2515
    %2519 = vrot.lane.b32.xlu0 %v2517, 32
    %v2520 = vpop.permute.xlu0 %2519
    %2522 = vrot.lane.b32.xlu0 %v2314, 64
    %v2523 = vpop.permute.xlu0 %2522
    %v2525 = vsel %vm269, %v2520, %v2523
    %v2527 = vsel %vm373, %v2525, 0
    %2529 = vmatprep.subr.mxu0 0.0
    %2530 = vmatpush1.msra.mxu0 %v239
    %2531 = vmatprep.subr.mxu0 0.0
    %2532 = vmatpush1.msra.mxu0 %v240
    %2533 = vmatprep.subr.mxu0 0.0
    %2534 = vmatpush1.msra.mxu0 %v241
    %2535 = vmatprep.subr.mxu0 0.0
    %2536 = vmatpush1.msra.mxu0 %v242
    %2537 = vmatprep.subr.mxu0 0.0
    %2538 = vmatpush1.msra.mxu0 %v243
    %2539 = vmatprep.subr.mxu0 0.0
    %2540 = vmatpush1.msra.mxu0 %v244
    %2541 = vmatprep.subr.mxu0 0.0
    %2542 = vmatpush1.msra.mxu0 %v245
    %2543 = vmatprep.subr.mxu0 0.0
    %2544 = vmatpush1.msra.mxu0 %v246
    %2545 = vmatprep.subr.mxu0 0.0
    %2546 = vmatpush1.msra.mxu0 0.0
    %2547 = vmatprep.subr.mxu0 0.0
    %2548 = vmatpush1.msra.mxu0 0.0
    %2549 = vmatprep.subr.mxu0 0.0
    %2550 = vmatpush1.msra.mxu0 0.0
    %2551 = vmatprep.subr.mxu0 0.0
    %2552 = vmatpush1.msra.mxu0 0.0
    %2553 = vmatprep.subr.mxu0 0.0
    %2554 = vmatpush1.msra.mxu0 0.0
    %2555 = vmatprep.subr.mxu0 0.0
    %2556 = vmatpush1.msra.mxu0 0.0
    %2557 = vmatprep.subr.mxu0 0.0
    %2558 = vmatpush1.msra.mxu0 0.0
    %2559 = vmatprep.subr.mxu0 0.0
    %2560 = vmatpush1.msra.mxu0 0.0
    %2561 = vmatprep.subr.mxu0 0.0
    %2562 = vmatpush1.msra.mxu0 0.0
    %2563 = vmatprep.subr.mxu0 0.0
    %2564 = vmatpush1.msra.mxu0 0.0
    %2565 = vmatprep.subr.mxu0 0.0
    %2566 = vmatpush1.msra.mxu0 0.0
    %2567 = vmatprep.subr.mxu0 0.0
    %2568 = vmatpush1.msra.mxu0 0.0
    %2569 = vmatprep.subr.mxu0 0.0
    %2570 = vmatpush1.msra.mxu0 0.0
    %2571 = vmatprep.subr.mxu0 0.0
    %2572 = vmatpush1.msra.mxu0 0.0
    %2573 = vmatprep.subr.mxu0 0.0
    %2574 = vmatpush1.msra.mxu0 0.0
    %2575 = vmatprep.subr.mxu0 0.0
    %2576 = vmatpush1.msra.mxu0 0.0
    %2577 = vmatprep.subr.mxu0 0.0
    %2578 = vmatpush1.msra.mxu0 0.0
    %2579 = vmatprep.subr.mxu0 0.0
    %2580 = vmatpush1.msra.mxu0 0.0
    %2581 = vmatprep.subr.mxu0 0.0
    %2582 = vmatpush1.msra.mxu0 0.0
    %2583 = vmatprep.subr.mxu0 0.0
    %2584 = vmatpush1.msra.mxu0 0.0
    %2585 = vmatprep.subr.mxu0 0.0
    %2586 = vmatpush1.msra.mxu0 0.0
    %2587 = vmatprep.subr.mxu0 0.0
    %2588 = vmatpush1.msra.mxu0 0.0
    %2589 = vmatprep.subr.mxu0 0.0
    %2590 = vmatpush1.msra.mxu0 0.0
    %2591 = vmatprep.subr.mxu0 0.0
    %2592 = vmatpush1.msra.mxu0 0.0
    %2593 = vmatprep.mubr.f32.mxu0 0.0
    %2594 = vmatmul.mubr.f32.gmra.mrb[0].mxu0 %v2527
    %v2595 = vpop.f32.mrb[0].mxu0
    %v2596 = vadd.f32 %v260, %v2595
    %v2597 = vpop.f32.mrb[0].mxu0
    %2598 = vdwg.mxu0
    %v2599 = vsub.f32 0.0, %v2596
    %v2600 = vmul.f32 %v2599, 1.442695
    %v2601 = vpow.pop %v2600
    %v2602 = vadd.f32 %v2601, 1.0
    %v2603 = vrcp.pop %v2602
    %v2604 = vmul.f32 1.0, %v2603
    %v2605 = vtanh.pop %v2596
    %v2606 = vmul.f32 %v2604, %v2308
    %2608 = vrot.lane.b32.xlu0 %v2605, 64
    %v2609 = vpop.permute.xlu0 %2608
    %v2611 = vmul.f32 %v2604, %v2609
    %2613 = vrot.lane.b32.xlu0 %v2611, 32
    %v2614 = vpop.permute.xlu0 %2613
    %v2616 = vadd.f32 %v2606, %v2614
    %v2617 = vtanh.pop %v2616
    %2619 = vrot.lane.b32.xlu0 %v2617, 64
    %v2620 = vpop.permute.xlu0 %2619
    %v2622 = vmul.f32 %v2604, %v2620
    %2624 = vrot.lane.b32.xlu0 %v2622, 32
    %v2625 = vpop.permute.xlu0 %2624
    %2628 = vrot.lane.b32.xlu0 %v2420, 64
    %v2629 = vpop.permute.xlu0 %2628
    %v2631 = vsel %vm269, %v2625, %v2629
    %v2633 = vsel %vm373, %v2631, 0
    %2635 = vmatprep.subr.mxu0 0.0
    %2636 = vmatpush1.msra.mxu0 %v247
    %2637 = vmatprep.subr.mxu0 0.0
    %2638 = vmatpush1.msra.mxu0 %v248
    %2639 = vmatprep.subr.mxu0 0.0
    %2640 = vmatpush1.msra.mxu0 %v249
    %2641 = vmatprep.subr.mxu0 0.0
    %2642 = vmatpush1.msra.mxu0 %v250
    %2643 = vmatprep.subr.mxu0 0.0
    %2644 = vmatpush1.msra.mxu0 %v251
    %2645 = vmatprep.subr.mxu0 0.0
    %2646 = vmatpush1.msra.mxu0 %v252
    %2647 = vmatprep.subr.mxu0 0.0
    %2648 = vmatpush1.msra.mxu0 %v253
    %2649 = vmatprep.subr.mxu0 0.0
    %2650 = vmatpush1.msra.mxu0 %v254
    %2651 = vmatprep.subr.mxu0 0.0
    %2652 = vmatpush1.msra.mxu0 0.0
    %2653 = vmatprep.subr.mxu0 0.0
    %2654 = vmatpush1.msra.mxu0 0.0
    %2655 = vmatprep.subr.mxu0 0.0
    %2656 = vmatpush1.msra.mxu0 0.0
    %2657 = vmatprep.subr.mxu0 0.0
    %2658 = vmatpush1.msra.mxu0 0.0
    %2659 = vmatprep.subr.mxu0 0.0
    %2660 = vmatpush1.msra.mxu0 0.0
    %2661 = vmatprep.subr.mxu0 0.0
    %2662 = vmatpush1.msra.mxu0 0.0
    %2663 = vmatprep.subr.mxu0 0.0
    %2664 = vmatpush1.msra.mxu0 0.0
    %2665 = vmatprep.subr.mxu0 0.0
    %2666 = vmatpush1.msra.mxu0 0.0
    %2667 = vmatprep.subr.mxu0 0.0
    %2668 = vmatpush1.msra.mxu0 0.0
    %2669 = vmatprep.subr.mxu0 0.0
    %2670 = vmatpush1.msra.mxu0 0.0
    %2671 = vmatprep.subr.mxu0 0.0
    %2672 = vmatpush1.msra.mxu0 0.0
    %2673 = vmatprep.subr.mxu0 0.0
    %2674 = vmatpush1.msra.mxu0 0.0
    %2675 = vmatprep.subr.mxu0 0.0
    %2676 = vmatpush1.msra.mxu0 0.0
    %2677 = vmatprep.subr.mxu0 0.0
    %2678 = vmatpush1.msra.mxu0 0.0
    %2679 = vmatprep.subr.mxu0 0.0
    %2680 = vmatpush1.msra.mxu0 0.0
    %2681 = vmatprep.subr.mxu0 0.0
    %2682 = vmatpush1.msra.mxu0 0.0
    %2683 = vmatprep.subr.mxu0 0.0
    %2684 = vmatpush1.msra.mxu0 0.0
    %2685 = vmatprep.subr.mxu0 0.0
    %2686 = vmatpush1.msra.mxu0 0.0
    %2687 = vmatprep.subr.mxu0 0.0
    %2688 = vmatpush1.msra.mxu0 0.0
    %2689 = vmatprep.subr.mxu0 0.0
    %2690 = vmatpush1.msra.mxu0 0.0
    %2691 = vmatprep.subr.mxu0 0.0
    %2692 = vmatpush1.msra.mxu0 0.0
    %2693 = vmatprep.subr.mxu0 0.0
    %2694 = vmatpush1.msra.mxu0 0.0
    %2695 = vmatprep.subr.mxu0 0.0
    %2696 = vmatpush1.msra.mxu0 0.0
    %2697 = vmatprep.subr.mxu0 0.0
    %2698 = vmatpush1.msra.mxu0 0.0
    %2699 = vmatprep.mubr.f32.mxu0 0.0
    %2700 = vmatmul.mubr.f32.gmra.mrb[0].mxu0 %v2633
    %v2701 = vpop.f32.mrb[0].mxu0
    %v2702 = vadd.f32 %v267, %v2701
    %v2703 = vpop.f32.mrb[0].mxu0
    %2704 = vdwg.mxu0
    %v2705 = vsub.f32 0.0, %v2702
    %v2706 = vmul.f32 %v2705, 1.442695
    %v2707 = vpow.pop %v2706
    %v2708 = vadd.f32 %v2707, 1.0
    %v2709 = vrcp.pop %v2708
    %v2710 = vmul.f32 1.0, %v2709
    %v2711 = vtanh.pop %v2702
    %v2712 = vmul.f32 %v2710, %v2414
    %2714 = vrot.lane.b32.xlu0 %v2711, 64
    %v2715 = vpop.permute.xlu0 %2714
    %v2717 = vmul.f32 %v2710, %v2715
    %2719 = vrot.lane.b32.xlu0 %v2717, 32
    %v2720 = vpop.permute.xlu0 %2719
    %v2722 = vadd.f32 %v2712, %v2720
    %v2723 = vtanh.pop %v2722
    %2725 = vrot.lane.b32.xlu0 %v2723, 64
    %v2726 = vpop.permute.xlu0 %2725
    %v2728 = vmul.f32 %v2710, %v2726
    %v2729 = vld [vmem:[#allocation7] sm:$0xff]
    %v2730 = vld [vmem:[#allocation7 + $0x8] sm:$0xff]
    %v2731 = vld [vmem:[#allocation7 + $0x10] sm:$0xff]
    %v2732 = vld [vmem:[#allocation7 + $0x18] sm:$0xff]
    %v2733 = vld [vmem:[%s9] sm:$0x1]
    %v2735 = vlaneseq
    %v2736 = vshrl.u32 %v2735, 7
    %v2737 = vsub.s32 0, %v2736
    %v2738 = vrot.slane %v2733, %v2737
    %2741 = vrot.lane.b32.xlu0 %v2728, 32
    %v2742 = vpop.permute.xlu0 %2741
    %v2743 = vsel %vm269, %v2742, 0
    %2745 = vmatprep.subr.mxu0 0.0
    %2746 = vmatpush1.msra.mxu0 %v2729
    %2747 = vmatprep.subr.mxu0 0.0
    %2748 = vmatpush1.msra.mxu0 %v2730
    %2749 = vmatprep.subr.mxu0 0.0
    %2750 = vmatpush1.msra.mxu0 %v2731
    %2751 = vmatprep.subr.mxu0 0.0
    %2752 = vmatpush1.msra.mxu0 %v2732
    %2753 = vmatprep.subr.mxu0 0.0
    %2754 = vmatpush1.msra.mxu0 0.0
    %2755 = vmatprep.subr.mxu0 0.0
    %2756 = vmatpush1.msra.mxu0 0.0
    %2757 = vmatprep.subr.mxu0 0.0
    %2758 = vmatpush1.msra.mxu0 0.0
    %2759 = vmatprep.subr.mxu0 0.0
    %2760 = vmatpush1.msra.mxu0 0.0
    %2761 = vmatprep.subr.mxu0 0.0
    %2762 = vmatpush1.msra.mxu0 0.0
    %2763 = vmatprep.subr.mxu0 0.0
    %2764 = vmatpush1.msra.mxu0 0.0
    %2765 = vmatprep.subr.mxu0 0.0
    %2766 = vmatpush1.msra.mxu0 0.0
    %2767 = vmatprep.subr.mxu0 0.0
    %2768 = vmatpush1.msra.mxu0 0.0
    %2769 = vmatprep.subr.mxu0 0.0
    %2770 = vmatpush1.msra.mxu0 0.0
    %2771 = vmatprep.subr.mxu0 0.0
    %2772 = vmatpush1.msra.mxu0 0.0
    %2773 = vmatprep.subr.mxu0 0.0
    %2774 = vmatpush1.msra.mxu0 0.0
    %2775 = vmatprep.subr.mxu0 0.0
    %2776 = vmatpush1.msra.mxu0 0.0
    %2777 = vmatprep.subr.mxu0 0.0
    %2778 = vmatpush1.msra.mxu0 0.0
    %2779 = vmatprep.subr.mxu0 0.0
    %2780 = vmatpush1.msra.mxu0 0.0
    %2781 = vmatprep.subr.mxu0 0.0
    %2782 = vmatpush1.msra.mxu0 0.0
    %2783 = vmatprep.subr.mxu0 0.0
    %2784 = vmatpush1.msra.mxu0 0.0
    %2785 = vmatprep.subr.mxu0 0.0
    %2786 = vmatpush1.msra.mxu0 0.0
    %2787 = vmatprep.subr.mxu0 0.0
    %2788 = vmatpush1.msra.mxu0 0.0
    %2789 = vmatprep.subr.mxu0 0.0
    %2790 = vmatpush1.msra.mxu0 0.0
    %2791 = vmatprep.subr.mxu0 0.0
    %2792 = vmatpush1.msra.mxu0 0.0
    %2793 = vmatprep.subr.mxu0 0.0
    %2794 = vmatpush1.msra.mxu0 0.0
    %2795 = vmatprep.subr.mxu0 0.0
    %2796 = vmatpush1.msra.mxu0 0.0
    %2797 = vmatprep.subr.mxu0 0.0
    %2798 = vmatpush1.msra.mxu0 0.0
    %2799 = vmatprep.subr.mxu0 0.0
    %2800 = vmatpush1.msra.mxu0 0.0
    %2801 = vmatprep.subr.mxu0 0.0
    %2802 = vmatpush1.msra.mxu0 0.0
    %2803 = vmatprep.subr.mxu0 0.0
    %2804 = vmatpush1.msra.mxu0 0.0
    %2805 = vmatprep.subr.mxu0 0.0
    %2806 = vmatpush1.msra.mxu0 0.0
    %2807 = vmatprep.subr.mxu0 0.0
    %2808 = vmatpush1.msra.mxu0 0.0
    %2809 = vmatprep.mubr.f32.mxu0 0.0
    %2810 = vmatmul.mubr.f32.gmra.mrb[0].mxu0 %v2743
    %v2811 = vpop.f32.mrb[0].mxu0
    %v2812 = vadd.f32 %v2738, %v2811
    %v2813 = vpop.f32.mrb[0].mxu0
    %2814 = vdwg.mxu0
    %2815 = vst [vmem:[%s10] sm:$0xff] %v2812
    // Predicated region
    $region58: #{action_recognition_lstm.1} parent=1 // pred_check
      _
    $region59: #{action_recognition_lstm.1} parent=1 // pred_check_branch
      %2817 = sbr.rel (0) target = $region61
    $region60: #{action_recognition_lstm.1} parent=1 // pred_region
      _
    $region61: #{action_recognition_lstm.1} parent=1 // pred_fallthru
      _
    // Predicated region
    $region62: #{action_recognition_lstm.1} parent=1 // pred_check
      _
    $region63: #{action_recognition_lstm.1} parent=1 // pred_check_branch
      %2819 = sbr.rel (0) target = $region65
    $region64: #{action_recognition_lstm.1} parent=1 // pred_region
      _
    $region65: #{action_recognition_lstm.1} parent=1 // pred_fallthru
      _
    %2820 = vsyncpa [#allocation3], 1
    %2821 = vsyncpa [#allocation5], 1
    %2822 = vsyncpa [#allocation8], 1

</llo_original>
